<compile_context>
chip_gen: v5e
topology: v5e:2x2
jax: 0.10.0
libtpu: 0.0.40
codegen_flags: <defaults>
</compile_context>

<pallas_src>
import jax
import jax.numpy as jnp
from jax.experimental import pallas as pl
from jax.experimental.pallas import tpu as pltpu


def _mlp_kernel(x_ref,
                w1_ref, b1_ref,
                w2_ref, b2_ref,
                w3_ref, b3_ref,
                w4_ref, b4_ref,
                o_ref):
    # x arrives as raw f32 from HBM; cast to bf16 on the VPU (slack under MXU).
    x = x_ref[...].astype(jnp.bfloat16)                               # (TB, 784)

    # layer 1: 784 -> 1024  (MXU, f32 accumulate; Mosaic pads K internally)
    h = jnp.dot(x, w1_ref[...], preferred_element_type=jnp.float32)   # (TB, 1024)
    h = jnp.maximum(h + b1_ref[...], 0.0)                             # bias+ReLU, f32
    # dropout(0.3): identity in eval mode

    # layer 2: 1024 -> 512
    h = jnp.dot(h.astype(jnp.bfloat16), w2_ref[...],
                preferred_element_type=jnp.float32)                   # (TB, 512)
    h = jnp.maximum(h + b2_ref[...], 0.0)

    # layer 3: 512 -> 256
    h = jnp.dot(h.astype(jnp.bfloat16), w3_ref[...],
                preferred_element_type=jnp.float32)                   # (TB, 256)
    h = jnp.maximum(h + b3_ref[...], 0.0)

    # layer 4: 256 -> 1, emitted lane-dense as a (1, TB) row.
    # Contract the 256 axis of w4 (1,256) against the 256 axis of h (TB,256),
    # i.e. the q @ k.T pattern -> output (1, TB).
    z = jax.lax.dot_general(w4_ref[...], h,
                            dimension_numbers=(((1,), (1,)), ((), ())),
                            preferred_element_type=jnp.float32)       # (1, TB)
    z = z + b4_ref[...]

    # sigmoid: exp on EUP, approx reciprocal on EUP
    o_ref[0] = pl.reciprocal(1.0 + jnp.exp(-z), approx=True)          # (1, TB)


def prepare_params(params):
    """One-time weight preprocessing (cache the result; do NOT call per step)."""
    (w1, b1), (w2, b2), (w3, b3), (w4, b4) = params
    return dict(
        w1=jnp.asarray(w1, jnp.bfloat16).reshape(784, 1024),
        b1=jnp.asarray(b1, jnp.float32).reshape(1, 1024),
        w2=jnp.asarray(w2, jnp.bfloat16).reshape(1024, 512),
        b2=jnp.asarray(b2, jnp.float32).reshape(1, 512),
        w3=jnp.asarray(w3, jnp.bfloat16).reshape(512, 256),
        b3=jnp.asarray(b3, jnp.float32).reshape(1, 256),
        w4=jnp.asarray(w4, jnp.float32).reshape(1, 256),   # row vector, f32
        b4=jnp.asarray(b4, jnp.float32).reshape(1, 1),
    )


def _choose_tb(B: int, block_b: int) -> int:
    """Pick a batch tile: 128-aligned when tiling, >=2 grid steps when possible."""
    block_b = int(block_b)
    block_b = min(1024, max(128, (block_b // 128) * 128))   # sanitize user value
    if B % 8 != 0:
        # A block that equals the full batch dim is always legal; otherwise tile
        # with a 128-multiple and pad the tail in the wrapper.
        return B if B <= block_b else block_b
    if B <= block_b:
        if B >= 256 and B % 256 == 0:
            return B // 2          # two 128-aligned tiles -> both v7x TensorCores
        return B                   # single tile, multiple of 8, no padding
    return block_b


def linear_discriminator(x, prepared, *, block_b=512):
    """x: any shape whose trailing dims flatten to 784 per row.
    prepared: output of prepare_params() (cached bf16 weights)."""
    x2d = x.reshape(-1, 784)
    if x2d.dtype != jnp.float32:
        x2d = x2d.astype(jnp.float32)
    B = x2d.shape[0]

    TB = _choose_tb(B, block_b)
    num_tiles = pl.cdiv(B, TB)
    B_pad = num_tiles * TB
    if B_pad != B:
        # Only the tail tile of the batch is zero-padded (no K pad, no dtype copy).
        x2d = jnp.pad(x2d, ((0, B_pad - B), (0, 0)))

    w1, b1 = prepared["w1"], prepared["b1"]
    w2, b2 = prepared["w2"], prepared["b2"]
    w3, b3 = prepared["w3"], prepared["b3"]
    w4, b4 = prepared["w4"], prepared["b4"]

    def resident(shape):
        # Constant block index -> DMA'd once, stays resident in VMEM.
        return pl.BlockSpec(shape, lambda i: (0, 0))

    flops = 2 * B_pad * (784 * 1024 + 1024 * 512 + 512 * 256 + 256)
    bytes_accessed = (
        x2d.size * 4
        + w1.size * 2 + w2.size * 2 + w3.size * 2
        + w4.size * 4
        + b1.size * 4 + b2.size * 4 + b3.size * 4 + b4.size * 4
        + B_pad * 4
    )
    cost = pl.CostEstimate(flops=flops,
                           transcendentals=B_pad,
                           bytes_accessed=bytes_accessed)

    out = pl.pallas_call(
        _mlp_kernel,
        # lane-dense output: one (1, TB) row per grid step
        out_shape=jax.ShapeDtypeStruct((num_tiles, 1, TB), jnp.float32),
        grid=(num_tiles,),
        in_specs=[
            pl.BlockSpec((TB, 784), lambda i: (i, 0)),     # x: tiled over batch
            resident((784, 1024)), resident((1, 1024)),    # w1, b1
            resident((1024, 512)), resident((1, 512)),     # w2, b2
            resident((512, 256)),  resident((1, 256)),     # w3, b3
            resident((1, 256)),    resident((1, 1)),       # w4 (row), b4
        ],
        out_specs=pl.BlockSpec((1, 1, TB), lambda i: (i, 0, 0)),
        compiler_params=pltpu.CompilerParams(
            dimension_semantics=("parallel",),
            vmem_limit_bytes=32 * 1024 * 1024,
        ),
        cost_estimate=cost,
    )(x2d, w1, b1, w2, b2, w3, b3, w4, b4)

    return out.reshape(B_pad, 1)[:B]


def init_params(key):
    """Deterministic init mimicking nn.Linear default uniform(-1/sqrt(fan_in), +)."""
    dims = [(784, 1024), (1024, 512), (512, 256), (256, 1)]
    params = []
    for (fan_in, fan_out) in dims:
        key, kw, kb = jax.random.split(key, 3)
        bound = 1.0 / jnp.sqrt(fan_in)
        w = jax.random.uniform(kw, (fan_in, fan_out), jnp.float32, -bound, bound)
        b = jax.random.uniform(kb, (1, fan_out), jnp.float32, -bound, bound)
        params.append((w, b))
    return params


def reference_forward(x, params):
    h = x.reshape(-1, 784).astype(jnp.float32)
    for i, (w, b) in enumerate(params):
        h = h @ w + b
        if i < 3:
            h = jnp.maximum(h, 0.0)
    return jax.nn.sigmoid(h)


if __name__ == "__main__":
    key = jax.random.PRNGKey(0)
    kp, kx = jax.random.split(key)

    params = init_params(kp)
    prepared = prepare_params(params)          # one-time, cached weight prep

    # MNIST-like input: (batch=2, channels=1, 28, 28) -> flattened to (2, 784)
    x = jax.random.normal(kx, (2, 1, 28, 28), dtype=jnp.float32)

    out = linear_discriminator(x, prepared)
    out = jax.block_until_ready(out)

    ref = reference_forward(x, params)
    assert out.shape == (2, 1)
    # bf16 matmul inputs + approx reciprocal -> loose-ish tolerance vs f32 reference
    assert jnp.allclose(out, ref, atol=2e-2, rtol=2e-2), "mismatch vs reference"

    print("KERNEL_OK")
</pallas_src>

<mosaic_0001>
module attributes {stable_mosaic.version = 11 : i64} {
  func.func @_mlp_kernel(%arg0: i32, %arg1: memref<2x784xf32, #tpu.memory_space<vmem>>, %arg2: memref<784x1024xbf16, #tpu.memory_space<vmem>>, %arg3: memref<1x1024xf32, #tpu.memory_space<vmem>>, %arg4: memref<1024x512xbf16, #tpu.memory_space<vmem>>, %arg5: memref<1x512xf32, #tpu.memory_space<vmem>>, %arg6: memref<512x256xbf16, #tpu.memory_space<vmem>>, %arg7: memref<1x256xf32, #tpu.memory_space<vmem>>, %arg8: memref<1x256xf32, #tpu.memory_space<vmem>>, %arg9: memref<1x1xf32, #tpu.memory_space<vmem>>, %arg10: memref<1x1x2xf32, #tpu.memory_space<vmem>>) attributes {dimension_semantics = [#tpu.dimension_semantics<parallel>], iteration_bounds = array<i64: 1>, scalar_prefetch = 0 : i64, scratch_operands = 0 : i64, tpu.core_type = #tpu.core_type<tc>, window_params = [{transform_indices = @transform_0, window_bounds = array<i64: 2, 784>}, {pipeline_mode = #tpu.pipeline_mode<synchronous>, transform_indices = @transform_1, window_bounds = array<i64: 784, 1024>}, {pipeline_mode = #tpu.pipeline_mode<synchronous>, transform_indices = @transform_2, window_bounds = array<i64: 1, 1024>}, {pipeline_mode = #tpu.pipeline_mode<synchronous>, transform_indices = @transform_3, window_bounds = array<i64: 1024, 512>}, {pipeline_mode = #tpu.pipeline_mode<synchronous>, transform_indices = @transform_4, window_bounds = array<i64: 1, 512>}, {pipeline_mode = #tpu.pipeline_mode<synchronous>, transform_indices = @transform_5, window_bounds = array<i64: 512, 256>}, {pipeline_mode = #tpu.pipeline_mode<synchronous>, transform_indices = @transform_6, window_bounds = array<i64: 1, 256>}, {pipeline_mode = #tpu.pipeline_mode<synchronous>, transform_indices = @transform_7, window_bounds = array<i64: 1, 256>}, {pipeline_mode = #tpu.pipeline_mode<synchronous>, transform_indices = @transform_8, window_bounds = array<i64: 1, 1>}, {transform_indices = @transform_9, window_bounds = array<i64: 1, 1, 2>}]} {
    %c0 = arith.constant 0 : index
    %c0_0 = arith.constant 0 : index
    %0 = vector.load %arg1[%c0, %c0_0] : memref<2x784xf32, #tpu.memory_space<vmem>>, vector<2x784xf32>
    %1 = arith.truncf %0 : vector<2x784xf32> to vector<2x784xbf16>
    %c0_1 = arith.constant 0 : index
    %c0_2 = arith.constant 0 : index
    %2 = vector.load %arg2[%c0_1, %c0_2] : memref<784x1024xbf16, #tpu.memory_space<vmem>>, vector<784x1024xbf16>
    %cst = arith.constant dense<0.000000e+00> : vector<2x1024xf32>
    %3 = tpu.matmul %1, %2, %cst {dimension_numbers = #tpu.dot_dimension_numbers<[1], [0], [0], [1], [0, 0, 1, 1], [], []>} : vector<2x784xbf16>, vector<784x1024xbf16>, vector<2x1024xf32> -> vector<2x1024xf32>
    %c0_3 = arith.constant 0 : index
    %c0_4 = arith.constant 0 : index
    %4 = vector.load %arg3[%c0_3, %c0_4] : memref<1x1024xf32, #tpu.memory_space<vmem>>, vector<1x1024xf32>
    %5 = vector.broadcast %4 : vector<1x1024xf32> to vector<2x1024xf32>
    %6 = arith.addf %3, %5 : vector<2x1024xf32>
    %cst_5 = arith.constant 0.000000e+00 : f32
    %7 = vector.broadcast %cst_5 : f32 to vector<2x1024xf32>
    %8 = arith.maximumf %6, %7 : vector<2x1024xf32>
    %9 = arith.truncf %8 : vector<2x1024xf32> to vector<2x1024xbf16>
    %c0_6 = arith.constant 0 : index
    %c0_7 = arith.constant 0 : index
    %10 = vector.load %arg4[%c0_6, %c0_7] : memref<1024x512xbf16, #tpu.memory_space<vmem>>, vector<1024x512xbf16>
    %cst_8 = arith.constant dense<0.000000e+00> : vector<2x512xf32>
    %11 = tpu.matmul %9, %10, %cst_8 {dimension_numbers = #tpu.dot_dimension_numbers<[1], [0], [0], [1], [0, 0, 1, 1], [], []>} : vector<2x1024xbf16>, vector<1024x512xbf16>, vector<2x512xf32> -> vector<2x512xf32>
    %c0_9 = arith.constant 0 : index
    %c0_10 = arith.constant 0 : index
    %12 = vector.load %arg5[%c0_9, %c0_10] : memref<1x512xf32, #tpu.memory_space<vmem>>, vector<1x512xf32>
    %13 = vector.broadcast %12 : vector<1x512xf32> to vector<2x512xf32>
    %14 = arith.addf %11, %13 : vector<2x512xf32>
    %cst_11 = arith.constant 0.000000e+00 : f32
    %15 = vector.broadcast %cst_11 : f32 to vector<2x512xf32>
    %16 = arith.maximumf %14, %15 : vector<2x512xf32>
    %17 = arith.truncf %16 : vector<2x512xf32> to vector<2x512xbf16>
    %c0_12 = arith.constant 0 : index
    %c0_13 = arith.constant 0 : index
    %18 = vector.load %arg6[%c0_12, %c0_13] : memref<512x256xbf16, #tpu.memory_space<vmem>>, vector<512x256xbf16>
    %cst_14 = arith.constant dense<0.000000e+00> : vector<2x256xf32>
    %19 = tpu.matmul %17, %18, %cst_14 {dimension_numbers = #tpu.dot_dimension_numbers<[1], [0], [0], [1], [0, 0, 1, 1], [], []>} : vector<2x512xbf16>, vector<512x256xbf16>, vector<2x256xf32> -> vector<2x256xf32>
    %c0_15 = arith.constant 0 : index
    %c0_16 = arith.constant 0 : index
    %20 = vector.load %arg7[%c0_15, %c0_16] : memref<1x256xf32, #tpu.memory_space<vmem>>, vector<1x256xf32>
    %21 = vector.broadcast %20 : vector<1x256xf32> to vector<2x256xf32>
    %22 = arith.addf %19, %21 : vector<2x256xf32>
    %cst_17 = arith.constant 0.000000e+00 : f32
    %23 = vector.broadcast %cst_17 : f32 to vector<2x256xf32>
    %24 = arith.maximumf %22, %23 : vector<2x256xf32>
    %c0_18 = arith.constant 0 : index
    %c0_19 = arith.constant 0 : index
    %25 = vector.load %arg8[%c0_18, %c0_19] : memref<1x256xf32, #tpu.memory_space<vmem>>, vector<1x256xf32>
    %cst_20 = arith.constant dense<0.000000e+00> : vector<1x2xf32>
    %26 = tpu.matmul %25, %24, %cst_20 {dimension_numbers = #tpu.dot_dimension_numbers<[1], [1], [0], [0], [0, 0, 1, 0], [], []>} : vector<1x256xf32>, vector<2x256xf32>, vector<1x2xf32> -> vector<1x2xf32>
    %c0_21 = arith.constant 0 : index
    %c0_22 = arith.constant 0 : index
    %27 = vector.load %arg9[%c0_21, %c0_22] : memref<1x1xf32, #tpu.memory_space<vmem>>, vector<1x1xf32>
    %28 = vector.broadcast %27 : vector<1x1xf32> to vector<1x2xf32>
    %29 = arith.addf %26, %28 : vector<1x2xf32>
    %cst_23 = arith.constant 0.000000e+00 : f32
    %30 = vector.broadcast %cst_23 : f32 to vector<1x2xf32>
    %31 = arith.subf %30, %29 : vector<1x2xf32>
    %32 = math.exp %31 : vector<1x2xf32>
    %cst_24 = arith.constant 1.000000e+00 : f32
    %33 = vector.broadcast %cst_24 : f32 to vector<1x2xf32>
    %34 = arith.addf %33, %32 : vector<1x2xf32>
    %35 = tpu.reciprocal %34 {approx = true} : vector<1x2xf32> -> vector<1x2xf32>
    %c0_25 = arith.constant 0 : index
    %c0_26 = arith.constant 0 : index
    %c0_27 = arith.constant 0 : index
    %36 = vector.load %arg10[%c0_25, %c0_26, %c0_27] : memref<1x1x2xf32, #tpu.memory_space<vmem>>, vector<1x1x2xf32>
    %37 = vector.shape_cast %36 : vector<1x1x2xf32> to vector<1x2xf32>
    %38 = vector.shape_cast %35 : vector<1x2xf32> to vector<1x1x2xf32>
    tpu.vector_store %arg10[%c0_25, %c0_26, %c0_27], %38 {strides = array<i32>} : memref<1x1x2xf32, #tpu.memory_space<vmem>>, vector<1x1x2xf32>,
    return
  }
  func.func @transform_0(%arg0: i32) -> (i32, i32) {
    %c0_i32 = arith.constant 0 : i32
    %c0_i32_0 = arith.constant 0 : i32
    return %arg0, %c0_i32 : i32, i32
  }
  func.func @transform_1(%arg0: i32) -> (i32, i32) {
    %c0_i32 = arith.constant 0 : i32
    %c0_i32_0 = arith.constant 0 : i32
    %c0_i32_1 = arith.constant 0 : i32
    return %c0_i32, %c0_i32_0 : i32, i32
  }
  func.func @transform_2(%arg0: i32) -> (i32, i32) {
    %c0_i32 = arith.constant 0 : i32
    %c0_i32_0 = arith.constant 0 : i32
    %c0_i32_1 = arith.constant 0 : i32
    return %c0_i32, %c0_i32_0 : i32, i32
  }
  func.func @transform_3(%arg0: i32) -> (i32, i32) {
    %c0_i32 = arith.constant 0 : i32
    %c0_i32_0 = arith.constant 0 : i32
    %c0_i32_1 = arith.constant 0 : i32
    return %c0_i32, %c0_i32_0 : i32, i32
  }
  func.func @transform_4(%arg0: i32) -> (i32, i32) {
    %c0_i32 = arith.constant 0 : i32
    %c0_i32_0 = arith.constant 0 : i32
    %c0_i32_1 = arith.constant 0 : i32
    return %c0_i32, %c0_i32_0 : i32, i32
  }
  func.func @transform_5(%arg0: i32) -> (i32, i32) {
    %c0_i32 = arith.constant 0 : i32
    %c0_i32_0 = arith.constant 0 : i32
    %c0_i32_1 = arith.constant 0 : i32
    return %c0_i32, %c0_i32_0 : i32, i32
  }
  func.func @transform_6(%arg0: i32) -> (i32, i32) {
    %c0_i32 = arith.constant 0 : i32
    %c0_i32_0 = arith.constant 0 : i32
    %c0_i32_1 = arith.constant 0 : i32
    return %c0_i32, %c0_i32_0 : i32, i32
  }
  func.func @transform_7(%arg0: i32) -> (i32, i32) {
    %c0_i32 = arith.constant 0 : i32
    %c0_i32_0 = arith.constant 0 : i32
    %c0_i32_1 = arith.constant 0 : i32
    return %c0_i32, %c0_i32_0 : i32, i32
  }
  func.func @transform_8(%arg0: i32) -> (i32, i32) {
    %c0_i32 = arith.constant 0 : i32
    %c0_i32_0 = arith.constant 0 : i32
    %c0_i32_1 = arith.constant 0 : i32
    return %c0_i32, %c0_i32_0 : i32, i32
  }
  func.func @transform_9(%arg0: i32) -> (i32, i32, i32) {
    %c0_i32 = arith.constant 0 : i32
    %c0_i32_0 = arith.constant 0 : i32
    %c0_i32_1 = arith.constant 0 : i32
    return %arg0, %c0_i32, %c0_i32_0 : i32, i32, i32
  }
}

</mosaic_0001>

<llo_original>
// kernel: tpu_custom_call.1
$region0: #{tpu_custom_call.1}
  #allocation0 [shape = 'u32[]', space=smem, size = 0x4, offset = 0x4, fixed_abs, tag = 'smem constant byte address 0x4 - core index']
  #allocation1 [shape = 'u32[72,128]{1,0:T(1,128)}', space=vmem, size = 0x9000, scoped, tag = 'internal scratch']
  #allocation2 [shape = 'f32[1,1]{1,0:T(1,128)S(1)}', space=vmem, size = 0x200, scoped, tag = 'scoped memory for tpu_custom_call.1']
  %s0 = inlined_call_operand.hbm [shape: f32[2,784], index: 0, kind: input, shape index: {}]
  %s1 = inlined_call_operand.hbm [shape: bf16[784,1024], index: 1, kind: input, shape index: {}]
  %s2 = inlined_call_operand.hbm [shape: f32[1,1024], index: 2, kind: input, shape index: {}]
  %s3 = inlined_call_operand.hbm [shape: bf16[1024,512], index: 3, kind: input, shape index: {}]
  %s4 = inlined_call_operand.hbm [shape: f32[1,512], index: 4, kind: input, shape index: {}]
  %s5 = inlined_call_operand.hbm [shape: bf16[512,256], index: 5, kind: input, shape index: {}]
  %s6 = inlined_call_operand.hbm [shape: f32[1,256], index: 6, kind: input, shape index: {}]
  %s7 = inlined_call_operand.hbm [shape: f32[1,256], index: 7, kind: input, shape index: {}]
  %s8 = inlined_call_operand.<no memory space> [shape: f32[1,1], index: 8, kind: input, shape index: {}]
  %s9 = inlined_call_operand.hbm [shape: f32[1,1,2], index: 9, kind: output, shape index: {}]
  %s10 = sld [smem:[#allocation0]]
  $region78: #{tpu_custom_call.1} parent=0
    _
  %s12 = ssub.s32 1, %s10
  %s13 = scalar_select 0, %s12, %s10
  %v14 = vstv %s8
  %15 = vst [vmem:[#allocation2] sm:$0x1] %v14
  $region1: #{tpu_custom_call.1} parent=0
    #allocation3 [shape = 'u8[7168]{0}', space=vmem, size = 0x1c00, scoped, tag = 'input window, operand 0, single buffered']
    #allocation4 [shape = 's32[1]{0}', space=sflag, size = 0x4, scoped, tag = 'scoped memory for tpu_custom_call.1']
    #allocation5 [shape = 's32[1]{0}', space=sflag, size = 0x4, scoped, tag = 'scoped memory for tpu_custom_call.1']
    #allocation6 [shape = 'u8[1605632]{0}', space=vmem, size = 0x188000, scoped, tag = 'input window, operand 1, single buffered']
    #allocation7 [shape = 's32[1]{0}', space=sflag, size = 0x4, scoped, tag = 'scoped memory for tpu_custom_call.1']
    #allocation8 [shape = 'u8[4096]{0}', space=vmem, size = 0x1000, scoped, tag = 'input window, operand 2, single buffered']
    #allocation9 [shape = 'u8[1048576]{0}', space=vmem, size = 0x100000, scoped, tag = 'input window, operand 3, single buffered']
    #allocation10 [shape = 's32[1]{0}', space=sflag, size = 0x4, scoped, tag = 'scoped memory for tpu_custom_call.1']
    #allocation11 [shape = 'u8[2048]{0}', space=vmem, size = 0x800, scoped, tag = 'input window, operand 4, single buffered']
    #allocation12 [shape = 'u8[262144]{0}', space=vmem, size = 0x40000, scoped, tag = 'input window, operand 5, single buffered']
    #allocation13 [shape = 's32[1]{0}', space=sflag, size = 0x4, scoped, tag = 'scoped memory for tpu_custom_call.1']
    #allocation14 [shape = 'u8[1024]{0}', space=vmem, size = 0x400, scoped, tag = 'input window, operand 6, single buffered']
    #allocation15 [shape = 'u8[1024]{0}', space=vmem, size = 0x400, scoped, tag = 'input window, operand 7, single buffered']
    #allocation16 [shape = 's32[1]{0}', space=sflag, size = 0x4, scoped, tag = 'scoped memory for tpu_custom_call.1']
    #allocation17 [shape = 'u8[512]{0}', space=vmem, size = 0x400, scoped, tag = 'output window, operand 0, single buffered']
    %16 = vsyncpa [#allocation4], 0
    %17 = vsyncpa [#allocation7], 0
    %18 = vsyncpa [#allocation10], 0
    %19 = vsyncpa [#allocation13], 0
    %20 = vsyncpa [#allocation16], 0
    %21 = vsyncpa [#allocation5], 0
    // Predicated region
    $region2: #{tpu_custom_call.1} parent=1 // pred_check
      _
    $region3: #{tpu_custom_call.1} parent=1 // pred_check_branch
      %23 = sbr.rel (0) target = $region5
    $region4: #{tpu_custom_call.1} parent=1 // pred_region
      %25 = vsyncadd [#allocation4], 0
      %s27 = sshll.u32 %s0, 4
      %s28 = int_to_ptr.hbm [resolvable:$true] %s27
      %s29 = sshll.u32 [#allocation3], 4
      %s30 = int_to_ptr.vmem [resolvable:$true] %s29
      %32 = dma.hbm_to_vmem [thread:$0]  %s28, 224, %s30, [#allocation4]
    $region5: #{tpu_custom_call.1} parent=1 // pred_fallthru
      _
    // Predicated region
    $region6: #{tpu_custom_call.1} parent=1 // pred_check
      _
    $region7: #{tpu_custom_call.1} parent=1 // pred_check_branch
      %34 = sbr.rel (0) target = $region9
    $region8: #{tpu_custom_call.1} parent=1 // pred_region
      %36 = vsyncadd [#allocation7], 0
      %s37 = sshll.u32 %s1, 4
      %s38 = int_to_ptr.hbm [resolvable:$true] %s37
      %s39 = sshll.u32 [#allocation6], 4
      %s40 = int_to_ptr.vmem [resolvable:$true] %s39
      %45 = dma.hbm_to_vmem [thread:$0]  %s38, 50176, %s40, [#allocation7], 512, 512, 32
    $region9: #{tpu_custom_call.1} parent=1 // pred_fallthru
      _
    // Predicated region
    $region10: #{tpu_custom_call.1} parent=1 // pred_check
      _
    $region11: #{tpu_custom_call.1} parent=1 // pred_check_branch
      %47 = sbr.rel (0) target = $region13
    $region12: #{tpu_custom_call.1} parent=1 // pred_region
      %49 = vsyncadd [#allocation7], 0
      %s51 = sshll.u32 %s2, 4
      %s52 = int_to_ptr.hbm [resolvable:$true] %s51
      %s53 = sshll.u32 [#allocation8], 4
      %s54 = int_to_ptr.vmem [resolvable:$true] %s53
      %56 = dma.hbm_to_vmem [thread:$0]  %s52, 128, %s54, [#allocation7]
    $region13: #{tpu_custom_call.1} parent=1 // pred_fallthru
      _
    // Predicated region
    $region14: #{tpu_custom_call.1} parent=1 // pred_check
      _
    $region15: #{tpu_custom_call.1} parent=1 // pred_check_branch
      %58 = sbr.rel (0) target = $region17
    $region16: #{tpu_custom_call.1} parent=1 // pred_region
      %60 = vsyncadd [#allocation10], 0
      %s61 = sshll.u32 %s3, 4
      %s62 = int_to_ptr.hbm [resolvable:$true] %s61
      %s63 = sshll.u32 [#allocation9], 4
      %s64 = int_to_ptr.vmem [resolvable:$true] %s63
      %69 = dma.hbm_to_vmem [thread:$0]  %s62, 32768, %s64, [#allocation10], 256, 256, 16
    $region17: #{tpu_custom_call.1} parent=1 // pred_fallthru
      _
    // Predicated region
    $region18: #{tpu_custom_call.1} parent=1 // pred_check
      _
    $region19: #{tpu_custom_call.1} parent=1 // pred_check_branch
      %71 = sbr.rel (0) target = $region21
    $region20: #{tpu_custom_call.1} parent=1 // pred_region
      %73 = vsyncadd [#allocation10], 0
      %s75 = sshll.u32 %s4, 4
      %s76 = int_to_ptr.hbm [resolvable:$true] %s75
      %s77 = sshll.u32 [#allocation11], 4
      %s78 = int_to_ptr.vmem [resolvable:$true] %s77
      %80 = dma.hbm_to_vmem [thread:$0]  %s76, 64, %s78, [#allocation10]
    $region21: #{tpu_custom_call.1} parent=1 // pred_fallthru
      _
    // Predicated region
    $region22: #{tpu_custom_call.1} parent=1 // pred_check
      _
    $region23: #{tpu_custom_call.1} parent=1 // pred_check_branch
      %82 = sbr.rel (0) target = $region25
    $region24: #{tpu_custom_call.1} parent=1 // pred_region
      %84 = vsyncadd [#allocation13], 0
      %s85 = sshll.u32 %s5, 4
      %s86 = int_to_ptr.hbm [resolvable:$true] %s85
      %s87 = sshll.u32 [#allocation12], 4
      %s88 = int_to_ptr.vmem [resolvable:$true] %s87
      %93 = dma.hbm_to_vmem [thread:$0]  %s86, 8192, %s88, [#allocation13], 128, 128, 8
    $region25: #{tpu_custom_call.1} parent=1 // pred_fallthru
      _
    // Predicated region
    $region26: #{tpu_custom_call.1} parent=1 // pred_check
      _
    $region27: #{tpu_custom_call.1} parent=1 // pred_check_branch
      %95 = sbr.rel (0) target = $region29
    $region28: #{tpu_custom_call.1} parent=1 // pred_region
      %97 = vsyncadd [#allocation13], 0
      %s99 = sshll.u32 %s6, 4
      %s100 = int_to_ptr.hbm [resolvable:$true] %s99
      %s101 = sshll.u32 [#allocation14], 4
      %s102 = int_to_ptr.vmem [resolvable:$true] %s101
      %104 = dma.hbm_to_vmem [thread:$0]  %s100, 32, %s102, [#allocation13]
    $region29: #{tpu_custom_call.1} parent=1 // pred_fallthru
      _
    // Predicated region
    $region30: #{tpu_custom_call.1} parent=1 // pred_check
      _
    $region31: #{tpu_custom_call.1} parent=1 // pred_check_branch
      %106 = sbr.rel (0) target = $region33
    $region32: #{tpu_custom_call.1} parent=1 // pred_region
      %108 = vsyncadd [#allocation16], 0
      %s110 = sshll.u32 %s7, 4
      %s111 = int_to_ptr.hbm [resolvable:$true] %s110
      %s112 = sshll.u32 [#allocation15], 4
      %s113 = int_to_ptr.vmem [resolvable:$true] %s112
      %115 = dma.hbm_to_vmem [thread:$0]  %s111, 32, %s113, [#allocation16]
    $region33: #{tpu_custom_call.1} parent=1 // pred_fallthru
      _
    // Predicated region
    $region34: #{tpu_custom_call.1} parent=1 // pred_check
      _
    $region35: #{tpu_custom_call.1} parent=1 // pred_check_branch
      %117 = sbr.rel (0) target = $region37
    $region36: #{tpu_custom_call.1} parent=1 // pred_region
      _
    $region37: #{tpu_custom_call.1} parent=1 // pred_fallthru
      _
    // Predicated region
    $region38: #{tpu_custom_call.1} parent=1 // pred_check
      _
    $region39: #{tpu_custom_call.1} parent=1 // pred_check_branch
      %119 = sbr.rel (0) target = $region41
    $region40: #{tpu_custom_call.1} parent=1 // pred_region
      %121 = dma.done [#allocation4], 224
    $region41: #{tpu_custom_call.1} parent=1 // pred_fallthru
      _
    // Predicated region
    $region42: #{tpu_custom_call.1} parent=1 // pred_check
      _
    $region43: #{tpu_custom_call.1} parent=1 // pred_check_branch
      %123 = sbr.rel (0) target = $region45
    $region44: #{tpu_custom_call.1} parent=1 // pred_region
      %125 = dma.done [#allocation7], 50176
    $region45: #{tpu_custom_call.1} parent=1 // pred_fallthru
      _
    // Predicated region
    $region46: #{tpu_custom_call.1} parent=1 // pred_check
      _
    $region47: #{tpu_custom_call.1} parent=1 // pred_check_branch
      %127 = sbr.rel (0) target = $region49
    $region48: #{tpu_custom_call.1} parent=1 // pred_region
      %129 = dma.done [#allocation7], 128
    $region49: #{tpu_custom_call.1} parent=1 // pred_fallthru
      _
    // Predicated region
    $region50: #{tpu_custom_call.1} parent=1 // pred_check
      _
    $region51: #{tpu_custom_call.1} parent=1 // pred_check_branch
      %131 = sbr.rel (0) target = $region53
    $region52: #{tpu_custom_call.1} parent=1 // pred_region
      %133 = dma.done [#allocation10], 32768
    $region53: #{tpu_custom_call.1} parent=1 // pred_fallthru
      _
    // Predicated region
    $region54: #{tpu_custom_call.1} parent=1 // pred_check
      _
    $region55: #{tpu_custom_call.1} parent=1 // pred_check_branch
      %135 = sbr.rel (0) target = $region57
    $region56: #{tpu_custom_call.1} parent=1 // pred_region
      %137 = dma.done [#allocation10], 64
    $region57: #{tpu_custom_call.1} parent=1 // pred_fallthru
      _
    // Predicated region
    $region58: #{tpu_custom_call.1} parent=1 // pred_check
      _
    $region59: #{tpu_custom_call.1} parent=1 // pred_check_branch
      %139 = sbr.rel (0) target = $region61
    $region60: #{tpu_custom_call.1} parent=1 // pred_region
      %141 = dma.done [#allocation13], 8192
    $region61: #{tpu_custom_call.1} parent=1 // pred_fallthru
      _
    // Predicated region
    $region62: #{tpu_custom_call.1} parent=1 // pred_check
      _
    $region63: #{tpu_custom_call.1} parent=1 // pred_check_branch
      %143 = sbr.rel (0) target = $region65
    $region64: #{tpu_custom_call.1} parent=1 // pred_region
      %145 = dma.done [#allocation13], 32
    $region65: #{tpu_custom_call.1} parent=1 // pred_fallthru
      _
    // Predicated region
    $region66: #{tpu_custom_call.1} parent=1 // pred_check
      _
    $region67: #{tpu_custom_call.1} parent=1 // pred_check_branch
      %147 = sbr.rel (0) target = $region69
    $region68: #{tpu_custom_call.1} parent=1 // pred_region
      %149 = dma.done [#allocation16], 32
    $region69: #{tpu_custom_call.1} parent=1 // pred_fallthru
      _
    %v151 = vld [vmem:[#allocation3] sm:$0xff]
    %v152 = vld [vmem:[#allocation3 + $0x8] sm:$0x3f]
    %155 = vst [vmem:[#allocation1] ss:$4 sm:$0xff] %v151
    %s156 = scalar_lea.vmem [#allocation1], 32
    %157 = vst [vmem:[%s156] ss:$4 sm:$0xff] %v152
    %v158 = vld.sshfl [vmem:[#allocation1] sm:$0xff pattern:$0x73625140]
    %v159 = vld.sshfl [vmem:[#allocation1 + $0x8] sm:$0xff pattern:$0x73625140]
    %v160 = vld.sshfl [vmem:[#allocation1 + $0x10] sm:$0xff pattern:$0x73625140]
    %v161 = vld.sshfl [vmem:[#allocation1 + $0x18] sm:$0xff pattern:$0x73625140]
    %v162 = vld.sshfl [vmem:[#allocation1 + $0x20] sm:$0xff pattern:$0x73625140]
    %v163 = vld.sshfl [vmem:[#allocation1 + $0x28] sm:$0xff pattern:$0x73625140]
    %v164 = vld.sshfl [vmem:[#allocation1 + $0x30] sm:$0xff pattern:$0x73625140]
    %v172 = vpack.c.bf16 %v158, %v158
    %v173 = vpack.c.bf16 %v159, %v159
    %v174 = vpack.c.bf16 %v160, %v160
    %v175 = vpack.c.bf16 %v161, %v161
    %v176 = vpack.c.bf16 %v162, %v162
    %v177 = vpack.c.bf16 %v163, %v163
    %v178 = vpack.c.bf16 %v164, %v164
    %v179 = vld [vmem:[#allocation6] sm:$0xff]
    %v180 = vld [vmem:[#allocation6 + $0x8] sm:$0xff]
    %v181 = vld [vmem:[#allocation6 + $0x10] sm:$0xff]
    %v182 = vld [vmem:[#allocation6 + $0x18] sm:$0xff]
    %v183 = vld [vmem:[#allocation6 + $0x20] sm:$0xff]
    %v184 = vld [vmem:[#allocation6 + $0x28] sm:$0xff]
    %v185 = vld [vmem:[#allocation6 + $0x30] sm:$0xff]
    %v186 = vld [vmem:[#allocation6 + $0x38] sm:$0xff]
    %v187 = vld [vmem:[#allocation6 + $0x40] sm:$0xff]
    %v188 = vld [vmem:[#allocation6 + $0x48] sm:$0xff]
    %v189 = vld [vmem:[#allocation6 + $0x50] sm:$0xff]
    %v190 = vld [vmem:[#allocation6 + $0x58] sm:$0xff]
    %v191 = vld [vmem:[#allocation6 + $0x60] sm:$0xff]
    %v192 = vld [vmem:[#allocation6 + $0x68] sm:$0xff]
    %v193 = vld [vmem:[#allocation6 + $0x70] sm:$0xff]
    %v194 = vld [vmem:[#allocation6 + $0x78] sm:$0xff]
    %v195 = vld [vmem:[#allocation6 + $0x80] sm:$0xff]
    %v196 = vld [vmem:[#allocation6 + $0x88] sm:$0xff]
    %v197 = vld [vmem:[#allocation6 + $0x90] sm:$0xff]
    %v198 = vld [vmem:[#allocation6 + $0x98] sm:$0xff]
    %v199 = vld [vmem:[#allocation6 + $0xa0] sm:$0xff]
    %v200 = vld [vmem:[#allocation6 + $0xa8] sm:$0xff]
    %v201 = vld [vmem:[#allocation6 + $0xb0] sm:$0xff]
    %v202 = vld [vmem:[#allocation6 + $0xb8] sm:$0xff]
    %v203 = vld [vmem:[#allocation6 + $0xc0] sm:$0xff]
    %v204 = vld [vmem:[#allocation6 + $0xc8] sm:$0xff]
    %v205 = vld [vmem:[#allocation6 + $0xd0] sm:$0xff]
    %v206 = vld [vmem:[#allocation6 + $0xd8] sm:$0xff]
    %v207 = vld [vmem:[#allocation6 + $0xe0] sm:$0xff]
    %v208 = vld [vmem:[#allocation6 + $0xe8] sm:$0xff]
    %v209 = vld [vmem:[#allocation6 + $0xf0] sm:$0xff]
    %v210 = vld [vmem:[#allocation6 + $0xf8] sm:$0xff]
    %v211 = vld [vmem:[#allocation6 + $0x100] sm:$0xff]
    %v212 = vld [vmem:[#allocation6 + $0x108] sm:$0xff]
    %v213 = vld [vmem:[#allocation6 + $0x110] sm:$0xff]
    %v214 = vld [vmem:[#allocation6 + $0x118] sm:$0xff]
    %v215 = vld [vmem:[#allocation6 + $0x120] sm:$0xff]
    %v216 = vld [vmem:[#allocation6 + $0x128] sm:$0xff]
    %v217 = vld [vmem:[#allocation6 + $0x130] sm:$0xff]
    %v218 = vld [vmem:[#allocation6 + $0x138] sm:$0xff]
    %v219 = vld [vmem:[#allocation6 + $0x140] sm:$0xff]
    %v220 = vld [vmem:[#allocation6 + $0x148] sm:$0xff]
    %v221 = vld [vmem:[#allocation6 + $0x150] sm:$0xff]
    %v222 = vld [vmem:[#allocation6 + $0x158] sm:$0xff]
    %v223 = vld [vmem:[#allocation6 + $0x160] sm:$0xff]
    %v224 = vld [vmem:[#allocation6 + $0x168] sm:$0xff]
    %v225 = vld [vmem:[#allocation6 + $0x170] sm:$0xff]
    %v226 = vld [vmem:[#allocation6 + $0x178] sm:$0xff]
    %v227 = vld [vmem:[#allocation6 + $0x180] sm:$0xff]
    %v228 = vld [vmem:[#allocation6 + $0x188] sm:$0xff]
    %v229 = vld [vmem:[#allocation6 + $0x190] sm:$0xff]
    %v230 = vld [vmem:[#allocation6 + $0x198] sm:$0xff]
    %v231 = vld [vmem:[#allocation6 + $0x1a0] sm:$0xff]
    %v232 = vld [vmem:[#allocation6 + $0x1a8] sm:$0xff]
    %v233 = vld [vmem:[#allocation6 + $0x1b0] sm:$0xff]
    %v234 = vld [vmem:[#allocation6 + $0x1b8] sm:$0xff]
    %v235 = vld [vmem:[#allocation6 + $0x1c0] sm:$0xff]
    %v236 = vld [vmem:[#allocation6 + $0x1c8] sm:$0xff]
    %v237 = vld [vmem:[#allocation6 + $0x1d0] sm:$0xff]
    %v238 = vld [vmem:[#allocation6 + $0x1d8] sm:$0xff]
    %v239 = vld [vmem:[#allocation6 + $0x1e0] sm:$0xff]
    %v240 = vld [vmem:[#allocation6 + $0x1e8] sm:$0xff]
    %v241 = vld [vmem:[#allocation6 + $0x1f0] sm:$0xff]
    %v242 = vld [vmem:[#allocation6 + $0x1f8] sm:$0xff]
    %v243 = vld [vmem:[#allocation6 + $0x200] sm:$0xff]
    %v244 = vld [vmem:[#allocation6 + $0x208] sm:$0xff]
    %v245 = vld [vmem:[#allocation6 + $0x210] sm:$0xff]
    %v246 = vld [vmem:[#allocation6 + $0x218] sm:$0xff]
    %v247 = vld [vmem:[#allocation6 + $0x220] sm:$0xff]
    %v248 = vld [vmem:[#allocation6 + $0x228] sm:$0xff]
    %v249 = vld [vmem:[#allocation6 + $0x230] sm:$0xff]
    %v250 = vld [vmem:[#allocation6 + $0x238] sm:$0xff]
    %v251 = vld [vmem:[#allocation6 + $0x240] sm:$0xff]
    %v252 = vld [vmem:[#allocation6 + $0x248] sm:$0xff]
    %v253 = vld [vmem:[#allocation6 + $0x250] sm:$0xff]
    %v254 = vld [vmem:[#allocation6 + $0x258] sm:$0xff]
    %v255 = vld [vmem:[#allocation6 + $0x260] sm:$0xff]
    %v256 = vld [vmem:[#allocation6 + $0x268] sm:$0xff]
    %v257 = vld [vmem:[#allocation6 + $0x270] sm:$0xff]
    %v258 = vld [vmem:[#allocation6 + $0x278] sm:$0xff]
    %v259 = vld [vmem:[#allocation6 + $0x280] sm:$0xff]
    %v260 = vld [vmem:[#allocation6 + $0x288] sm:$0xff]
    %v261 = vld [vmem:[#allocation6 + $0x290] sm:$0xff]
    %v262 = vld [vmem:[#allocation6 + $0x298] sm:$0xff]
    %v263 = vld [vmem:[#allocation6 + $0x2a0] sm:$0xff]
    %v264 = vld [vmem:[#allocation6 + $0x2a8] sm:$0xff]
    %v265 = vld [vmem:[#allocation6 + $0x2b0] sm:$0xff]
    %v266 = vld [vmem:[#allocation6 + $0x2b8] sm:$0xff]
    %v267 = vld [vmem:[#allocation6 + $0x2c0] sm:$0xff]
    %v268 = vld [vmem:[#allocation6 + $0x2c8] sm:$0xff]
    %v269 = vld [vmem:[#allocation6 + $0x2d0] sm:$0xff]
    %v270 = vld [vmem:[#allocation6 + $0x2d8] sm:$0xff]
    %v271 = vld [vmem:[#allocation6 + $0x2e0] sm:$0xff]
    %v272 = vld [vmem:[#allocation6 + $0x2e8] sm:$0xff]
    %v273 = vld [vmem:[#allocation6 + $0x2f0] sm:$0xff]
    %v274 = vld [vmem:[#allocation6 + $0x2f8] sm:$0xff]
    %v275 = vld [vmem:[#allocation6 + $0x300] sm:$0xff]
    %v276 = vld [vmem:[#allocation6 + $0x308] sm:$0xff]
    %v277 = vld [vmem:[#allocation6 + $0x310] sm:$0xff]
    %v278 = vld [vmem:[#allocation6 + $0x318] sm:$0xff]
    %v279 = vld [vmem:[#allocation6 + $0x320] sm:$0xff]
    %v280 = vld [vmem:[#allocation6 + $0x328] sm:$0xff]
    %v281 = vld [vmem:[#allocation6 + $0x330] sm:$0xff]
    %v282 = vld [vmem:[#allocation6 + $0x338] sm:$0xff]
    %v283 = vld [vmem:[#allocation6 + $0x340] sm:$0xff]
    %v284 = vld [vmem:[#allocation6 + $0x348] sm:$0xff]
    %v285 = vld [vmem:[#allocation6 + $0x350] sm:$0xff]
    %v286 = vld [vmem:[#allocation6 + $0x358] sm:$0xff]
    %v287 = vld [vmem:[#allocation6 + $0x360] sm:$0xff]
    %v288 = vld [vmem:[#allocation6 + $0x368] sm:$0xff]
    %v289 = vld [vmem:[#allocation6 + $0x370] sm:$0xff]
    %v290 = vld [vmem:[#allocation6 + $0x378] sm:$0xff]
    %v291 = vld [vmem:[#allocation6 + $0x380] sm:$0xff]
    %v292 = vld [vmem:[#allocation6 + $0x388] sm:$0xff]
    %v293 = vld [vmem:[#allocation6 + $0x390] sm:$0xff]
    %v294 = vld [vmem:[#allocation6 + $0x398] sm:$0xff]
    %v295 = vld [vmem:[#allocation6 + $0x3a0] sm:$0xff]
    %v296 = vld [vmem:[#allocation6 + $0x3a8] sm:$0xff]
    %v297 = vld [vmem:[#allocation6 + $0x3b0] sm:$0xff]
    %v298 = vld [vmem:[#allocation6 + $0x3b8] sm:$0xff]
    %v299 = vld [vmem:[#allocation6 + $0x3c0] sm:$0xff]
    %v300 = vld [vmem:[#allocation6 + $0x3c8] sm:$0xff]
    %v301 = vld [vmem:[#allocation6 + $0x3d0] sm:$0xff]
    %v302 = vld [vmem:[#allocation6 + $0x3d8] sm:$0xff]
    %v303 = vld [vmem:[#allocation6 + $0x3e0] sm:$0xff]
    %v304 = vld [vmem:[#allocation6 + $0x3e8] sm:$0xff]
    %v305 = vld [vmem:[#allocation6 + $0x3f0] sm:$0xff]
    %v306 = vld [vmem:[#allocation6 + $0x3f8] sm:$0xff]
    %v307 = vld [vmem:[#allocation6 + $0x400] sm:$0xff]
    %v308 = vld [vmem:[#allocation6 + $0x408] sm:$0xff]
    %v309 = vld [vmem:[#allocation6 + $0x410] sm:$0xff]
    %v310 = vld [vmem:[#allocation6 + $0x418] sm:$0xff]
    %v311 = vld [vmem:[#allocation6 + $0x420] sm:$0xff]
    %v312 = vld [vmem:[#allocation6 + $0x428] sm:$0xff]
    %v313 = vld [vmem:[#allocation6 + $0x430] sm:$0xff]
    %v314 = vld [vmem:[#allocation6 + $0x438] sm:$0xff]
    %v315 = vld [vmem:[#allocation6 + $0x440] sm:$0xff]
    %v316 = vld [vmem:[#allocation6 + $0x448] sm:$0xff]
    %v317 = vld [vmem:[#allocation6 + $0x450] sm:$0xff]
    %v318 = vld [vmem:[#allocation6 + $0x458] sm:$0xff]
    %v319 = vld [vmem:[#allocation6 + $0x460] sm:$0xff]
    %v320 = vld [vmem:[#allocation6 + $0x468] sm:$0xff]
    %v321 = vld [vmem:[#allocation6 + $0x470] sm:$0xff]
    %v322 = vld [vmem:[#allocation6 + $0x478] sm:$0xff]
    %v323 = vld [vmem:[#allocation6 + $0x480] sm:$0xff]
    %v324 = vld [vmem:[#allocation6 + $0x488] sm:$0xff]
    %v325 = vld [vmem:[#allocation6 + $0x490] sm:$0xff]
    %v326 = vld [vmem:[#allocation6 + $0x498] sm:$0xff]
    %v327 = vld [vmem:[#allocation6 + $0x4a0] sm:$0xff]
    %v328 = vld [vmem:[#allocation6 + $0x4a8] sm:$0xff]
    %v329 = vld [vmem:[#allocation6 + $0x4b0] sm:$0xff]
    %v330 = vld [vmem:[#allocation6 + $0x4b8] sm:$0xff]
    %v331 = vld [vmem:[#allocation6 + $0x4c0] sm:$0xff]
    %v332 = vld [vmem:[#allocation6 + $0x4c8] sm:$0xff]
    %v333 = vld [vmem:[#allocation6 + $0x4d0] sm:$0xff]
    %v334 = vld [vmem:[#allocation6 + $0x4d8] sm:$0xff]
    %v335 = vld [vmem:[#allocation6 + $0x4e0] sm:$0xff]
    %v336 = vld [vmem:[#allocation6 + $0x4e8] sm:$0xff]
    %v337 = vld [vmem:[#allocation6 + $0x4f0] sm:$0xff]
    %v338 = vld [vmem:[#allocation6 + $0x4f8] sm:$0xff]
    %v339 = vld [vmem:[#allocation6 + $0x500] sm:$0xff]
    %v340 = vld [vmem:[#allocation6 + $0x508] sm:$0xff]
    %v341 = vld [vmem:[#allocation6 + $0x510] sm:$0xff]
    %v342 = vld [vmem:[#allocation6 + $0x518] sm:$0xff]
    %v343 = vld [vmem:[#allocation6 + $0x520] sm:$0xff]
    %v344 = vld [vmem:[#allocation6 + $0x528] sm:$0xff]
    %v345 = vld [vmem:[#allocation6 + $0x530] sm:$0xff]
    %v346 = vld [vmem:[#allocation6 + $0x538] sm:$0xff]
    %v347 = vld [vmem:[#allocation6 + $0x540] sm:$0xff]
    %v348 = vld [vmem:[#allocation6 + $0x548] sm:$0xff]
    %v349 = vld [vmem:[#allocation6 + $0x550] sm:$0xff]
    %v350 = vld [vmem:[#allocation6 + $0x558] sm:$0xff]
    %v351 = vld [vmem:[#allocation6 + $0x560] sm:$0xff]
    %v352 = vld [vmem:[#allocation6 + $0x568] sm:$0xff]
    %v353 = vld [vmem:[#allocation6 + $0x570] sm:$0xff]
    %v354 = vld [vmem:[#allocation6 + $0x578] sm:$0xff]
    %v355 = vld [vmem:[#allocation6 + $0x580] sm:$0xff]
    %v356 = vld [vmem:[#allocation6 + $0x588] sm:$0xff]
    %v357 = vld [vmem:[#allocation6 + $0x590] sm:$0xff]
    %v358 = vld [vmem:[#allocation6 + $0x598] sm:$0xff]
    %v359 = vld [vmem:[#allocation6 + $0x5a0] sm:$0xff]
    %v360 = vld [vmem:[#allocation6 + $0x5a8] sm:$0xff]
    %v361 = vld [vmem:[#allocation6 + $0x5b0] sm:$0xff]
    %v362 = vld [vmem:[#allocation6 + $0x5b8] sm:$0xff]
    %v363 = vld [vmem:[#allocation6 + $0x5c0] sm:$0xff]
    %v364 = vld [vmem:[#allocation6 + $0x5c8] sm:$0xff]
    %v365 = vld [vmem:[#allocation6 + $0x5d0] sm:$0xff]
    %v366 = vld [vmem:[#allocation6 + $0x5d8] sm:$0xff]
    %v367 = vld [vmem:[#allocation6 + $0x5e0] sm:$0xff]
    %v368 = vld [vmem:[#allocation6 + $0x5e8] sm:$0xff]
    %v369 = vld [vmem:[#allocation6 + $0x5f0] sm:$0xff]
    %v370 = vld [vmem:[#allocation6 + $0x5f8] sm:$0xff]
    %v371 = vld [vmem:[#allocation6 + $0x600] sm:$0xff]
    %v372 = vld [vmem:[#allocation6 + $0x608] sm:$0xff]
    %v373 = vld [vmem:[#allocation6 + $0x610] sm:$0xff]
    %v374 = vld [vmem:[#allocation6 + $0x618] sm:$0xff]
    %v375 = vld [vmem:[#allocation6 + $0x620] sm:$0xff]
    %v376 = vld [vmem:[#allocation6 + $0x628] sm:$0xff]
    %v377 = vld [vmem:[#allocation6 + $0x630] sm:$0xff]
    %v378 = vld [vmem:[#allocation6 + $0x638] sm:$0xff]
    %v379 = vld [vmem:[#allocation6 + $0x640] sm:$0xff]
    %v380 = vld [vmem:[#allocation6 + $0x648] sm:$0xff]
    %v381 = vld [vmem:[#allocation6 + $0x650] sm:$0xff]
    %v382 = vld [vmem:[#allocation6 + $0x658] sm:$0xff]
    %v383 = vld [vmem:[#allocation6 + $0x660] sm:$0xff]
    %v384 = vld [vmem:[#allocation6 + $0x668] sm:$0xff]
    %v385 = vld [vmem:[#allocation6 + $0x670] sm:$0xff]
    %v386 = vld [vmem:[#allocation6 + $0x678] sm:$0xff]
    %v387 = vld [vmem:[#allocation6 + $0x680] sm:$0xff]
    %v388 = vld [vmem:[#allocation6 + $0x688] sm:$0xff]
    %v389 = vld [vmem:[#allocation6 + $0x690] sm:$0xff]
    %v390 = vld [vmem:[#allocation6 + $0x698] sm:$0xff]
    %v391 = vld [vmem:[#allocation6 + $0x6a0] sm:$0xff]
    %v392 = vld [vmem:[#allocation6 + $0x6a8] sm:$0xff]
    %v393 = vld [vmem:[#allocation6 + $0x6b0] sm:$0xff]
    %v394 = vld [vmem:[#allocation6 + $0x6b8] sm:$0xff]
    %v395 = vld [vmem:[#allocation6 + $0x6c0] sm:$0xff]
    %v396 = vld [vmem:[#allocation6 + $0x6c8] sm:$0xff]
    %v397 = vld [vmem:[#allocation6 + $0x6d0] sm:$0xff]
    %v398 = vld [vmem:[#allocation6 + $0x6d8] sm:$0xff]
    %v399 = vld [vmem:[#allocation6 + $0x6e0] sm:$0xff]
    %v400 = vld [vmem:[#allocation6 + $0x6e8] sm:$0xff]
    %v401 = vld [vmem:[#allocation6 + $0x6f0] sm:$0xff]
    %v402 = vld [vmem:[#allocation6 + $0x6f8] sm:$0xff]
    %v403 = vld [vmem:[#allocation6 + $0x700] sm:$0xff]
    %v404 = vld [vmem:[#allocation6 + $0x708] sm:$0xff]
    %v405 = vld [vmem:[#allocation6 + $0x710] sm:$0xff]
    %v406 = vld [vmem:[#allocation6 + $0x718] sm:$0xff]
    %v407 = vld [vmem:[#allocation6 + $0x720] sm:$0xff]
    %v408 = vld [vmem:[#allocation6 + $0x728] sm:$0xff]
    %v409 = vld [vmem:[#allocation6 + $0x730] sm:$0xff]
    %v410 = vld [vmem:[#allocation6 + $0x738] sm:$0xff]
    %v411 = vld [vmem:[#allocation6 + $0x740] sm:$0xff]
    %v412 = vld [vmem:[#allocation6 + $0x748] sm:$0xff]
    %v413 = vld [vmem:[#allocation6 + $0x750] sm:$0xff]
    %v414 = vld [vmem:[#allocation6 + $0x758] sm:$0xff]
    %v415 = vld [vmem:[#allocation6 + $0x760] sm:$0xff]
    %v416 = vld [vmem:[#allocation6 + $0x768] sm:$0xff]
    %v417 = vld [vmem:[#allocation6 + $0x770] sm:$0xff]
    %v418 = vld [vmem:[#allocation6 + $0x778] sm:$0xff]
    %v419 = vld [vmem:[#allocation6 + $0x780] sm:$0xff]
    %v420 = vld [vmem:[#allocation6 + $0x788] sm:$0xff]
    %v421 = vld [vmem:[#allocation6 + $0x790] sm:$0xff]
    %v422 = vld [vmem:[#allocation6 + $0x798] sm:$0xff]
    %v423 = vld [vmem:[#allocation6 + $0x7a0] sm:$0xff]
    %v424 = vld [vmem:[#allocation6 + $0x7a8] sm:$0xff]
    %v425 = vld [vmem:[#allocation6 + $0x7b0] sm:$0xff]
    %v426 = vld [vmem:[#allocation6 + $0x7b8] sm:$0xff]
    %v427 = vld [vmem:[#allocation6 + $0x7c0] sm:$0xff]
    %v428 = vld [vmem:[#allocation6 + $0x7c8] sm:$0xff]
    %v429 = vld [vmem:[#allocation6 + $0x7d0] sm:$0xff]
    %v430 = vld [vmem:[#allocation6 + $0x7d8] sm:$0xff]
    %v431 = vld [vmem:[#allocation6 + $0x7e0] sm:$0xff]
    %v432 = vld [vmem:[#allocation6 + $0x7e8] sm:$0xff]
    %v433 = vld [vmem:[#allocation6 + $0x7f0] sm:$0xff]
    %v434 = vld [vmem:[#allocation6 + $0x7f8] sm:$0xff]
    %v435 = vld [vmem:[#allocation6 + $0x800] sm:$0xff]
    %v436 = vld [vmem:[#allocation6 + $0x808] sm:$0xff]
    %v437 = vld [vmem:[#allocation6 + $0x810] sm:$0xff]
    %v438 = vld [vmem:[#allocation6 + $0x818] sm:$0xff]
    %v439 = vld [vmem:[#allocation6 + $0x820] sm:$0xff]
    %v440 = vld [vmem:[#allocation6 + $0x828] sm:$0xff]
    %v441 = vld [vmem:[#allocation6 + $0x830] sm:$0xff]
    %v442 = vld [vmem:[#allocation6 + $0x838] sm:$0xff]
    %v443 = vld [vmem:[#allocation6 + $0x840] sm:$0xff]
    %v444 = vld [vmem:[#allocation6 + $0x848] sm:$0xff]
    %v445 = vld [vmem:[#allocation6 + $0x850] sm:$0xff]
    %v446 = vld [vmem:[#allocation6 + $0x858] sm:$0xff]
    %v447 = vld [vmem:[#allocation6 + $0x860] sm:$0xff]
    %v448 = vld [vmem:[#allocation6 + $0x868] sm:$0xff]
    %v449 = vld [vmem:[#allocation6 + $0x870] sm:$0xff]
    %v450 = vld [vmem:[#allocation6 + $0x878] sm:$0xff]
    %v451 = vld [vmem:[#allocation6 + $0x880] sm:$0xff]
    %v452 = vld [vmem:[#allocation6 + $0x888] sm:$0xff]
    %v453 = vld [vmem:[#allocation6 + $0x890] sm:$0xff]
    %v454 = vld [vmem:[#allocation6 + $0x898] sm:$0xff]
    %v455 = vld [vmem:[#allocation6 + $0x8a0] sm:$0xff]
    %v456 = vld [vmem:[#allocation6 + $0x8a8] sm:$0xff]
    %v457 = vld [vmem:[#allocation6 + $0x8b0] sm:$0xff]
    %v458 = vld [vmem:[#allocation6 + $0x8b8] sm:$0xff]
    %v459 = vld [vmem:[#allocation6 + $0x8c0] sm:$0xff]
    %v460 = vld [vmem:[#allocation6 + $0x8c8] sm:$0xff]
    %v461 = vld [vmem:[#allocation6 + $0x8d0] sm:$0xff]
    %v462 = vld [vmem:[#allocation6 + $0x8d8] sm:$0xff]
    %v463 = vld [vmem:[#allocation6 + $0x8e0] sm:$0xff]
    %v464 = vld [vmem:[#allocation6 + $0x8e8] sm:$0xff]
    %v465 = vld [vmem:[#allocation6 + $0x8f0] sm:$0xff]
    %v466 = vld [vmem:[#allocation6 + $0x8f8] sm:$0xff]
    %v467 = vld [vmem:[#allocation6 + $0x900] sm:$0xff]
    %v468 = vld [vmem:[#allocation6 + $0x908] sm:$0xff]
    %v469 = vld [vmem:[#allocation6 + $0x910] sm:$0xff]
    %v470 = vld [vmem:[#allocation6 + $0x918] sm:$0xff]
    %v471 = vld [vmem:[#allocation6 + $0x920] sm:$0xff]
    %v472 = vld [vmem:[#allocation6 + $0x928] sm:$0xff]
    %v473 = vld [vmem:[#allocation6 + $0x930] sm:$0xff]
    %v474 = vld [vmem:[#allocation6 + $0x938] sm:$0xff]
    %v475 = vld [vmem:[#allocation6 + $0x940] sm:$0xff]
    %v476 = vld [vmem:[#allocation6 + $0x948] sm:$0xff]
    %v477 = vld [vmem:[#allocation6 + $0x950] sm:$0xff]
    %v478 = vld [vmem:[#allocation6 + $0x958] sm:$0xff]
    %v479 = vld [vmem:[#allocation6 + $0x960] sm:$0xff]
    %v480 = vld [vmem:[#allocation6 + $0x968] sm:$0xff]
    %v481 = vld [vmem:[#allocation6 + $0x970] sm:$0xff]
    %v482 = vld [vmem:[#allocation6 + $0x978] sm:$0xff]
    %v483 = vld [vmem:[#allocation6 + $0x980] sm:$0xff]
    %v484 = vld [vmem:[#allocation6 + $0x988] sm:$0xff]
    %v485 = vld [vmem:[#allocation6 + $0x990] sm:$0xff]
    %v486 = vld [vmem:[#allocation6 + $0x998] sm:$0xff]
    %v487 = vld [vmem:[#allocation6 + $0x9a0] sm:$0xff]
    %v488 = vld [vmem:[#allocation6 + $0x9a8] sm:$0xff]
    %v489 = vld [vmem:[#allocation6 + $0x9b0] sm:$0xff]
    %v490 = vld [vmem:[#allocation6 + $0x9b8] sm:$0xff]
    %v491 = vld [vmem:[#allocation6 + $0x9c0] sm:$0xff]
    %v492 = vld [vmem:[#allocation6 + $0x9c8] sm:$0xff]
    %v493 = vld [vmem:[#allocation6 + $0x9d0] sm:$0xff]
    %v494 = vld [vmem:[#allocation6 + $0x9d8] sm:$0xff]
    %v495 = vld [vmem:[#allocation6 + $0x9e0] sm:$0xff]
    %v496 = vld [vmem:[#allocation6 + $0x9e8] sm:$0xff]
    %v497 = vld [vmem:[#allocation6 + $0x9f0] sm:$0xff]
    %v498 = vld [vmem:[#allocation6 + $0x9f8] sm:$0xff]
    %v499 = vld [vmem:[#allocation6 + $0xa00] sm:$0xff]
    %v500 = vld [vmem:[#allocation6 + $0xa08] sm:$0xff]
    %v501 = vld [vmem:[#allocation6 + $0xa10] sm:$0xff]
    %v502 = vld [vmem:[#allocation6 + $0xa18] sm:$0xff]
    %v503 = vld [vmem:[#allocation6 + $0xa20] sm:$0xff]
    %v504 = vld [vmem:[#allocation6 + $0xa28] sm:$0xff]
    %v505 = vld [vmem:[#allocation6 + $0xa30] sm:$0xff]
    %v506 = vld [vmem:[#allocation6 + $0xa38] sm:$0xff]
    %v507 = vld [vmem:[#allocation6 + $0xa40] sm:$0xff]
    %v508 = vld [vmem:[#allocation6 + $0xa48] sm:$0xff]
    %v509 = vld [vmem:[#allocation6 + $0xa50] sm:$0xff]
    %v510 = vld [vmem:[#allocation6 + $0xa58] sm:$0xff]
    %v511 = vld [vmem:[#allocation6 + $0xa60] sm:$0xff]
    %v512 = vld [vmem:[#allocation6 + $0xa68] sm:$0xff]
    %v513 = vld [vmem:[#allocation6 + $0xa70] sm:$0xff]
    %v514 = vld [vmem:[#allocation6 + $0xa78] sm:$0xff]
    %v515 = vld [vmem:[#allocation6 + $0xa80] sm:$0xff]
    %v516 = vld [vmem:[#allocation6 + $0xa88] sm:$0xff]
    %v517 = vld [vmem:[#allocation6 + $0xa90] sm:$0xff]
    %v518 = vld [vmem:[#allocation6 + $0xa98] sm:$0xff]
    %v519 = vld [vmem:[#allocation6 + $0xaa0] sm:$0xff]
    %v520 = vld [vmem:[#allocation6 + $0xaa8] sm:$0xff]
    %v521 = vld [vmem:[#allocation6 + $0xab0] sm:$0xff]
    %v522 = vld [vmem:[#allocation6 + $0xab8] sm:$0xff]
    %v523 = vld [vmem:[#allocation6 + $0xac0] sm:$0xff]
    %v524 = vld [vmem:[#allocation6 + $0xac8] sm:$0xff]
    %v525 = vld [vmem:[#allocation6 + $0xad0] sm:$0xff]
    %v526 = vld [vmem:[#allocation6 + $0xad8] sm:$0xff]
    %v527 = vld [vmem:[#allocation6 + $0xae0] sm:$0xff]
    %v528 = vld [vmem:[#allocation6 + $0xae8] sm:$0xff]
    %v529 = vld [vmem:[#allocation6 + $0xaf0] sm:$0xff]
    %v530 = vld [vmem:[#allocation6 + $0xaf8] sm:$0xff]
    %v531 = vld [vmem:[#allocation6 + $0xb00] sm:$0xff]
    %v532 = vld [vmem:[#allocation6 + $0xb08] sm:$0xff]
    %v533 = vld [vmem:[#allocation6 + $0xb10] sm:$0xff]
    %v534 = vld [vmem:[#allocation6 + $0xb18] sm:$0xff]
    %v535 = vld [vmem:[#allocation6 + $0xb20] sm:$0xff]
    %v536 = vld [vmem:[#allocation6 + $0xb28] sm:$0xff]
    %v537 = vld [vmem:[#allocation6 + $0xb30] sm:$0xff]
    %v538 = vld [vmem:[#allocation6 + $0xb38] sm:$0xff]
    %v539 = vld [vmem:[#allocation6 + $0xb40] sm:$0xff]
    %v540 = vld [vmem:[#allocation6 + $0xb48] sm:$0xff]
    %v541 = vld [vmem:[#allocation6 + $0xb50] sm:$0xff]
    %v542 = vld [vmem:[#allocation6 + $0xb58] sm:$0xff]
    %v543 = vld [vmem:[#allocation6 + $0xb60] sm:$0xff]
    %v544 = vld [vmem:[#allocation6 + $0xb68] sm:$0xff]
    %v545 = vld [vmem:[#allocation6 + $0xb70] sm:$0xff]
    %v546 = vld [vmem:[#allocation6 + $0xb78] sm:$0xff]
    %v547 = vld [vmem:[#allocation6 + $0xb80] sm:$0xff]
    %v548 = vld [vmem:[#allocation6 + $0xb88] sm:$0xff]
    %v549 = vld [vmem:[#allocation6 + $0xb90] sm:$0xff]
    %v550 = vld [vmem:[#allocation6 + $0xb98] sm:$0xff]
    %v551 = vld [vmem:[#allocation6 + $0xba0] sm:$0xff]
    %v552 = vld [vmem:[#allocation6 + $0xba8] sm:$0xff]
    %v553 = vld [vmem:[#allocation6 + $0xbb0] sm:$0xff]
    %v554 = vld [vmem:[#allocation6 + $0xbb8] sm:$0xff]
    %v555 = vld [vmem:[#allocation6 + $0xbc0] sm:$0xff]
    %v556 = vld [vmem:[#allocation6 + $0xbc8] sm:$0xff]
    %v557 = vld [vmem:[#allocation6 + $0xbd0] sm:$0xff]
    %v558 = vld [vmem:[#allocation6 + $0xbd8] sm:$0xff]
    %v559 = vld [vmem:[#allocation6 + $0xbe0] sm:$0xff]
    %v560 = vld [vmem:[#allocation6 + $0xbe8] sm:$0xff]
    %v561 = vld [vmem:[#allocation6 + $0xbf0] sm:$0xff]
    %v562 = vld [vmem:[#allocation6 + $0xbf8] sm:$0xff]
    %v563 = vld [vmem:[#allocation6 + $0xc00] sm:$0xff]
    %v564 = vld [vmem:[#allocation6 + $0xc08] sm:$0xff]
    %v565 = vld [vmem:[#allocation6 + $0xc10] sm:$0xff]
    %v566 = vld [vmem:[#allocation6 + $0xc18] sm:$0xff]
    %v567 = vld [vmem:[#allocation6 + $0xc20] sm:$0xff]
    %v568 = vld [vmem:[#allocation6 + $0xc28] sm:$0xff]
    %v569 = vld [vmem:[#allocation6 + $0xc30] sm:$0xff]
    %v570 = vld [vmem:[#allocation6 + $0xc38] sm:$0xff]
    %v571 = vld [vmem:[#allocation8] sm:$0xff]
    %v573 = vperm.slane %v571, 0
    %v574 = vperm.slane %v571, 1
    %v575 = vperm.slane %v571, 2
    %v576 = vperm.slane %v571, 3
    %v577 = vperm.slane %v571, 4
    %v578 = vperm.slane %v571, 5
    %v579 = vperm.slane %v571, 6
    %v580 = vperm.slane %v571, 7
    %v981 = vunpack.c.l.b16 %v179
    %v982 = vunpack.c.h.b16 %v179
    %v983 = vunpack.c.l.b16 %v180
    %v984 = vunpack.c.h.b16 %v180
    %v985 = vunpack.c.l.b16 %v181
    %v986 = vunpack.c.h.b16 %v181
    %v987 = vunpack.c.l.b16 %v182
    %v988 = vunpack.c.h.b16 %v182
    %v989 = vunpack.c.l.b16 %v183
    %v990 = vunpack.c.h.b16 %v183
    %v991 = vunpack.c.l.b16 %v184
    %v992 = vunpack.c.h.b16 %v184
    %v993 = vunpack.c.l.b16 %v185
    %v994 = vunpack.c.h.b16 %v185
    %v995 = vunpack.c.l.b16 %v186
    %v996 = vunpack.c.h.b16 %v186
    %v997 = vunpack.c.l.b16 %v187
    %v998 = vunpack.c.h.b16 %v187
    %v999 = vunpack.c.l.b16 %v188
    %v1000 = vunpack.c.h.b16 %v188
    %v1001 = vunpack.c.l.b16 %v189
    %v1002 = vunpack.c.h.b16 %v189
    %v1003 = vunpack.c.l.b16 %v190
    %v1004 = vunpack.c.h.b16 %v190
    %v1005 = vunpack.c.l.b16 %v191
    %v1006 = vunpack.c.h.b16 %v191
    %v1007 = vunpack.c.l.b16 %v192
    %v1008 = vunpack.c.h.b16 %v192
    %v1009 = vunpack.c.l.b16 %v193
    %v1010 = vunpack.c.h.b16 %v193
    %v1011 = vunpack.c.l.b16 %v194
    %v1012 = vunpack.c.h.b16 %v194
    %v1013 = vunpack.c.l.b16 %v195
    %v1014 = vunpack.c.h.b16 %v195
    %v1015 = vunpack.c.l.b16 %v196
    %v1016 = vunpack.c.h.b16 %v196
    %v1017 = vunpack.c.l.b16 %v197
    %v1018 = vunpack.c.h.b16 %v197
    %v1019 = vunpack.c.l.b16 %v198
    %v1020 = vunpack.c.h.b16 %v198
    %v1021 = vunpack.c.l.b16 %v199
    %v1022 = vunpack.c.h.b16 %v199
    %v1023 = vunpack.c.l.b16 %v200
    %v1024 = vunpack.c.h.b16 %v200
    %v1025 = vunpack.c.l.b16 %v201
    %v1026 = vunpack.c.h.b16 %v201
    %v1027 = vunpack.c.l.b16 %v202
    %v1028 = vunpack.c.h.b16 %v202
    %v1029 = vunpack.c.l.b16 %v203
    %v1030 = vunpack.c.h.b16 %v203
    %v1031 = vunpack.c.l.b16 %v204
    %v1032 = vunpack.c.h.b16 %v204
    %v1033 = vunpack.c.l.b16 %v205
    %v1034 = vunpack.c.h.b16 %v205
    %v1035 = vunpack.c.l.b16 %v206
    %v1036 = vunpack.c.h.b16 %v206
    %v1037 = vunpack.c.l.b16 %v207
    %v1038 = vunpack.c.h.b16 %v207
    %v1039 = vunpack.c.l.b16 %v208
    %v1040 = vunpack.c.h.b16 %v208
    %v1041 = vunpack.c.l.b16 %v209
    %v1042 = vunpack.c.h.b16 %v209
    %v1043 = vunpack.c.l.b16 %v210
    %v1044 = vunpack.c.h.b16 %v210
    %v1045 = vunpack.c.l.b16 %v211
    %v1046 = vunpack.c.h.b16 %v211
    %v1047 = vunpack.c.l.b16 %v212
    %v1048 = vunpack.c.h.b16 %v212
    %v1049 = vunpack.c.l.b16 %v213
    %v1050 = vunpack.c.h.b16 %v213
    %v1051 = vunpack.c.l.b16 %v214
    %v1052 = vunpack.c.h.b16 %v214
    %v1053 = vunpack.c.l.b16 %v215
    %v1054 = vunpack.c.h.b16 %v215
    %v1055 = vunpack.c.l.b16 %v216
    %v1056 = vunpack.c.h.b16 %v216
    %v1057 = vunpack.c.l.b16 %v217
    %v1058 = vunpack.c.h.b16 %v217
    %v1059 = vunpack.c.l.b16 %v218
    %v1060 = vunpack.c.h.b16 %v218
    %v1061 = vunpack.c.l.b16 %v219
    %v1062 = vunpack.c.h.b16 %v219
    %v1063 = vunpack.c.l.b16 %v220
    %v1064 = vunpack.c.h.b16 %v220
    %v1065 = vunpack.c.l.b16 %v221
    %v1066 = vunpack.c.h.b16 %v221
    %v1067 = vunpack.c.l.b16 %v222
    %v1068 = vunpack.c.h.b16 %v222
    %v1069 = vunpack.c.l.b16 %v223
    %v1070 = vunpack.c.h.b16 %v223
    %v1071 = vunpack.c.l.b16 %v224
    %v1072 = vunpack.c.h.b16 %v224
    %v1073 = vunpack.c.l.b16 %v225
    %v1074 = vunpack.c.h.b16 %v225
    %v1075 = vunpack.c.l.b16 %v226
    %v1076 = vunpack.c.h.b16 %v226
    %v1077 = vunpack.c.l.b16 %v227
    %v1078 = vunpack.c.h.b16 %v227
    %v1079 = vunpack.c.l.b16 %v228
    %v1080 = vunpack.c.h.b16 %v228
    %v1081 = vunpack.c.l.b16 %v229
    %v1082 = vunpack.c.h.b16 %v229
    %v1083 = vunpack.c.l.b16 %v230
    %v1084 = vunpack.c.h.b16 %v230
    %v1085 = vunpack.c.l.b16 %v231
    %v1086 = vunpack.c.h.b16 %v231
    %v1087 = vunpack.c.l.b16 %v232
    %v1088 = vunpack.c.h.b16 %v232
    %v1089 = vunpack.c.l.b16 %v233
    %v1090 = vunpack.c.h.b16 %v233
    %v1091 = vunpack.c.l.b16 %v234
    %v1092 = vunpack.c.h.b16 %v234
    %v1093 = vunpack.c.l.b16 %v235
    %v1094 = vunpack.c.h.b16 %v235
    %v1095 = vunpack.c.l.b16 %v236
    %v1096 = vunpack.c.h.b16 %v236
    %v1097 = vunpack.c.l.b16 %v237
    %v1098 = vunpack.c.h.b16 %v237
    %v1099 = vunpack.c.l.b16 %v238
    %v1100 = vunpack.c.h.b16 %v238
    %v1101 = vunpack.c.l.b16 %v239
    %v1102 = vunpack.c.h.b16 %v239
    %v1103 = vunpack.c.l.b16 %v240
    %v1104 = vunpack.c.h.b16 %v240
    %v1105 = vunpack.c.l.b16 %v241
    %v1106 = vunpack.c.h.b16 %v241
    %v1107 = vunpack.c.l.b16 %v242
    %v1108 = vunpack.c.h.b16 %v242
    %v1109 = vunpack.c.l.b16 %v243
    %v1110 = vunpack.c.h.b16 %v243
    %v1111 = vunpack.c.l.b16 %v244
    %v1112 = vunpack.c.h.b16 %v244
    %v1113 = vunpack.c.l.b16 %v245
    %v1114 = vunpack.c.h.b16 %v245
    %v1115 = vunpack.c.l.b16 %v246
    %v1116 = vunpack.c.h.b16 %v246
    %v1117 = vunpack.c.l.b16 %v247
    %v1118 = vunpack.c.h.b16 %v247
    %v1119 = vunpack.c.l.b16 %v248
    %v1120 = vunpack.c.h.b16 %v248
    %v1121 = vunpack.c.l.b16 %v249
    %v1122 = vunpack.c.h.b16 %v249
    %v1123 = vunpack.c.l.b16 %v250
    %v1124 = vunpack.c.h.b16 %v250
    %v1125 = vunpack.c.l.b16 %v251
    %v1126 = vunpack.c.h.b16 %v251
    %v1127 = vunpack.c.l.b16 %v252
    %v1128 = vunpack.c.h.b16 %v252
    %v1129 = vunpack.c.l.b16 %v253
    %v1130 = vunpack.c.h.b16 %v253
    %v1131 = vunpack.c.l.b16 %v254
    %v1132 = vunpack.c.h.b16 %v254
    %v1133 = vunpack.c.l.b16 %v255
    %v1134 = vunpack.c.h.b16 %v255
    %v1135 = vunpack.c.l.b16 %v256
    %v1136 = vunpack.c.h.b16 %v256
    %v1137 = vunpack.c.l.b16 %v257
    %v1138 = vunpack.c.h.b16 %v257
    %v1139 = vunpack.c.l.b16 %v258
    %v1140 = vunpack.c.h.b16 %v258
    %v1141 = vunpack.c.l.b16 %v259
    %v1142 = vunpack.c.h.b16 %v259
    %v1143 = vunpack.c.l.b16 %v260
    %v1144 = vunpack.c.h.b16 %v260
    %v1145 = vunpack.c.l.b16 %v261
    %v1146 = vunpack.c.h.b16 %v261
    %v1147 = vunpack.c.l.b16 %v262
    %v1148 = vunpack.c.h.b16 %v262
    %v1149 = vunpack.c.l.b16 %v263
    %v1150 = vunpack.c.h.b16 %v263
    %v1151 = vunpack.c.l.b16 %v264
    %v1152 = vunpack.c.h.b16 %v264
    %v1153 = vunpack.c.l.b16 %v265
    %v1154 = vunpack.c.h.b16 %v265
    %v1155 = vunpack.c.l.b16 %v266
    %v1156 = vunpack.c.h.b16 %v266
    %v1157 = vunpack.c.l.b16 %v267
    %v1158 = vunpack.c.h.b16 %v267
    %v1159 = vunpack.c.l.b16 %v268
    %v1160 = vunpack.c.h.b16 %v268
    %v1161 = vunpack.c.l.b16 %v269
    %v1162 = vunpack.c.h.b16 %v269
    %v1163 = vunpack.c.l.b16 %v270
    %v1164 = vunpack.c.h.b16 %v270
    %v1165 = vunpack.c.l.b16 %v271
    %v1166 = vunpack.c.h.b16 %v271
    %v1167 = vunpack.c.l.b16 %v272
    %v1168 = vunpack.c.h.b16 %v272
    %v1169 = vunpack.c.l.b16 %v273
    %v1170 = vunpack.c.h.b16 %v273
    %v1171 = vunpack.c.l.b16 %v274
    %v1172 = vunpack.c.h.b16 %v274
    %v1173 = vunpack.c.l.b16 %v275
    %v1174 = vunpack.c.h.b16 %v275
    %v1175 = vunpack.c.l.b16 %v276
    %v1176 = vunpack.c.h.b16 %v276
    %v1177 = vunpack.c.l.b16 %v277
    %v1178 = vunpack.c.h.b16 %v277
    %v1179 = vunpack.c.l.b16 %v278
    %v1180 = vunpack.c.h.b16 %v278
    %v1181 = vunpack.c.l.b16 %v279
    %v1182 = vunpack.c.h.b16 %v279
    %v1183 = vunpack.c.l.b16 %v280
    %v1184 = vunpack.c.h.b16 %v280
    %v1185 = vunpack.c.l.b16 %v281
    %v1186 = vunpack.c.h.b16 %v281
    %v1187 = vunpack.c.l.b16 %v282
    %v1188 = vunpack.c.h.b16 %v282
    %v1189 = vunpack.c.l.b16 %v283
    %v1190 = vunpack.c.h.b16 %v283
    %v1191 = vunpack.c.l.b16 %v284
    %v1192 = vunpack.c.h.b16 %v284
    %v1193 = vunpack.c.l.b16 %v285
    %v1194 = vunpack.c.h.b16 %v285
    %v1195 = vunpack.c.l.b16 %v286
    %v1196 = vunpack.c.h.b16 %v286
    %v1197 = vunpack.c.l.b16 %v287
    %v1198 = vunpack.c.h.b16 %v287
    %v1199 = vunpack.c.l.b16 %v288
    %v1200 = vunpack.c.h.b16 %v288
    %v1201 = vunpack.c.l.b16 %v289
    %v1202 = vunpack.c.h.b16 %v289
    %v1203 = vunpack.c.l.b16 %v290
    %v1204 = vunpack.c.h.b16 %v290
    %v1205 = vunpack.c.l.b16 %v291
    %v1206 = vunpack.c.h.b16 %v291
    %v1207 = vunpack.c.l.b16 %v292
    %v1208 = vunpack.c.h.b16 %v292
    %v1209 = vunpack.c.l.b16 %v293
    %v1210 = vunpack.c.h.b16 %v293
    %v1211 = vunpack.c.l.b16 %v294
    %v1212 = vunpack.c.h.b16 %v294
    %v1213 = vunpack.c.l.b16 %v295
    %v1214 = vunpack.c.h.b16 %v295
    %v1215 = vunpack.c.l.b16 %v296
    %v1216 = vunpack.c.h.b16 %v296
    %v1217 = vunpack.c.l.b16 %v297
    %v1218 = vunpack.c.h.b16 %v297
    %v1219 = vunpack.c.l.b16 %v298
    %v1220 = vunpack.c.h.b16 %v298
    %v1221 = vunpack.c.l.b16 %v299
    %v1222 = vunpack.c.h.b16 %v299
    %v1223 = vunpack.c.l.b16 %v300
    %v1224 = vunpack.c.h.b16 %v300
    %v1225 = vunpack.c.l.b16 %v301
    %v1226 = vunpack.c.h.b16 %v301
    %v1227 = vunpack.c.l.b16 %v302
    %v1228 = vunpack.c.h.b16 %v302
    %v1229 = vunpack.c.l.b16 %v303
    %v1230 = vunpack.c.h.b16 %v303
    %v1231 = vunpack.c.l.b16 %v304
    %v1232 = vunpack.c.h.b16 %v304
    %v1233 = vunpack.c.l.b16 %v305
    %v1234 = vunpack.c.h.b16 %v305
    %v1235 = vunpack.c.l.b16 %v306
    %v1236 = vunpack.c.h.b16 %v306
    %v1237 = vunpack.c.l.b16 %v307
    %v1238 = vunpack.c.h.b16 %v307
    %v1239 = vunpack.c.l.b16 %v308
    %v1240 = vunpack.c.h.b16 %v308
    %v1241 = vunpack.c.l.b16 %v309
    %v1242 = vunpack.c.h.b16 %v309
    %v1243 = vunpack.c.l.b16 %v310
    %v1244 = vunpack.c.h.b16 %v310
    %v1245 = vunpack.c.l.b16 %v311
    %v1246 = vunpack.c.h.b16 %v311
    %v1247 = vunpack.c.l.b16 %v312
    %v1248 = vunpack.c.h.b16 %v312
    %v1249 = vunpack.c.l.b16 %v313
    %v1250 = vunpack.c.h.b16 %v313
    %v1251 = vunpack.c.l.b16 %v314
    %v1252 = vunpack.c.h.b16 %v314
    %v1253 = vunpack.c.l.b16 %v315
    %v1254 = vunpack.c.h.b16 %v315
    %v1255 = vunpack.c.l.b16 %v316
    %v1256 = vunpack.c.h.b16 %v316
    %v1257 = vunpack.c.l.b16 %v317
    %v1258 = vunpack.c.h.b16 %v317
    %v1259 = vunpack.c.l.b16 %v318
    %v1260 = vunpack.c.h.b16 %v318
    %v1261 = vunpack.c.l.b16 %v319
    %v1262 = vunpack.c.h.b16 %v319
    %v1263 = vunpack.c.l.b16 %v320
    %v1264 = vunpack.c.h.b16 %v320
    %v1265 = vunpack.c.l.b16 %v321
    %v1266 = vunpack.c.h.b16 %v321
    %v1267 = vunpack.c.l.b16 %v322
    %v1268 = vunpack.c.h.b16 %v322
    %v1269 = vunpack.c.l.b16 %v323
    %v1270 = vunpack.c.h.b16 %v323
    %v1271 = vunpack.c.l.b16 %v324
    %v1272 = vunpack.c.h.b16 %v324
    %v1273 = vunpack.c.l.b16 %v325
    %v1274 = vunpack.c.h.b16 %v325
    %v1275 = vunpack.c.l.b16 %v326
    %v1276 = vunpack.c.h.b16 %v326
    %v1277 = vunpack.c.l.b16 %v327
    %v1278 = vunpack.c.h.b16 %v327
    %v1279 = vunpack.c.l.b16 %v328
    %v1280 = vunpack.c.h.b16 %v328
    %v1281 = vunpack.c.l.b16 %v329
    %v1282 = vunpack.c.h.b16 %v329
    %v1283 = vunpack.c.l.b16 %v330
    %v1284 = vunpack.c.h.b16 %v330
    %v1285 = vunpack.c.l.b16 %v331
    %v1286 = vunpack.c.h.b16 %v331
    %v1287 = vunpack.c.l.b16 %v332
    %v1288 = vunpack.c.h.b16 %v332
    %v1289 = vunpack.c.l.b16 %v333
    %v1290 = vunpack.c.h.b16 %v333
    %v1291 = vunpack.c.l.b16 %v334
    %v1292 = vunpack.c.h.b16 %v334
    %v1293 = vunpack.c.l.b16 %v335
    %v1294 = vunpack.c.h.b16 %v335
    %v1295 = vunpack.c.l.b16 %v336
    %v1296 = vunpack.c.h.b16 %v336
    %v1297 = vunpack.c.l.b16 %v337
    %v1298 = vunpack.c.h.b16 %v337
    %v1299 = vunpack.c.l.b16 %v338
    %v1300 = vunpack.c.h.b16 %v338
    %v1301 = vunpack.c.l.b16 %v339
    %v1302 = vunpack.c.h.b16 %v339
    %v1303 = vunpack.c.l.b16 %v340
    %v1304 = vunpack.c.h.b16 %v340
    %v1305 = vunpack.c.l.b16 %v341
    %v1306 = vunpack.c.h.b16 %v341
    %v1307 = vunpack.c.l.b16 %v342
    %v1308 = vunpack.c.h.b16 %v342
    %v1309 = vunpack.c.l.b16 %v343
    %v1310 = vunpack.c.h.b16 %v343
    %v1311 = vunpack.c.l.b16 %v344
    %v1312 = vunpack.c.h.b16 %v344
    %v1313 = vunpack.c.l.b16 %v345
    %v1314 = vunpack.c.h.b16 %v345
    %v1315 = vunpack.c.l.b16 %v346
    %v1316 = vunpack.c.h.b16 %v346
    %v1317 = vunpack.c.l.b16 %v347
    %v1318 = vunpack.c.h.b16 %v347
    %v1319 = vunpack.c.l.b16 %v348
    %v1320 = vunpack.c.h.b16 %v348
    %v1321 = vunpack.c.l.b16 %v349
    %v1322 = vunpack.c.h.b16 %v349
    %v1323 = vunpack.c.l.b16 %v350
    %v1324 = vunpack.c.h.b16 %v350
    %v1325 = vunpack.c.l.b16 %v351
    %v1326 = vunpack.c.h.b16 %v351
    %v1327 = vunpack.c.l.b16 %v352
    %v1328 = vunpack.c.h.b16 %v352
    %v1329 = vunpack.c.l.b16 %v353
    %v1330 = vunpack.c.h.b16 %v353
    %v1331 = vunpack.c.l.b16 %v354
    %v1332 = vunpack.c.h.b16 %v354
    %v1333 = vunpack.c.l.b16 %v355
    %v1334 = vunpack.c.h.b16 %v355
    %v1335 = vunpack.c.l.b16 %v356
    %v1336 = vunpack.c.h.b16 %v356
    %v1337 = vunpack.c.l.b16 %v357
    %v1338 = vunpack.c.h.b16 %v357
    %v1339 = vunpack.c.l.b16 %v358
    %v1340 = vunpack.c.h.b16 %v358
    %v1341 = vunpack.c.l.b16 %v359
    %v1342 = vunpack.c.h.b16 %v359
    %v1343 = vunpack.c.l.b16 %v360
    %v1344 = vunpack.c.h.b16 %v360
    %v1345 = vunpack.c.l.b16 %v361
    %v1346 = vunpack.c.h.b16 %v361
    %v1347 = vunpack.c.l.b16 %v362
    %v1348 = vunpack.c.h.b16 %v362
    %v1349 = vunpack.c.l.b16 %v363
    %v1350 = vunpack.c.h.b16 %v363
    %v1351 = vunpack.c.l.b16 %v364
    %v1352 = vunpack.c.h.b16 %v364
    %v1353 = vunpack.c.l.b16 %v365
    %v1354 = vunpack.c.h.b16 %v365
    %v1355 = vunpack.c.l.b16 %v366
    %v1356 = vunpack.c.h.b16 %v366
    %v1357 = vunpack.c.l.b16 %v367
    %v1358 = vunpack.c.h.b16 %v367
    %v1359 = vunpack.c.l.b16 %v368
    %v1360 = vunpack.c.h.b16 %v368
    %v1361 = vunpack.c.l.b16 %v369
    %v1362 = vunpack.c.h.b16 %v369
    %v1363 = vunpack.c.l.b16 %v370
    %v1364 = vunpack.c.h.b16 %v370
    %v1365 = vunpack.c.l.b16 %v371
    %v1366 = vunpack.c.h.b16 %v371
    %v1367 = vunpack.c.l.b16 %v372
    %v1368 = vunpack.c.h.b16 %v372
    %v1369 = vunpack.c.l.b16 %v373
    %v1370 = vunpack.c.h.b16 %v373
    %v1371 = vunpack.c.l.b16 %v374
    %v1372 = vunpack.c.h.b16 %v374
    %v1373 = vunpack.c.l.b16 %v375
    %v1374 = vunpack.c.h.b16 %v375
    %v1375 = vunpack.c.l.b16 %v376
    %v1376 = vunpack.c.h.b16 %v376
    %v1377 = vunpack.c.l.b16 %v377
    %v1378 = vunpack.c.h.b16 %v377
    %v1379 = vunpack.c.l.b16 %v378
    %v1380 = vunpack.c.h.b16 %v378
    %v1381 = vunpack.c.l.b16 %v379
    %v1382 = vunpack.c.h.b16 %v379
    %v1383 = vunpack.c.l.b16 %v380
    %v1384 = vunpack.c.h.b16 %v380
    %v1385 = vunpack.c.l.b16 %v381
    %v1386 = vunpack.c.h.b16 %v381
    %v1387 = vunpack.c.l.b16 %v382
    %v1388 = vunpack.c.h.b16 %v382
    %v1389 = vunpack.c.l.b16 %v383
    %v1390 = vunpack.c.h.b16 %v383
    %v1391 = vunpack.c.l.b16 %v384
    %v1392 = vunpack.c.h.b16 %v384
    %v1393 = vunpack.c.l.b16 %v385
    %v1394 = vunpack.c.h.b16 %v385
    %v1395 = vunpack.c.l.b16 %v386
    %v1396 = vunpack.c.h.b16 %v386
    %v1397 = vunpack.c.l.b16 %v387
    %v1398 = vunpack.c.h.b16 %v387
    %v1399 = vunpack.c.l.b16 %v388
    %v1400 = vunpack.c.h.b16 %v388
    %v1401 = vunpack.c.l.b16 %v389
    %v1402 = vunpack.c.h.b16 %v389
    %v1403 = vunpack.c.l.b16 %v390
    %v1404 = vunpack.c.h.b16 %v390
    %v1405 = vunpack.c.l.b16 %v391
    %v1406 = vunpack.c.h.b16 %v391
    %v1407 = vunpack.c.l.b16 %v392
    %v1408 = vunpack.c.h.b16 %v392
    %v1409 = vunpack.c.l.b16 %v393
    %v1410 = vunpack.c.h.b16 %v393
    %v1411 = vunpack.c.l.b16 %v394
    %v1412 = vunpack.c.h.b16 %v394
    %v1413 = vunpack.c.l.b16 %v395
    %v1414 = vunpack.c.h.b16 %v395
    %v1415 = vunpack.c.l.b16 %v396
    %v1416 = vunpack.c.h.b16 %v396
    %v1417 = vunpack.c.l.b16 %v397
    %v1418 = vunpack.c.h.b16 %v397
    %v1419 = vunpack.c.l.b16 %v398
    %v1420 = vunpack.c.h.b16 %v398
    %v1421 = vunpack.c.l.b16 %v399
    %v1422 = vunpack.c.h.b16 %v399
    %v1423 = vunpack.c.l.b16 %v400
    %v1424 = vunpack.c.h.b16 %v400
    %v1425 = vunpack.c.l.b16 %v401
    %v1426 = vunpack.c.h.b16 %v401
    %v1427 = vunpack.c.l.b16 %v402
    %v1428 = vunpack.c.h.b16 %v402
    %v1429 = vunpack.c.l.b16 %v403
    %v1430 = vunpack.c.h.b16 %v403
    %v1431 = vunpack.c.l.b16 %v404
    %v1432 = vunpack.c.h.b16 %v404
    %v1433 = vunpack.c.l.b16 %v405
    %v1434 = vunpack.c.h.b16 %v405
    %v1435 = vunpack.c.l.b16 %v406
    %v1436 = vunpack.c.h.b16 %v406
    %v1437 = vunpack.c.l.b16 %v407
    %v1438 = vunpack.c.h.b16 %v407
    %v1439 = vunpack.c.l.b16 %v408
    %v1440 = vunpack.c.h.b16 %v408
    %v1441 = vunpack.c.l.b16 %v409
    %v1442 = vunpack.c.h.b16 %v409
    %v1443 = vunpack.c.l.b16 %v410
    %v1444 = vunpack.c.h.b16 %v410
    %v1445 = vunpack.c.l.b16 %v411
    %v1446 = vunpack.c.h.b16 %v411
    %v1447 = vunpack.c.l.b16 %v412
    %v1448 = vunpack.c.h.b16 %v412
    %v1449 = vunpack.c.l.b16 %v413
    %v1450 = vunpack.c.h.b16 %v413
    %v1451 = vunpack.c.l.b16 %v414
    %v1452 = vunpack.c.h.b16 %v414
    %v1453 = vunpack.c.l.b16 %v415
    %v1454 = vunpack.c.h.b16 %v415
    %v1455 = vunpack.c.l.b16 %v416
    %v1456 = vunpack.c.h.b16 %v416
    %v1457 = vunpack.c.l.b16 %v417
    %v1458 = vunpack.c.h.b16 %v417
    %v1459 = vunpack.c.l.b16 %v418
    %v1460 = vunpack.c.h.b16 %v418
    %v1461 = vunpack.c.l.b16 %v419
    %v1462 = vunpack.c.h.b16 %v419
    %v1463 = vunpack.c.l.b16 %v420
    %v1464 = vunpack.c.h.b16 %v420
    %v1465 = vunpack.c.l.b16 %v421
    %v1466 = vunpack.c.h.b16 %v421
    %v1467 = vunpack.c.l.b16 %v422
    %v1468 = vunpack.c.h.b16 %v422
    %v1469 = vunpack.c.l.b16 %v423
    %v1470 = vunpack.c.h.b16 %v423
    %v1471 = vunpack.c.l.b16 %v424
    %v1472 = vunpack.c.h.b16 %v424
    %v1473 = vunpack.c.l.b16 %v425
    %v1474 = vunpack.c.h.b16 %v425
    %v1475 = vunpack.c.l.b16 %v426
    %v1476 = vunpack.c.h.b16 %v426
    %v1477 = vunpack.c.l.b16 %v427
    %v1478 = vunpack.c.h.b16 %v427
    %v1479 = vunpack.c.l.b16 %v428
    %v1480 = vunpack.c.h.b16 %v428
    %v1481 = vunpack.c.l.b16 %v429
    %v1482 = vunpack.c.h.b16 %v429
    %v1483 = vunpack.c.l.b16 %v430
    %v1484 = vunpack.c.h.b16 %v430
    %v1485 = vunpack.c.l.b16 %v431
    %v1486 = vunpack.c.h.b16 %v431
    %v1487 = vunpack.c.l.b16 %v432
    %v1488 = vunpack.c.h.b16 %v432
    %v1489 = vunpack.c.l.b16 %v433
    %v1490 = vunpack.c.h.b16 %v433
    %v1491 = vunpack.c.l.b16 %v434
    %v1492 = vunpack.c.h.b16 %v434
    %v1493 = vunpack.c.l.b16 %v435
    %v1494 = vunpack.c.h.b16 %v435
    %v1495 = vunpack.c.l.b16 %v436
    %v1496 = vunpack.c.h.b16 %v436
    %v1497 = vunpack.c.l.b16 %v437
    %v1498 = vunpack.c.h.b16 %v437
    %v1499 = vunpack.c.l.b16 %v438
    %v1500 = vunpack.c.h.b16 %v438
    %v1501 = vunpack.c.l.b16 %v439
    %v1502 = vunpack.c.h.b16 %v439
    %v1503 = vunpack.c.l.b16 %v440
    %v1504 = vunpack.c.h.b16 %v440
    %v1505 = vunpack.c.l.b16 %v441
    %v1506 = vunpack.c.h.b16 %v441
    %v1507 = vunpack.c.l.b16 %v442
    %v1508 = vunpack.c.h.b16 %v442
    %v1509 = vunpack.c.l.b16 %v443
    %v1510 = vunpack.c.h.b16 %v443
    %v1511 = vunpack.c.l.b16 %v444
    %v1512 = vunpack.c.h.b16 %v444
    %v1513 = vunpack.c.l.b16 %v445
    %v1514 = vunpack.c.h.b16 %v445
    %v1515 = vunpack.c.l.b16 %v446
    %v1516 = vunpack.c.h.b16 %v446
    %v1517 = vunpack.c.l.b16 %v447
    %v1518 = vunpack.c.h.b16 %v447
    %v1519 = vunpack.c.l.b16 %v448
    %v1520 = vunpack.c.h.b16 %v448
    %v1521 = vunpack.c.l.b16 %v449
    %v1522 = vunpack.c.h.b16 %v449
    %v1523 = vunpack.c.l.b16 %v450
    %v1524 = vunpack.c.h.b16 %v450
    %v1525 = vunpack.c.l.b16 %v451
    %v1526 = vunpack.c.h.b16 %v451
    %v1527 = vunpack.c.l.b16 %v452
    %v1528 = vunpack.c.h.b16 %v452
    %v1529 = vunpack.c.l.b16 %v453
    %v1530 = vunpack.c.h.b16 %v453
    %v1531 = vunpack.c.l.b16 %v454
    %v1532 = vunpack.c.h.b16 %v454
    %v1533 = vunpack.c.l.b16 %v455
    %v1534 = vunpack.c.h.b16 %v455
    %v1535 = vunpack.c.l.b16 %v456
    %v1536 = vunpack.c.h.b16 %v456
    %v1537 = vunpack.c.l.b16 %v457
    %v1538 = vunpack.c.h.b16 %v457
    %v1539 = vunpack.c.l.b16 %v458
    %v1540 = vunpack.c.h.b16 %v458
    %v1541 = vunpack.c.l.b16 %v459
    %v1542 = vunpack.c.h.b16 %v459
    %v1543 = vunpack.c.l.b16 %v460
    %v1544 = vunpack.c.h.b16 %v460
    %v1545 = vunpack.c.l.b16 %v461
    %v1546 = vunpack.c.h.b16 %v461
    %v1547 = vunpack.c.l.b16 %v462
    %v1548 = vunpack.c.h.b16 %v462
    %v1549 = vunpack.c.l.b16 %v463
    %v1550 = vunpack.c.h.b16 %v463
    %v1551 = vunpack.c.l.b16 %v464
    %v1552 = vunpack.c.h.b16 %v464
    %v1553 = vunpack.c.l.b16 %v465
    %v1554 = vunpack.c.h.b16 %v465
    %v1555 = vunpack.c.l.b16 %v466
    %v1556 = vunpack.c.h.b16 %v466
    %v1557 = vunpack.c.l.b16 %v467
    %v1558 = vunpack.c.h.b16 %v467
    %v1559 = vunpack.c.l.b16 %v468
    %v1560 = vunpack.c.h.b16 %v468
    %v1561 = vunpack.c.l.b16 %v469
    %v1562 = vunpack.c.h.b16 %v469
    %v1563 = vunpack.c.l.b16 %v470
    %v1564 = vunpack.c.h.b16 %v470
    %v1565 = vunpack.c.l.b16 %v471
    %v1566 = vunpack.c.h.b16 %v471
    %v1567 = vunpack.c.l.b16 %v472
    %v1568 = vunpack.c.h.b16 %v472
    %v1569 = vunpack.c.l.b16 %v473
    %v1570 = vunpack.c.h.b16 %v473
    %v1571 = vunpack.c.l.b16 %v474
    %v1572 = vunpack.c.h.b16 %v474
    %v1573 = vunpack.c.l.b16 %v475
    %v1574 = vunpack.c.h.b16 %v475
    %v1575 = vunpack.c.l.b16 %v476
    %v1576 = vunpack.c.h.b16 %v476
    %v1577 = vunpack.c.l.b16 %v477
    %v1578 = vunpack.c.h.b16 %v477
    %v1579 = vunpack.c.l.b16 %v478
    %v1580 = vunpack.c.h.b16 %v478
    %v1581 = vunpack.c.l.b16 %v479
    %v1582 = vunpack.c.h.b16 %v479
    %v1583 = vunpack.c.l.b16 %v480
    %v1584 = vunpack.c.h.b16 %v480
    %v1585 = vunpack.c.l.b16 %v481
    %v1586 = vunpack.c.h.b16 %v481
    %v1587 = vunpack.c.l.b16 %v482
    %v1588 = vunpack.c.h.b16 %v482
    %v1589 = vunpack.c.l.b16 %v483
    %v1590 = vunpack.c.h.b16 %v483
    %v1591 = vunpack.c.l.b16 %v484
    %v1592 = vunpack.c.h.b16 %v484
    %v1593 = vunpack.c.l.b16 %v485
    %v1594 = vunpack.c.h.b16 %v485
    %v1595 = vunpack.c.l.b16 %v486
    %v1596 = vunpack.c.h.b16 %v486
    %v1597 = vunpack.c.l.b16 %v487
    %v1598 = vunpack.c.h.b16 %v487
    %v1599 = vunpack.c.l.b16 %v488
    %v1600 = vunpack.c.h.b16 %v488
    %v1601 = vunpack.c.l.b16 %v489
    %v1602 = vunpack.c.h.b16 %v489
    %v1603 = vunpack.c.l.b16 %v490
    %v1604 = vunpack.c.h.b16 %v490
    %v1605 = vunpack.c.l.b16 %v491
    %v1606 = vunpack.c.h.b16 %v491
    %v1607 = vunpack.c.l.b16 %v492
    %v1608 = vunpack.c.h.b16 %v492
    %v1609 = vunpack.c.l.b16 %v493
    %v1610 = vunpack.c.h.b16 %v493
    %v1611 = vunpack.c.l.b16 %v494
    %v1612 = vunpack.c.h.b16 %v494
    %v1613 = vunpack.c.l.b16 %v495
    %v1614 = vunpack.c.h.b16 %v495
    %v1615 = vunpack.c.l.b16 %v496
    %v1616 = vunpack.c.h.b16 %v496
    %v1617 = vunpack.c.l.b16 %v497
    %v1618 = vunpack.c.h.b16 %v497
    %v1619 = vunpack.c.l.b16 %v498
    %v1620 = vunpack.c.h.b16 %v498
    %v1621 = vunpack.c.l.b16 %v499
    %v1622 = vunpack.c.h.b16 %v499
    %v1623 = vunpack.c.l.b16 %v500
    %v1624 = vunpack.c.h.b16 %v500
    %v1625 = vunpack.c.l.b16 %v501
    %v1626 = vunpack.c.h.b16 %v501
    %v1627 = vunpack.c.l.b16 %v502
    %v1628 = vunpack.c.h.b16 %v502
    %v1629 = vunpack.c.l.b16 %v503
    %v1630 = vunpack.c.h.b16 %v503
    %v1631 = vunpack.c.l.b16 %v504
    %v1632 = vunpack.c.h.b16 %v504
    %v1633 = vunpack.c.l.b16 %v505
    %v1634 = vunpack.c.h.b16 %v505
    %v1635 = vunpack.c.l.b16 %v506
    %v1636 = vunpack.c.h.b16 %v506
    %v1637 = vunpack.c.l.b16 %v507
    %v1638 = vunpack.c.h.b16 %v507
    %v1639 = vunpack.c.l.b16 %v508
    %v1640 = vunpack.c.h.b16 %v508
    %v1641 = vunpack.c.l.b16 %v509
    %v1642 = vunpack.c.h.b16 %v509
    %v1643 = vunpack.c.l.b16 %v510
    %v1644 = vunpack.c.h.b16 %v510
    %v1645 = vunpack.c.l.b16 %v511
    %v1646 = vunpack.c.h.b16 %v511
    %v1647 = vunpack.c.l.b16 %v512
    %v1648 = vunpack.c.h.b16 %v512
    %v1649 = vunpack.c.l.b16 %v513
    %v1650 = vunpack.c.h.b16 %v513
    %v1651 = vunpack.c.l.b16 %v514
    %v1652 = vunpack.c.h.b16 %v514
    %v1653 = vunpack.c.l.b16 %v515
    %v1654 = vunpack.c.h.b16 %v515
    %v1655 = vunpack.c.l.b16 %v516
    %v1656 = vunpack.c.h.b16 %v516
    %v1657 = vunpack.c.l.b16 %v517
    %v1658 = vunpack.c.h.b16 %v517
    %v1659 = vunpack.c.l.b16 %v518
    %v1660 = vunpack.c.h.b16 %v518
    %v1661 = vunpack.c.l.b16 %v519
    %v1662 = vunpack.c.h.b16 %v519
    %v1663 = vunpack.c.l.b16 %v520
    %v1664 = vunpack.c.h.b16 %v520
    %v1665 = vunpack.c.l.b16 %v521
    %v1666 = vunpack.c.h.b16 %v521
    %v1667 = vunpack.c.l.b16 %v522
    %v1668 = vunpack.c.h.b16 %v522
    %v1669 = vunpack.c.l.b16 %v523
    %v1670 = vunpack.c.h.b16 %v523
    %v1671 = vunpack.c.l.b16 %v524
    %v1672 = vunpack.c.h.b16 %v524
    %v1673 = vunpack.c.l.b16 %v525
    %v1674 = vunpack.c.h.b16 %v525
    %v1675 = vunpack.c.l.b16 %v526
    %v1676 = vunpack.c.h.b16 %v526
    %v1677 = vunpack.c.l.b16 %v527
    %v1678 = vunpack.c.h.b16 %v527
    %v1679 = vunpack.c.l.b16 %v528
    %v1680 = vunpack.c.h.b16 %v528
    %v1681 = vunpack.c.l.b16 %v529
    %v1682 = vunpack.c.h.b16 %v529
    %v1683 = vunpack.c.l.b16 %v530
    %v1684 = vunpack.c.h.b16 %v530
    %v1685 = vunpack.c.l.b16 %v531
    %v1686 = vunpack.c.h.b16 %v531
    %v1687 = vunpack.c.l.b16 %v532
    %v1688 = vunpack.c.h.b16 %v532
    %v1689 = vunpack.c.l.b16 %v533
    %v1690 = vunpack.c.h.b16 %v533
    %v1691 = vunpack.c.l.b16 %v534
    %v1692 = vunpack.c.h.b16 %v534
    %v1693 = vunpack.c.l.b16 %v535
    %v1694 = vunpack.c.h.b16 %v535
    %v1695 = vunpack.c.l.b16 %v536
    %v1696 = vunpack.c.h.b16 %v536
    %v1697 = vunpack.c.l.b16 %v537
    %v1698 = vunpack.c.h.b16 %v537
    %v1699 = vunpack.c.l.b16 %v538
    %v1700 = vunpack.c.h.b16 %v538
    %v1701 = vunpack.c.l.b16 %v539
    %v1702 = vunpack.c.h.b16 %v539
    %v1703 = vunpack.c.l.b16 %v540
    %v1704 = vunpack.c.h.b16 %v540
    %v1705 = vunpack.c.l.b16 %v541
    %v1706 = vunpack.c.h.b16 %v541
    %v1707 = vunpack.c.l.b16 %v542
    %v1708 = vunpack.c.h.b16 %v542
    %v1709 = vunpack.c.l.b16 %v543
    %v1710 = vunpack.c.h.b16 %v543
    %v1711 = vunpack.c.l.b16 %v544
    %v1712 = vunpack.c.h.b16 %v544
    %v1713 = vunpack.c.l.b16 %v545
    %v1714 = vunpack.c.h.b16 %v545
    %v1715 = vunpack.c.l.b16 %v546
    %v1716 = vunpack.c.h.b16 %v546
    %v1717 = vunpack.c.l.b16 %v547
    %v1718 = vunpack.c.h.b16 %v547
    %v1719 = vunpack.c.l.b16 %v548
    %v1720 = vunpack.c.h.b16 %v548
    %v1721 = vunpack.c.l.b16 %v549
    %v1722 = vunpack.c.h.b16 %v549
    %v1723 = vunpack.c.l.b16 %v550
    %v1724 = vunpack.c.h.b16 %v550
    %v1725 = vunpack.c.l.b16 %v551
    %v1726 = vunpack.c.h.b16 %v551
    %v1727 = vunpack.c.l.b16 %v552
    %v1728 = vunpack.c.h.b16 %v552
    %v1729 = vunpack.c.l.b16 %v553
    %v1730 = vunpack.c.h.b16 %v553
    %v1731 = vunpack.c.l.b16 %v554
    %v1732 = vunpack.c.h.b16 %v554
    %v1733 = vunpack.c.l.b16 %v555
    %v1734 = vunpack.c.h.b16 %v555
    %v1735 = vunpack.c.l.b16 %v556
    %v1736 = vunpack.c.h.b16 %v556
    %v1737 = vunpack.c.l.b16 %v557
    %v1738 = vunpack.c.h.b16 %v557
    %v1739 = vunpack.c.l.b16 %v558
    %v1740 = vunpack.c.h.b16 %v558
    %v1741 = vunpack.c.l.b16 %v559
    %v1742 = vunpack.c.h.b16 %v559
    %v1743 = vunpack.c.l.b16 %v560
    %v1744 = vunpack.c.h.b16 %v560
    %v1745 = vunpack.c.l.b16 %v561
    %v1746 = vunpack.c.h.b16 %v561
    %v1747 = vunpack.c.l.b16 %v562
    %v1748 = vunpack.c.h.b16 %v562
    %v1749 = vunpack.c.l.b16 %v563
    %v1750 = vunpack.c.h.b16 %v563
    %v1751 = vunpack.c.l.b16 %v564
    %v1752 = vunpack.c.h.b16 %v564
    %v1753 = vunpack.c.l.b16 %v565
    %v1754 = vunpack.c.h.b16 %v565
    %v1755 = vunpack.c.l.b16 %v566
    %v1756 = vunpack.c.h.b16 %v566
    %v1757 = vunpack.c.l.b16 %v567
    %v1758 = vunpack.c.h.b16 %v567
    %v1759 = vunpack.c.l.b16 %v568
    %v1760 = vunpack.c.h.b16 %v568
    %v1761 = vunpack.c.l.b16 %v569
    %v1762 = vunpack.c.h.b16 %v569
    %v1763 = vunpack.c.l.b16 %v570
    %v1764 = vunpack.c.h.b16 %v570
    %v1765 = vpack.c.b16 %v989, %v981
    %v1766 = vpack.c.b16 %v990, %v982
    %v1767 = vpack.c.b16 %v991, %v983
    %v1768 = vpack.c.b16 %v992, %v984
    %v1769 = vpack.c.b16 %v993, %v985
    %v1770 = vpack.c.b16 %v994, %v986
    %v1771 = vpack.c.b16 %v995, %v987
    %v1772 = vpack.c.b16 %v996, %v988
    %v1773 = vpack.c.b16 %v1005, %v997
    %v1774 = vpack.c.b16 %v1006, %v998
    %v1775 = vpack.c.b16 %v1007, %v999
    %v1776 = vpack.c.b16 %v1008, %v1000
    %v1777 = vpack.c.b16 %v1009, %v1001
    %v1778 = vpack.c.b16 %v1010, %v1002
    %v1779 = vpack.c.b16 %v1011, %v1003
    %v1780 = vpack.c.b16 %v1012, %v1004
    %v1781 = vpack.c.b16 %v1021, %v1013
    %v1782 = vpack.c.b16 %v1022, %v1014
    %v1783 = vpack.c.b16 %v1023, %v1015
    %v1784 = vpack.c.b16 %v1024, %v1016
    %v1785 = vpack.c.b16 %v1025, %v1017
    %v1786 = vpack.c.b16 %v1026, %v1018
    %v1787 = vpack.c.b16 %v1027, %v1019
    %v1788 = vpack.c.b16 %v1028, %v1020
    %v1789 = vpack.c.b16 %v1037, %v1029
    %v1790 = vpack.c.b16 %v1038, %v1030
    %v1791 = vpack.c.b16 %v1039, %v1031
    %v1792 = vpack.c.b16 %v1040, %v1032
    %v1793 = vpack.c.b16 %v1041, %v1033
    %v1794 = vpack.c.b16 %v1042, %v1034
    %v1795 = vpack.c.b16 %v1043, %v1035
    %v1796 = vpack.c.b16 %v1044, %v1036
    %v1797 = vpack.c.b16 %v1053, %v1045
    %v1798 = vpack.c.b16 %v1054, %v1046
    %v1799 = vpack.c.b16 %v1055, %v1047
    %v1800 = vpack.c.b16 %v1056, %v1048
    %v1801 = vpack.c.b16 %v1057, %v1049
    %v1802 = vpack.c.b16 %v1058, %v1050
    %v1803 = vpack.c.b16 %v1059, %v1051
    %v1804 = vpack.c.b16 %v1060, %v1052
    %v1805 = vpack.c.b16 %v1069, %v1061
    %v1806 = vpack.c.b16 %v1070, %v1062
    %v1807 = vpack.c.b16 %v1071, %v1063
    %v1808 = vpack.c.b16 %v1072, %v1064
    %v1809 = vpack.c.b16 %v1073, %v1065
    %v1810 = vpack.c.b16 %v1074, %v1066
    %v1811 = vpack.c.b16 %v1075, %v1067
    %v1812 = vpack.c.b16 %v1076, %v1068
    %v1813 = vpack.c.b16 %v1085, %v1077
    %v1814 = vpack.c.b16 %v1086, %v1078
    %v1815 = vpack.c.b16 %v1087, %v1079
    %v1816 = vpack.c.b16 %v1088, %v1080
    %v1817 = vpack.c.b16 %v1089, %v1081
    %v1818 = vpack.c.b16 %v1090, %v1082
    %v1819 = vpack.c.b16 %v1091, %v1083
    %v1820 = vpack.c.b16 %v1092, %v1084
    %v1821 = vpack.c.b16 %v1101, %v1093
    %v1822 = vpack.c.b16 %v1102, %v1094
    %v1823 = vpack.c.b16 %v1103, %v1095
    %v1824 = vpack.c.b16 %v1104, %v1096
    %v1825 = vpack.c.b16 %v1105, %v1097
    %v1826 = vpack.c.b16 %v1106, %v1098
    %v1827 = vpack.c.b16 %v1107, %v1099
    %v1828 = vpack.c.b16 %v1108, %v1100
    %v1829 = vpack.c.b16 %v1117, %v1109
    %v1830 = vpack.c.b16 %v1118, %v1110
    %v1831 = vpack.c.b16 %v1119, %v1111
    %v1832 = vpack.c.b16 %v1120, %v1112
    %v1833 = vpack.c.b16 %v1121, %v1113
    %v1834 = vpack.c.b16 %v1122, %v1114
    %v1835 = vpack.c.b16 %v1123, %v1115
    %v1836 = vpack.c.b16 %v1124, %v1116
    %v1837 = vpack.c.b16 %v1133, %v1125
    %v1838 = vpack.c.b16 %v1134, %v1126
    %v1839 = vpack.c.b16 %v1135, %v1127
    %v1840 = vpack.c.b16 %v1136, %v1128
    %v1841 = vpack.c.b16 %v1137, %v1129
    %v1842 = vpack.c.b16 %v1138, %v1130
    %v1843 = vpack.c.b16 %v1139, %v1131
    %v1844 = vpack.c.b16 %v1140, %v1132
    %v1845 = vpack.c.b16 %v1149, %v1141
    %v1846 = vpack.c.b16 %v1150, %v1142
    %v1847 = vpack.c.b16 %v1151, %v1143
    %v1848 = vpack.c.b16 %v1152, %v1144
    %v1849 = vpack.c.b16 %v1153, %v1145
    %v1850 = vpack.c.b16 %v1154, %v1146
    %v1851 = vpack.c.b16 %v1155, %v1147
    %v1852 = vpack.c.b16 %v1156, %v1148
    %v1853 = vpack.c.b16 %v1165, %v1157
    %v1854 = vpack.c.b16 %v1166, %v1158
    %v1855 = vpack.c.b16 %v1167, %v1159
    %v1856 = vpack.c.b16 %v1168, %v1160
    %v1857 = vpack.c.b16 %v1169, %v1161
    %v1858 = vpack.c.b16 %v1170, %v1162
    %v1859 = vpack.c.b16 %v1171, %v1163
    %v1860 = vpack.c.b16 %v1172, %v1164
    %v1861 = vpack.c.b16 %v1181, %v1173
    %v1862 = vpack.c.b16 %v1182, %v1174
    %v1863 = vpack.c.b16 %v1183, %v1175
    %v1864 = vpack.c.b16 %v1184, %v1176
    %v1865 = vpack.c.b16 %v1185, %v1177
    %v1866 = vpack.c.b16 %v1186, %v1178
    %v1867 = vpack.c.b16 %v1187, %v1179
    %v1868 = vpack.c.b16 %v1188, %v1180
    %v1869 = vpack.c.b16 %v1197, %v1189
    %v1870 = vpack.c.b16 %v1198, %v1190
    %v1871 = vpack.c.b16 %v1199, %v1191
    %v1872 = vpack.c.b16 %v1200, %v1192
    %v1873 = vpack.c.b16 %v1201, %v1193
    %v1874 = vpack.c.b16 %v1202, %v1194
    %v1875 = vpack.c.b16 %v1203, %v1195
    %v1876 = vpack.c.b16 %v1204, %v1196
    %v1877 = vpack.c.b16 %v1213, %v1205
    %v1878 = vpack.c.b16 %v1214, %v1206
    %v1879 = vpack.c.b16 %v1215, %v1207
    %v1880 = vpack.c.b16 %v1216, %v1208
    %v1881 = vpack.c.b16 %v1217, %v1209
    %v1882 = vpack.c.b16 %v1218, %v1210
    %v1883 = vpack.c.b16 %v1219, %v1211
    %v1884 = vpack.c.b16 %v1220, %v1212
    %v1885 = vpack.c.b16 %v1229, %v1221
    %v1886 = vpack.c.b16 %v1230, %v1222
    %v1887 = vpack.c.b16 %v1231, %v1223
    %v1888 = vpack.c.b16 %v1232, %v1224
    %v1889 = vpack.c.b16 %v1233, %v1225
    %v1890 = vpack.c.b16 %v1234, %v1226
    %v1891 = vpack.c.b16 %v1235, %v1227
    %v1892 = vpack.c.b16 %v1236, %v1228
    %v1893 = vpack.c.b16 %v1245, %v1237
    %v1894 = vpack.c.b16 %v1246, %v1238
    %v1895 = vpack.c.b16 %v1247, %v1239
    %v1896 = vpack.c.b16 %v1248, %v1240
    %v1897 = vpack.c.b16 %v1249, %v1241
    %v1898 = vpack.c.b16 %v1250, %v1242
    %v1899 = vpack.c.b16 %v1251, %v1243
    %v1900 = vpack.c.b16 %v1252, %v1244
    %v1901 = vpack.c.b16 %v1261, %v1253
    %v1902 = vpack.c.b16 %v1262, %v1254
    %v1903 = vpack.c.b16 %v1263, %v1255
    %v1904 = vpack.c.b16 %v1264, %v1256
    %v1905 = vpack.c.b16 %v1265, %v1257
    %v1906 = vpack.c.b16 %v1266, %v1258
    %v1907 = vpack.c.b16 %v1267, %v1259
    %v1908 = vpack.c.b16 %v1268, %v1260
    %v1909 = vpack.c.b16 %v1277, %v1269
    %v1910 = vpack.c.b16 %v1278, %v1270
    %v1911 = vpack.c.b16 %v1279, %v1271
    %v1912 = vpack.c.b16 %v1280, %v1272
    %v1913 = vpack.c.b16 %v1281, %v1273
    %v1914 = vpack.c.b16 %v1282, %v1274
    %v1915 = vpack.c.b16 %v1283, %v1275
    %v1916 = vpack.c.b16 %v1284, %v1276
    %v1917 = vpack.c.b16 %v1293, %v1285
    %v1918 = vpack.c.b16 %v1294, %v1286
    %v1919 = vpack.c.b16 %v1295, %v1287
    %v1920 = vpack.c.b16 %v1296, %v1288
    %v1921 = vpack.c.b16 %v1297, %v1289
    %v1922 = vpack.c.b16 %v1298, %v1290
    %v1923 = vpack.c.b16 %v1299, %v1291
    %v1924 = vpack.c.b16 %v1300, %v1292
    %v1925 = vpack.c.b16 %v1309, %v1301
    %v1926 = vpack.c.b16 %v1310, %v1302
    %v1927 = vpack.c.b16 %v1311, %v1303
    %v1928 = vpack.c.b16 %v1312, %v1304
    %v1929 = vpack.c.b16 %v1313, %v1305
    %v1930 = vpack.c.b16 %v1314, %v1306
    %v1931 = vpack.c.b16 %v1315, %v1307
    %v1932 = vpack.c.b16 %v1316, %v1308
    %v1933 = vpack.c.b16 %v1325, %v1317
    %v1934 = vpack.c.b16 %v1326, %v1318
    %v1935 = vpack.c.b16 %v1327, %v1319
    %v1936 = vpack.c.b16 %v1328, %v1320
    %v1937 = vpack.c.b16 %v1329, %v1321
    %v1938 = vpack.c.b16 %v1330, %v1322
    %v1939 = vpack.c.b16 %v1331, %v1323
    %v1940 = vpack.c.b16 %v1332, %v1324
    %v1941 = vpack.c.b16 %v1341, %v1333
    %v1942 = vpack.c.b16 %v1342, %v1334
    %v1943 = vpack.c.b16 %v1343, %v1335
    %v1944 = vpack.c.b16 %v1344, %v1336
    %v1945 = vpack.c.b16 %v1345, %v1337
    %v1946 = vpack.c.b16 %v1346, %v1338
    %v1947 = vpack.c.b16 %v1347, %v1339
    %v1948 = vpack.c.b16 %v1348, %v1340
    %v1949 = vpack.c.b16 %v1357, %v1349
    %v1950 = vpack.c.b16 %v1358, %v1350
    %v1951 = vpack.c.b16 %v1359, %v1351
    %v1952 = vpack.c.b16 %v1360, %v1352
    %v1953 = vpack.c.b16 %v1361, %v1353
    %v1954 = vpack.c.b16 %v1362, %v1354
    %v1955 = vpack.c.b16 %v1363, %v1355
    %v1956 = vpack.c.b16 %v1364, %v1356
    %v1957 = vpack.c.b16 %v1373, %v1365
    %v1958 = vpack.c.b16 %v1374, %v1366
    %v1959 = vpack.c.b16 %v1375, %v1367
    %v1960 = vpack.c.b16 %v1376, %v1368
    %v1961 = vpack.c.b16 %v1377, %v1369
    %v1962 = vpack.c.b16 %v1378, %v1370
    %v1963 = vpack.c.b16 %v1379, %v1371
    %v1964 = vpack.c.b16 %v1380, %v1372
    %v1965 = vpack.c.b16 %v1389, %v1381
    %v1966 = vpack.c.b16 %v1390, %v1382
    %v1967 = vpack.c.b16 %v1391, %v1383
    %v1968 = vpack.c.b16 %v1392, %v1384
    %v1969 = vpack.c.b16 %v1393, %v1385
    %v1970 = vpack.c.b16 %v1394, %v1386
    %v1971 = vpack.c.b16 %v1395, %v1387
    %v1972 = vpack.c.b16 %v1396, %v1388
    %v1973 = vpack.c.b16 %v1405, %v1397
    %v1974 = vpack.c.b16 %v1406, %v1398
    %v1975 = vpack.c.b16 %v1407, %v1399
    %v1976 = vpack.c.b16 %v1408, %v1400
    %v1977 = vpack.c.b16 %v1409, %v1401
    %v1978 = vpack.c.b16 %v1410, %v1402
    %v1979 = vpack.c.b16 %v1411, %v1403
    %v1980 = vpack.c.b16 %v1412, %v1404
    %v1981 = vpack.c.b16 %v1421, %v1413
    %v1982 = vpack.c.b16 %v1422, %v1414
    %v1983 = vpack.c.b16 %v1423, %v1415
    %v1984 = vpack.c.b16 %v1424, %v1416
    %v1985 = vpack.c.b16 %v1425, %v1417
    %v1986 = vpack.c.b16 %v1426, %v1418
    %v1987 = vpack.c.b16 %v1427, %v1419
    %v1988 = vpack.c.b16 %v1428, %v1420
    %v1989 = vpack.c.b16 %v1437, %v1429
    %v1990 = vpack.c.b16 %v1438, %v1430
    %v1991 = vpack.c.b16 %v1439, %v1431
    %v1992 = vpack.c.b16 %v1440, %v1432
    %v1993 = vpack.c.b16 %v1441, %v1433
    %v1994 = vpack.c.b16 %v1442, %v1434
    %v1995 = vpack.c.b16 %v1443, %v1435
    %v1996 = vpack.c.b16 %v1444, %v1436
    %v1997 = vpack.c.b16 %v1453, %v1445
    %v1998 = vpack.c.b16 %v1454, %v1446
    %v1999 = vpack.c.b16 %v1455, %v1447
    %v2000 = vpack.c.b16 %v1456, %v1448
    %v2001 = vpack.c.b16 %v1457, %v1449
    %v2002 = vpack.c.b16 %v1458, %v1450
    %v2003 = vpack.c.b16 %v1459, %v1451
    %v2004 = vpack.c.b16 %v1460, %v1452
    %v2005 = vpack.c.b16 %v1469, %v1461
    %v2006 = vpack.c.b16 %v1470, %v1462
    %v2007 = vpack.c.b16 %v1471, %v1463
    %v2008 = vpack.c.b16 %v1472, %v1464
    %v2009 = vpack.c.b16 %v1473, %v1465
    %v2010 = vpack.c.b16 %v1474, %v1466
    %v2011 = vpack.c.b16 %v1475, %v1467
    %v2012 = vpack.c.b16 %v1476, %v1468
    %v2013 = vpack.c.b16 %v1485, %v1477
    %v2014 = vpack.c.b16 %v1486, %v1478
    %v2015 = vpack.c.b16 %v1487, %v1479
    %v2016 = vpack.c.b16 %v1488, %v1480
    %v2017 = vpack.c.b16 %v1489, %v1481
    %v2018 = vpack.c.b16 %v1490, %v1482
    %v2019 = vpack.c.b16 %v1491, %v1483
    %v2020 = vpack.c.b16 %v1492, %v1484
    %v2021 = vpack.c.b16 %v1501, %v1493
    %v2022 = vpack.c.b16 %v1502, %v1494
    %v2023 = vpack.c.b16 %v1503, %v1495
    %v2024 = vpack.c.b16 %v1504, %v1496
    %v2025 = vpack.c.b16 %v1505, %v1497
    %v2026 = vpack.c.b16 %v1506, %v1498
    %v2027 = vpack.c.b16 %v1507, %v1499
    %v2028 = vpack.c.b16 %v1508, %v1500
    %v2029 = vpack.c.b16 %v1517, %v1509
    %v2030 = vpack.c.b16 %v1518, %v1510
    %v2031 = vpack.c.b16 %v1519, %v1511
    %v2032 = vpack.c.b16 %v1520, %v1512
    %v2033 = vpack.c.b16 %v1521, %v1513
    %v2034 = vpack.c.b16 %v1522, %v1514
    %v2035 = vpack.c.b16 %v1523, %v1515
    %v2036 = vpack.c.b16 %v1524, %v1516
    %v2037 = vpack.c.b16 %v1533, %v1525
    %v2038 = vpack.c.b16 %v1534, %v1526
    %v2039 = vpack.c.b16 %v1535, %v1527
    %v2040 = vpack.c.b16 %v1536, %v1528
    %v2041 = vpack.c.b16 %v1537, %v1529
    %v2042 = vpack.c.b16 %v1538, %v1530
    %v2043 = vpack.c.b16 %v1539, %v1531
    %v2044 = vpack.c.b16 %v1540, %v1532
    %v2045 = vpack.c.b16 %v1549, %v1541
    %v2046 = vpack.c.b16 %v1550, %v1542
    %v2047 = vpack.c.b16 %v1551, %v1543
    %v2048 = vpack.c.b16 %v1552, %v1544
    %v2049 = vpack.c.b16 %v1553, %v1545
    %v2050 = vpack.c.b16 %v1554, %v1546
    %v2051 = vpack.c.b16 %v1555, %v1547
    %v2052 = vpack.c.b16 %v1556, %v1548
    %v2053 = vpack.c.b16 %v1565, %v1557
    %v2054 = vpack.c.b16 %v1566, %v1558
    %v2055 = vpack.c.b16 %v1567, %v1559
    %v2056 = vpack.c.b16 %v1568, %v1560
    %v2057 = vpack.c.b16 %v1569, %v1561
    %v2058 = vpack.c.b16 %v1570, %v1562
    %v2059 = vpack.c.b16 %v1571, %v1563
    %v2060 = vpack.c.b16 %v1572, %v1564
    %v2061 = vpack.c.b16 %v1581, %v1573
    %v2062 = vpack.c.b16 %v1582, %v1574
    %v2063 = vpack.c.b16 %v1583, %v1575
    %v2064 = vpack.c.b16 %v1584, %v1576
    %v2065 = vpack.c.b16 %v1585, %v1577
    %v2066 = vpack.c.b16 %v1586, %v1578
    %v2067 = vpack.c.b16 %v1587, %v1579
    %v2068 = vpack.c.b16 %v1588, %v1580
    %v2069 = vpack.c.b16 %v1597, %v1589
    %v2070 = vpack.c.b16 %v1598, %v1590
    %v2071 = vpack.c.b16 %v1599, %v1591
    %v2072 = vpack.c.b16 %v1600, %v1592
    %v2073 = vpack.c.b16 %v1601, %v1593
    %v2074 = vpack.c.b16 %v1602, %v1594
    %v2075 = vpack.c.b16 %v1603, %v1595
    %v2076 = vpack.c.b16 %v1604, %v1596
    %v2077 = vpack.c.b16 %v1613, %v1605
    %v2078 = vpack.c.b16 %v1614, %v1606
    %v2079 = vpack.c.b16 %v1615, %v1607
    %v2080 = vpack.c.b16 %v1616, %v1608
    %v2081 = vpack.c.b16 %v1617, %v1609
    %v2082 = vpack.c.b16 %v1618, %v1610
    %v2083 = vpack.c.b16 %v1619, %v1611
    %v2084 = vpack.c.b16 %v1620, %v1612
    %v2085 = vpack.c.b16 %v1629, %v1621
    %v2086 = vpack.c.b16 %v1630, %v1622
    %v2087 = vpack.c.b16 %v1631, %v1623
    %v2088 = vpack.c.b16 %v1632, %v1624
    %v2089 = vpack.c.b16 %v1633, %v1625
    %v2090 = vpack.c.b16 %v1634, %v1626
    %v2091 = vpack.c.b16 %v1635, %v1627
    %v2092 = vpack.c.b16 %v1636, %v1628
    %v2093 = vpack.c.b16 %v1645, %v1637
    %v2094 = vpack.c.b16 %v1646, %v1638
    %v2095 = vpack.c.b16 %v1647, %v1639
    %v2096 = vpack.c.b16 %v1648, %v1640
    %v2097 = vpack.c.b16 %v1649, %v1641
    %v2098 = vpack.c.b16 %v1650, %v1642
    %v2099 = vpack.c.b16 %v1651, %v1643
    %v2100 = vpack.c.b16 %v1652, %v1644
    %v2101 = vpack.c.b16 %v1661, %v1653
    %v2102 = vpack.c.b16 %v1662, %v1654
    %v2103 = vpack.c.b16 %v1663, %v1655
    %v2104 = vpack.c.b16 %v1664, %v1656
    %v2105 = vpack.c.b16 %v1665, %v1657
    %v2106 = vpack.c.b16 %v1666, %v1658
    %v2107 = vpack.c.b16 %v1667, %v1659
    %v2108 = vpack.c.b16 %v1668, %v1660
    %v2109 = vpack.c.b16 %v1677, %v1669
    %v2110 = vpack.c.b16 %v1678, %v1670
    %v2111 = vpack.c.b16 %v1679, %v1671
    %v2112 = vpack.c.b16 %v1680, %v1672
    %v2113 = vpack.c.b16 %v1681, %v1673
    %v2114 = vpack.c.b16 %v1682, %v1674
    %v2115 = vpack.c.b16 %v1683, %v1675
    %v2116 = vpack.c.b16 %v1684, %v1676
    %v2117 = vpack.c.b16 %v1693, %v1685
    %v2118 = vpack.c.b16 %v1694, %v1686
    %v2119 = vpack.c.b16 %v1695, %v1687
    %v2120 = vpack.c.b16 %v1696, %v1688
    %v2121 = vpack.c.b16 %v1697, %v1689
    %v2122 = vpack.c.b16 %v1698, %v1690
    %v2123 = vpack.c.b16 %v1699, %v1691
    %v2124 = vpack.c.b16 %v1700, %v1692
    %v2125 = vpack.c.b16 %v1709, %v1701
    %v2126 = vpack.c.b16 %v1710, %v1702
    %v2127 = vpack.c.b16 %v1711, %v1703
    %v2128 = vpack.c.b16 %v1712, %v1704
    %v2129 = vpack.c.b16 %v1713, %v1705
    %v2130 = vpack.c.b16 %v1714, %v1706
    %v2131 = vpack.c.b16 %v1715, %v1707
    %v2132 = vpack.c.b16 %v1716, %v1708
    %v2133 = vpack.c.b16 %v1725, %v1717
    %v2134 = vpack.c.b16 %v1726, %v1718
    %v2135 = vpack.c.b16 %v1727, %v1719
    %v2136 = vpack.c.b16 %v1728, %v1720
    %v2137 = vpack.c.b16 %v1729, %v1721
    %v2138 = vpack.c.b16 %v1730, %v1722
    %v2139 = vpack.c.b16 %v1731, %v1723
    %v2140 = vpack.c.b16 %v1732, %v1724
    %v2141 = vpack.c.b16 %v1741, %v1733
    %v2142 = vpack.c.b16 %v1742, %v1734
    %v2143 = vpack.c.b16 %v1743, %v1735
    %v2144 = vpack.c.b16 %v1744, %v1736
    %v2145 = vpack.c.b16 %v1745, %v1737
    %v2146 = vpack.c.b16 %v1746, %v1738
    %v2147 = vpack.c.b16 %v1747, %v1739
    %v2148 = vpack.c.b16 %v1748, %v1740
    %v2149 = vpack.c.b16 %v1757, %v1749
    %v2150 = vpack.c.b16 %v1758, %v1750
    %v2151 = vpack.c.b16 %v1759, %v1751
    %v2152 = vpack.c.b16 %v1760, %v1752
    %v2153 = vpack.c.b16 %v1761, %v1753
    %v2154 = vpack.c.b16 %v1762, %v1754
    %v2155 = vpack.c.b16 %v1763, %v1755
    %v2156 = vpack.c.b16 %v1764, %v1756
    %vm2549 = vcmask 130048
    %v2551 = vsel %vm2549, %v178, 0
    %2553 = vmatpush.bf16.msra.mxu0 %v1821
    %2554 = vmatpush.bf16.msra.mxu0 %v1813
    %2555 = vmatpush.bf16.msra.mxu0 %v1805
    %2556 = vmatpush.bf16.msra.mxu0 %v1797
    %2557 = vmatpush.bf16.msra.mxu0 %v1789
    %2558 = vmatpush.bf16.msra.mxu0 %v1781
    %2559 = vmatpush.bf16.msra.mxu0 %v1773
    %2560 = vmatpush.bf16.msra.mxu0 %v1765
    %2561 = vmatmul.bf16.gmra.mxu0 %v172
    %v2562 = vpop.f32.mrf.mxu0
    %v2563 = vadd.f32 %v573, %v2562
    %v2564 = vpop.f32.mrf.mxu0
    %2565 = vdwg.mxu0
    %2566 = vmatpush.bf16.msra.mxu0 %v1885
    %2567 = vmatpush.bf16.msra.mxu0 %v1877
    %2568 = vmatpush.bf16.msra.mxu0 %v1869
    %2569 = vmatpush.bf16.msra.mxu0 %v1861
    %2570 = vmatpush.bf16.msra.mxu0 %v1853
    %2571 = vmatpush.bf16.msra.mxu0 %v1845
    %2572 = vmatpush.bf16.msra.mxu0 %v1837
    %2573 = vmatpush.bf16.msra.mxu0 %v1829
    %2574 = vmatmul.bf16.gmra.mxu0 %v173
    %v2575 = vpop.f32.mrf.mxu0
    %v2576 = vadd.f32 %v2563, %v2575
    %v2577 = vpop.f32.mrf.mxu0
    %2578 = vdwg.mxu0
    %2579 = vmatpush.bf16.msra.mxu0 %v1949
    %2580 = vmatpush.bf16.msra.mxu0 %v1941
    %2581 = vmatpush.bf16.msra.mxu0 %v1933
    %2582 = vmatpush.bf16.msra.mxu0 %v1925
    %2583 = vmatpush.bf16.msra.mxu0 %v1917
    %2584 = vmatpush.bf16.msra.mxu0 %v1909
    %2585 = vmatpush.bf16.msra.mxu0 %v1901
    %2586 = vmatpush.bf16.msra.mxu0 %v1893
    %2587 = vmatmul.bf16.gmra.mxu0 %v174
    %v2588 = vpop.f32.mrf.mxu0
    %v2589 = vadd.f32 %v2576, %v2588
    %v2590 = vpop.f32.mrf.mxu0
    %2591 = vdwg.mxu0
    %2592 = vmatpush.bf16.msra.mxu0 %v2013
    %2593 = vmatpush.bf16.msra.mxu0 %v2005
    %2594 = vmatpush.bf16.msra.mxu0 %v1997
    %2595 = vmatpush.bf16.msra.mxu0 %v1989
    %2596 = vmatpush.bf16.msra.mxu0 %v1981
    %2597 = vmatpush.bf16.msra.mxu0 %v1973
    %2598 = vmatpush.bf16.msra.mxu0 %v1965
    %2599 = vmatpush.bf16.msra.mxu0 %v1957
    %2600 = vmatmul.bf16.gmra.mxu0 %v175
    %v2601 = vpop.f32.mrf.mxu0
    %v2602 = vadd.f32 %v2589, %v2601
    %v2603 = vpop.f32.mrf.mxu0
    %2604 = vdwg.mxu0
    %2605 = vmatpush.bf16.msra.mxu0 %v2077
    %2606 = vmatpush.bf16.msra.mxu0 %v2069
    %2607 = vmatpush.bf16.msra.mxu0 %v2061
    %2608 = vmatpush.bf16.msra.mxu0 %v2053
    %2609 = vmatpush.bf16.msra.mxu0 %v2045
    %2610 = vmatpush.bf16.msra.mxu0 %v2037
    %2611 = vmatpush.bf16.msra.mxu0 %v2029
    %2612 = vmatpush.bf16.msra.mxu0 %v2021
    %2613 = vmatmul.bf16.gmra.mxu0 %v176
    %v2614 = vpop.f32.mrf.mxu0
    %v2615 = vadd.f32 %v2602, %v2614
    %v2616 = vpop.f32.mrf.mxu0
    %2617 = vdwg.mxu0
    %2618 = vmatpush.bf16.msra.mxu0 %v2141
    %2619 = vmatpush.bf16.msra.mxu0 %v2133
    %2620 = vmatpush.bf16.msra.mxu0 %v2125
    %2621 = vmatpush.bf16.msra.mxu0 %v2117
    %2622 = vmatpush.bf16.msra.mxu0 %v2109
    %2623 = vmatpush.bf16.msra.mxu0 %v2101
    %2624 = vmatpush.bf16.msra.mxu0 %v2093
    %2625 = vmatpush.bf16.msra.mxu0 %v2085
    %2626 = vmatmul.bf16.gmra.mxu0 %v177
    %v2627 = vpop.f32.mrf.mxu0
    %v2628 = vadd.f32 %v2615, %v2627
    %v2629 = vpop.f32.mrf.mxu0
    %2630 = vdwg.mxu0
    %2631 = vmatpush.bf16.msra.mxu0 0
    %2632 = vmatpush.bf16.msra.mxu0 0
    %2633 = vmatpush.bf16.msra.mxu0 0
    %2634 = vmatpush.bf16.msra.mxu0 0
    %2635 = vmatpush.bf16.msra.mxu0 0
    %2636 = vmatpush.bf16.msra.mxu0 0
    %2637 = vmatpush.bf16.msra.mxu0 0
    %2638 = vmatpush.bf16.msra.mxu0 %v2149
    %2639 = vmatmul.bf16.gmra.mxu0 %v2551
    %v2640 = vpop.f32.mrf.mxu0
    %v2641 = vadd.f32 %v2628, %v2640
    %v2642 = vpop.f32.mrf.mxu0
    %2643 = vdwg.mxu0
    %2644 = vmatpush.bf16.msra.mxu0 %v1822
    %2645 = vmatpush.bf16.msra.mxu0 %v1814
    %2646 = vmatpush.bf16.msra.mxu0 %v1806
    %2647 = vmatpush.bf16.msra.mxu0 %v1798
    %2648 = vmatpush.bf16.msra.mxu0 %v1790
    %2649 = vmatpush.bf16.msra.mxu0 %v1782
    %2650 = vmatpush.bf16.msra.mxu0 %v1774
    %2651 = vmatpush.bf16.msra.mxu0 %v1766
    %2652 = vmatmul.bf16.gmra.mxu0 %v172
    %v2653 = vpop.f32.mrf.mxu0
    %v2654 = vadd.f32 %v574, %v2653
    %v2655 = vpop.f32.mrf.mxu0
    %2656 = vdwg.mxu0
    %2657 = vmatpush.bf16.msra.mxu0 %v1886
    %2658 = vmatpush.bf16.msra.mxu0 %v1878
    %2659 = vmatpush.bf16.msra.mxu0 %v1870
    %2660 = vmatpush.bf16.msra.mxu0 %v1862
    %2661 = vmatpush.bf16.msra.mxu0 %v1854
    %2662 = vmatpush.bf16.msra.mxu0 %v1846
    %2663 = vmatpush.bf16.msra.mxu0 %v1838
    %2664 = vmatpush.bf16.msra.mxu0 %v1830
    %2665 = vmatmul.bf16.gmra.mxu0 %v173
    %v2666 = vpop.f32.mrf.mxu0
    %v2667 = vadd.f32 %v2654, %v2666
    %v2668 = vpop.f32.mrf.mxu0
    %2669 = vdwg.mxu0
    %2670 = vmatpush.bf16.msra.mxu0 %v1950
    %2671 = vmatpush.bf16.msra.mxu0 %v1942
    %2672 = vmatpush.bf16.msra.mxu0 %v1934
    %2673 = vmatpush.bf16.msra.mxu0 %v1926
    %2674 = vmatpush.bf16.msra.mxu0 %v1918
    %2675 = vmatpush.bf16.msra.mxu0 %v1910
    %2676 = vmatpush.bf16.msra.mxu0 %v1902
    %2677 = vmatpush.bf16.msra.mxu0 %v1894
    %2678 = vmatmul.bf16.gmra.mxu0 %v174
    %v2679 = vpop.f32.mrf.mxu0
    %v2680 = vadd.f32 %v2667, %v2679
    %v2681 = vpop.f32.mrf.mxu0
    %2682 = vdwg.mxu0
    %2683 = vmatpush.bf16.msra.mxu0 %v2014
    %2684 = vmatpush.bf16.msra.mxu0 %v2006
    %2685 = vmatpush.bf16.msra.mxu0 %v1998
    %2686 = vmatpush.bf16.msra.mxu0 %v1990
    %2687 = vmatpush.bf16.msra.mxu0 %v1982
    %2688 = vmatpush.bf16.msra.mxu0 %v1974
    %2689 = vmatpush.bf16.msra.mxu0 %v1966
    %2690 = vmatpush.bf16.msra.mxu0 %v1958
    %2691 = vmatmul.bf16.gmra.mxu0 %v175
    %v2692 = vpop.f32.mrf.mxu0
    %v2693 = vadd.f32 %v2680, %v2692
    %v2694 = vpop.f32.mrf.mxu0
    %2695 = vdwg.mxu0
    %2696 = vmatpush.bf16.msra.mxu0 %v2078
    %2697 = vmatpush.bf16.msra.mxu0 %v2070
    %2698 = vmatpush.bf16.msra.mxu0 %v2062
    %2699 = vmatpush.bf16.msra.mxu0 %v2054
    %2700 = vmatpush.bf16.msra.mxu0 %v2046
    %2701 = vmatpush.bf16.msra.mxu0 %v2038
    %2702 = vmatpush.bf16.msra.mxu0 %v2030
    %2703 = vmatpush.bf16.msra.mxu0 %v2022
    %2704 = vmatmul.bf16.gmra.mxu0 %v176
    %v2705 = vpop.f32.mrf.mxu0
    %v2706 = vadd.f32 %v2693, %v2705
    %v2707 = vpop.f32.mrf.mxu0
    %2708 = vdwg.mxu0
    %2709 = vmatpush.bf16.msra.mxu0 %v2142
    %2710 = vmatpush.bf16.msra.mxu0 %v2134
    %2711 = vmatpush.bf16.msra.mxu0 %v2126
    %2712 = vmatpush.bf16.msra.mxu0 %v2118
    %2713 = vmatpush.bf16.msra.mxu0 %v2110
    %2714 = vmatpush.bf16.msra.mxu0 %v2102
    %2715 = vmatpush.bf16.msra.mxu0 %v2094
    %2716 = vmatpush.bf16.msra.mxu0 %v2086
    %2717 = vmatmul.bf16.gmra.mxu0 %v177
    %v2718 = vpop.f32.mrf.mxu0
    %v2719 = vadd.f32 %v2706, %v2718
    %v2720 = vpop.f32.mrf.mxu0
    %2721 = vdwg.mxu0
    %2722 = vmatpush.bf16.msra.mxu0 0
    %2723 = vmatpush.bf16.msra.mxu0 0
    %2724 = vmatpush.bf16.msra.mxu0 0
    %2725 = vmatpush.bf16.msra.mxu0 0
    %2726 = vmatpush.bf16.msra.mxu0 0
    %2727 = vmatpush.bf16.msra.mxu0 0
    %2728 = vmatpush.bf16.msra.mxu0 0
    %2729 = vmatpush.bf16.msra.mxu0 %v2150
    %2730 = vmatmul.bf16.gmra.mxu0 %v2551
    %v2731 = vpop.f32.mrf.mxu0
    %v2732 = vadd.f32 %v2719, %v2731
    %v2733 = vpop.f32.mrf.mxu0
    %2734 = vdwg.mxu0
    %2735 = vmatpush.bf16.msra.mxu0 %v1823
    %2736 = vmatpush.bf16.msra.mxu0 %v1815
    %2737 = vmatpush.bf16.msra.mxu0 %v1807
    %2738 = vmatpush.bf16.msra.mxu0 %v1799
    %2739 = vmatpush.bf16.msra.mxu0 %v1791
    %2740 = vmatpush.bf16.msra.mxu0 %v1783
    %2741 = vmatpush.bf16.msra.mxu0 %v1775
    %2742 = vmatpush.bf16.msra.mxu0 %v1767
    %2743 = vmatmul.bf16.gmra.mxu0 %v172
    %v2744 = vpop.f32.mrf.mxu0
    %v2745 = vadd.f32 %v575, %v2744
    %v2746 = vpop.f32.mrf.mxu0
    %2747 = vdwg.mxu0
    %2748 = vmatpush.bf16.msra.mxu0 %v1887
    %2749 = vmatpush.bf16.msra.mxu0 %v1879
    %2750 = vmatpush.bf16.msra.mxu0 %v1871
    %2751 = vmatpush.bf16.msra.mxu0 %v1863
    %2752 = vmatpush.bf16.msra.mxu0 %v1855
    %2753 = vmatpush.bf16.msra.mxu0 %v1847
    %2754 = vmatpush.bf16.msra.mxu0 %v1839
    %2755 = vmatpush.bf16.msra.mxu0 %v1831
    %2756 = vmatmul.bf16.gmra.mxu0 %v173
    %v2757 = vpop.f32.mrf.mxu0
    %v2758 = vadd.f32 %v2745, %v2757
    %v2759 = vpop.f32.mrf.mxu0
    %2760 = vdwg.mxu0
    %2761 = vmatpush.bf16.msra.mxu0 %v1951
    %2762 = vmatpush.bf16.msra.mxu0 %v1943
    %2763 = vmatpush.bf16.msra.mxu0 %v1935
    %2764 = vmatpush.bf16.msra.mxu0 %v1927
    %2765 = vmatpush.bf16.msra.mxu0 %v1919
    %2766 = vmatpush.bf16.msra.mxu0 %v1911
    %2767 = vmatpush.bf16.msra.mxu0 %v1903
    %2768 = vmatpush.bf16.msra.mxu0 %v1895
    %2769 = vmatmul.bf16.gmra.mxu0 %v174
    %v2770 = vpop.f32.mrf.mxu0
    %v2771 = vadd.f32 %v2758, %v2770
    %v2772 = vpop.f32.mrf.mxu0
    %2773 = vdwg.mxu0
    %2774 = vmatpush.bf16.msra.mxu0 %v2015
    %2775 = vmatpush.bf16.msra.mxu0 %v2007
    %2776 = vmatpush.bf16.msra.mxu0 %v1999
    %2777 = vmatpush.bf16.msra.mxu0 %v1991
    %2778 = vmatpush.bf16.msra.mxu0 %v1983
    %2779 = vmatpush.bf16.msra.mxu0 %v1975
    %2780 = vmatpush.bf16.msra.mxu0 %v1967
    %2781 = vmatpush.bf16.msra.mxu0 %v1959
    %2782 = vmatmul.bf16.gmra.mxu0 %v175
    %v2783 = vpop.f32.mrf.mxu0
    %v2784 = vadd.f32 %v2771, %v2783
    %v2785 = vpop.f32.mrf.mxu0
    %2786 = vdwg.mxu0
    %2787 = vmatpush.bf16.msra.mxu0 %v2079
    %2788 = vmatpush.bf16.msra.mxu0 %v2071
    %2789 = vmatpush.bf16.msra.mxu0 %v2063
    %2790 = vmatpush.bf16.msra.mxu0 %v2055
    %2791 = vmatpush.bf16.msra.mxu0 %v2047
    %2792 = vmatpush.bf16.msra.mxu0 %v2039
    %2793 = vmatpush.bf16.msra.mxu0 %v2031
    %2794 = vmatpush.bf16.msra.mxu0 %v2023
    %2795 = vmatmul.bf16.gmra.mxu0 %v176
    %v2796 = vpop.f32.mrf.mxu0
    %v2797 = vadd.f32 %v2784, %v2796
    %v2798 = vpop.f32.mrf.mxu0
    %2799 = vdwg.mxu0
    %2800 = vmatpush.bf16.msra.mxu0 %v2143
    %2801 = vmatpush.bf16.msra.mxu0 %v2135
    %2802 = vmatpush.bf16.msra.mxu0 %v2127
    %2803 = vmatpush.bf16.msra.mxu0 %v2119
    %2804 = vmatpush.bf16.msra.mxu0 %v2111
    %2805 = vmatpush.bf16.msra.mxu0 %v2103
    %2806 = vmatpush.bf16.msra.mxu0 %v2095
    %2807 = vmatpush.bf16.msra.mxu0 %v2087
    %2808 = vmatmul.bf16.gmra.mxu0 %v177
    %v2809 = vpop.f32.mrf.mxu0
    %v2810 = vadd.f32 %v2797, %v2809
    %v2811 = vpop.f32.mrf.mxu0
    %2812 = vdwg.mxu0
    %2813 = vmatpush.bf16.msra.mxu0 0
    %2814 = vmatpush.bf16.msra.mxu0 0
    %2815 = vmatpush.bf16.msra.mxu0 0
    %2816 = vmatpush.bf16.msra.mxu0 0
    %2817 = vmatpush.bf16.msra.mxu0 0
    %2818 = vmatpush.bf16.msra.mxu0 0
    %2819 = vmatpush.bf16.msra.mxu0 0
    %2820 = vmatpush.bf16.msra.mxu0 %v2151
    %2821 = vmatmul.bf16.gmra.mxu0 %v2551
    %v2822 = vpop.f32.mrf.mxu0
    %v2823 = vadd.f32 %v2810, %v2822
    %v2824 = vpop.f32.mrf.mxu0
    %2825 = vdwg.mxu0
    %2826 = vmatpush.bf16.msra.mxu0 %v1824
    %2827 = vmatpush.bf16.msra.mxu0 %v1816
    %2828 = vmatpush.bf16.msra.mxu0 %v1808
    %2829 = vmatpush.bf16.msra.mxu0 %v1800
    %2830 = vmatpush.bf16.msra.mxu0 %v1792
    %2831 = vmatpush.bf16.msra.mxu0 %v1784
    %2832 = vmatpush.bf16.msra.mxu0 %v1776
    %2833 = vmatpush.bf16.msra.mxu0 %v1768
    %2834 = vmatmul.bf16.gmra.mxu0 %v172
    %v2835 = vpop.f32.mrf.mxu0
    %v2836 = vadd.f32 %v576, %v2835
    %v2837 = vpop.f32.mrf.mxu0
    %2838 = vdwg.mxu0
    %2839 = vmatpush.bf16.msra.mxu0 %v1888
    %2840 = vmatpush.bf16.msra.mxu0 %v1880
    %2841 = vmatpush.bf16.msra.mxu0 %v1872
    %2842 = vmatpush.bf16.msra.mxu0 %v1864
    %2843 = vmatpush.bf16.msra.mxu0 %v1856
    %2844 = vmatpush.bf16.msra.mxu0 %v1848
    %2845 = vmatpush.bf16.msra.mxu0 %v1840
    %2846 = vmatpush.bf16.msra.mxu0 %v1832
    %2847 = vmatmul.bf16.gmra.mxu0 %v173
    %v2848 = vpop.f32.mrf.mxu0
    %v2849 = vadd.f32 %v2836, %v2848
    %v2850 = vpop.f32.mrf.mxu0
    %2851 = vdwg.mxu0
    %2852 = vmatpush.bf16.msra.mxu0 %v1952
    %2853 = vmatpush.bf16.msra.mxu0 %v1944
    %2854 = vmatpush.bf16.msra.mxu0 %v1936
    %2855 = vmatpush.bf16.msra.mxu0 %v1928
    %2856 = vmatpush.bf16.msra.mxu0 %v1920
    %2857 = vmatpush.bf16.msra.mxu0 %v1912
    %2858 = vmatpush.bf16.msra.mxu0 %v1904
    %2859 = vmatpush.bf16.msra.mxu0 %v1896
    %2860 = vmatmul.bf16.gmra.mxu0 %v174
    %v2861 = vpop.f32.mrf.mxu0
    %v2862 = vadd.f32 %v2849, %v2861
    %v2863 = vpop.f32.mrf.mxu0
    %2864 = vdwg.mxu0
    %2865 = vmatpush.bf16.msra.mxu0 %v2016
    %2866 = vmatpush.bf16.msra.mxu0 %v2008
    %2867 = vmatpush.bf16.msra.mxu0 %v2000
    %2868 = vmatpush.bf16.msra.mxu0 %v1992
    %2869 = vmatpush.bf16.msra.mxu0 %v1984
    %2870 = vmatpush.bf16.msra.mxu0 %v1976
    %2871 = vmatpush.bf16.msra.mxu0 %v1968
    %2872 = vmatpush.bf16.msra.mxu0 %v1960
    %2873 = vmatmul.bf16.gmra.mxu0 %v175
    %v2874 = vpop.f32.mrf.mxu0
    %v2875 = vadd.f32 %v2862, %v2874
    %v2876 = vpop.f32.mrf.mxu0
    %2877 = vdwg.mxu0
    %2878 = vmatpush.bf16.msra.mxu0 %v2080
    %2879 = vmatpush.bf16.msra.mxu0 %v2072
    %2880 = vmatpush.bf16.msra.mxu0 %v2064
    %2881 = vmatpush.bf16.msra.mxu0 %v2056
    %2882 = vmatpush.bf16.msra.mxu0 %v2048
    %2883 = vmatpush.bf16.msra.mxu0 %v2040
    %2884 = vmatpush.bf16.msra.mxu0 %v2032
    %2885 = vmatpush.bf16.msra.mxu0 %v2024
    %2886 = vmatmul.bf16.gmra.mxu0 %v176
    %v2887 = vpop.f32.mrf.mxu0
    %v2888 = vadd.f32 %v2875, %v2887
    %v2889 = vpop.f32.mrf.mxu0
    %2890 = vdwg.mxu0
    %2891 = vmatpush.bf16.msra.mxu0 %v2144
    %2892 = vmatpush.bf16.msra.mxu0 %v2136
    %2893 = vmatpush.bf16.msra.mxu0 %v2128
    %2894 = vmatpush.bf16.msra.mxu0 %v2120
    %2895 = vmatpush.bf16.msra.mxu0 %v2112
    %2896 = vmatpush.bf16.msra.mxu0 %v2104
    %2897 = vmatpush.bf16.msra.mxu0 %v2096
    %2898 = vmatpush.bf16.msra.mxu0 %v2088
    %2899 = vmatmul.bf16.gmra.mxu0 %v177
    %v2900 = vpop.f32.mrf.mxu0
    %v2901 = vadd.f32 %v2888, %v2900
    %v2902 = vpop.f32.mrf.mxu0
    %2903 = vdwg.mxu0
    %2904 = vmatpush.bf16.msra.mxu0 0
    %2905 = vmatpush.bf16.msra.mxu0 0
    %2906 = vmatpush.bf16.msra.mxu0 0
    %2907 = vmatpush.bf16.msra.mxu0 0
    %2908 = vmatpush.bf16.msra.mxu0 0
    %2909 = vmatpush.bf16.msra.mxu0 0
    %2910 = vmatpush.bf16.msra.mxu0 0
    %2911 = vmatpush.bf16.msra.mxu0 %v2152
    %2912 = vmatmul.bf16.gmra.mxu0 %v2551
    %v2913 = vpop.f32.mrf.mxu0
    %v2914 = vadd.f32 %v2901, %v2913
    %v2915 = vpop.f32.mrf.mxu0
    %2916 = vdwg.mxu0
    %2917 = vmatpush.bf16.msra.mxu0 %v1825
    %2918 = vmatpush.bf16.msra.mxu0 %v1817
    %2919 = vmatpush.bf16.msra.mxu0 %v1809
    %2920 = vmatpush.bf16.msra.mxu0 %v1801
    %2921 = vmatpush.bf16.msra.mxu0 %v1793
    %2922 = vmatpush.bf16.msra.mxu0 %v1785
    %2923 = vmatpush.bf16.msra.mxu0 %v1777
    %2924 = vmatpush.bf16.msra.mxu0 %v1769
    %2925 = vmatmul.bf16.gmra.mxu0 %v172
    %v2926 = vpop.f32.mrf.mxu0
    %v2927 = vadd.f32 %v577, %v2926
    %v2928 = vpop.f32.mrf.mxu0
    %2929 = vdwg.mxu0
    %2930 = vmatpush.bf16.msra.mxu0 %v1889
    %2931 = vmatpush.bf16.msra.mxu0 %v1881
    %2932 = vmatpush.bf16.msra.mxu0 %v1873
    %2933 = vmatpush.bf16.msra.mxu0 %v1865
    %2934 = vmatpush.bf16.msra.mxu0 %v1857
    %2935 = vmatpush.bf16.msra.mxu0 %v1849
    %2936 = vmatpush.bf16.msra.mxu0 %v1841
    %2937 = vmatpush.bf16.msra.mxu0 %v1833
    %2938 = vmatmul.bf16.gmra.mxu0 %v173
    %v2939 = vpop.f32.mrf.mxu0
    %v2940 = vadd.f32 %v2927, %v2939
    %v2941 = vpop.f32.mrf.mxu0
    %2942 = vdwg.mxu0
    %2943 = vmatpush.bf16.msra.mxu0 %v1953
    %2944 = vmatpush.bf16.msra.mxu0 %v1945
    %2945 = vmatpush.bf16.msra.mxu0 %v1937
    %2946 = vmatpush.bf16.msra.mxu0 %v1929
    %2947 = vmatpush.bf16.msra.mxu0 %v1921
    %2948 = vmatpush.bf16.msra.mxu0 %v1913
    %2949 = vmatpush.bf16.msra.mxu0 %v1905
    %2950 = vmatpush.bf16.msra.mxu0 %v1897
    %2951 = vmatmul.bf16.gmra.mxu0 %v174
    %v2952 = vpop.f32.mrf.mxu0
    %v2953 = vadd.f32 %v2940, %v2952
    %v2954 = vpop.f32.mrf.mxu0
    %2955 = vdwg.mxu0
    %2956 = vmatpush.bf16.msra.mxu0 %v2017
    %2957 = vmatpush.bf16.msra.mxu0 %v2009
    %2958 = vmatpush.bf16.msra.mxu0 %v2001
    %2959 = vmatpush.bf16.msra.mxu0 %v1993
    %2960 = vmatpush.bf16.msra.mxu0 %v1985
    %2961 = vmatpush.bf16.msra.mxu0 %v1977
    %2962 = vmatpush.bf16.msra.mxu0 %v1969
    %2963 = vmatpush.bf16.msra.mxu0 %v1961
    %2964 = vmatmul.bf16.gmra.mxu0 %v175
    %v2965 = vpop.f32.mrf.mxu0
    %v2966 = vadd.f32 %v2953, %v2965
    %v2967 = vpop.f32.mrf.mxu0
    %2968 = vdwg.mxu0
    %2969 = vmatpush.bf16.msra.mxu0 %v2081
    %2970 = vmatpush.bf16.msra.mxu0 %v2073
    %2971 = vmatpush.bf16.msra.mxu0 %v2065
    %2972 = vmatpush.bf16.msra.mxu0 %v2057
    %2973 = vmatpush.bf16.msra.mxu0 %v2049
    %2974 = vmatpush.bf16.msra.mxu0 %v2041
    %2975 = vmatpush.bf16.msra.mxu0 %v2033
    %2976 = vmatpush.bf16.msra.mxu0 %v2025
    %2977 = vmatmul.bf16.gmra.mxu0 %v176
    %v2978 = vpop.f32.mrf.mxu0
    %v2979 = vadd.f32 %v2966, %v2978
    %v2980 = vpop.f32.mrf.mxu0
    %2981 = vdwg.mxu0
    %2982 = vmatpush.bf16.msra.mxu0 %v2145
    %2983 = vmatpush.bf16.msra.mxu0 %v2137
    %2984 = vmatpush.bf16.msra.mxu0 %v2129
    %2985 = vmatpush.bf16.msra.mxu0 %v2121
    %2986 = vmatpush.bf16.msra.mxu0 %v2113
    %2987 = vmatpush.bf16.msra.mxu0 %v2105
    %2988 = vmatpush.bf16.msra.mxu0 %v2097
    %2989 = vmatpush.bf16.msra.mxu0 %v2089
    %2990 = vmatmul.bf16.gmra.mxu0 %v177
    %v2991 = vpop.f32.mrf.mxu0
    %v2992 = vadd.f32 %v2979, %v2991
    %v2993 = vpop.f32.mrf.mxu0
    %2994 = vdwg.mxu0
    %2995 = vmatpush.bf16.msra.mxu0 0
    %2996 = vmatpush.bf16.msra.mxu0 0
    %2997 = vmatpush.bf16.msra.mxu0 0
    %2998 = vmatpush.bf16.msra.mxu0 0
    %2999 = vmatpush.bf16.msra.mxu0 0
    %3000 = vmatpush.bf16.msra.mxu0 0
    %3001 = vmatpush.bf16.msra.mxu0 0
    %3002 = vmatpush.bf16.msra.mxu0 %v2153
    %3003 = vmatmul.bf16.gmra.mxu0 %v2551
    %v3004 = vpop.f32.mrf.mxu0
    %v3005 = vadd.f32 %v2992, %v3004
    %v3006 = vpop.f32.mrf.mxu0
    %3007 = vdwg.mxu0
    %3008 = vmatpush.bf16.msra.mxu0 %v1826
    %3009 = vmatpush.bf16.msra.mxu0 %v1818
    %3010 = vmatpush.bf16.msra.mxu0 %v1810
    %3011 = vmatpush.bf16.msra.mxu0 %v1802
    %3012 = vmatpush.bf16.msra.mxu0 %v1794
    %3013 = vmatpush.bf16.msra.mxu0 %v1786
    %3014 = vmatpush.bf16.msra.mxu0 %v1778
    %3015 = vmatpush.bf16.msra.mxu0 %v1770
    %3016 = vmatmul.bf16.gmra.mxu0 %v172
    %v3017 = vpop.f32.mrf.mxu0
    %v3018 = vadd.f32 %v578, %v3017
    %v3019 = vpop.f32.mrf.mxu0
    %3020 = vdwg.mxu0
    %3021 = vmatpush.bf16.msra.mxu0 %v1890
    %3022 = vmatpush.bf16.msra.mxu0 %v1882
    %3023 = vmatpush.bf16.msra.mxu0 %v1874
    %3024 = vmatpush.bf16.msra.mxu0 %v1866
    %3025 = vmatpush.bf16.msra.mxu0 %v1858
    %3026 = vmatpush.bf16.msra.mxu0 %v1850
    %3027 = vmatpush.bf16.msra.mxu0 %v1842
    %3028 = vmatpush.bf16.msra.mxu0 %v1834
    %3029 = vmatmul.bf16.gmra.mxu0 %v173
    %v3030 = vpop.f32.mrf.mxu0
    %v3031 = vadd.f32 %v3018, %v3030
    %v3032 = vpop.f32.mrf.mxu0
    %3033 = vdwg.mxu0
    %3034 = vmatpush.bf16.msra.mxu0 %v1954
    %3035 = vmatpush.bf16.msra.mxu0 %v1946
    %3036 = vmatpush.bf16.msra.mxu0 %v1938
    %3037 = vmatpush.bf16.msra.mxu0 %v1930
    %3038 = vmatpush.bf16.msra.mxu0 %v1922
    %3039 = vmatpush.bf16.msra.mxu0 %v1914
    %3040 = vmatpush.bf16.msra.mxu0 %v1906
    %3041 = vmatpush.bf16.msra.mxu0 %v1898
    %3042 = vmatmul.bf16.gmra.mxu0 %v174
    %v3043 = vpop.f32.mrf.mxu0
    %v3044 = vadd.f32 %v3031, %v3043
    %v3045 = vpop.f32.mrf.mxu0
    %3046 = vdwg.mxu0
    %3047 = vmatpush.bf16.msra.mxu0 %v2018
    %3048 = vmatpush.bf16.msra.mxu0 %v2010
    %3049 = vmatpush.bf16.msra.mxu0 %v2002
    %3050 = vmatpush.bf16.msra.mxu0 %v1994
    %3051 = vmatpush.bf16.msra.mxu0 %v1986
    %3052 = vmatpush.bf16.msra.mxu0 %v1978
    %3053 = vmatpush.bf16.msra.mxu0 %v1970
    %3054 = vmatpush.bf16.msra.mxu0 %v1962
    %3055 = vmatmul.bf16.gmra.mxu0 %v175
    %v3056 = vpop.f32.mrf.mxu0
    %v3057 = vadd.f32 %v3044, %v3056
    %v3058 = vpop.f32.mrf.mxu0
    %3059 = vdwg.mxu0
    %3060 = vmatpush.bf16.msra.mxu0 %v2082
    %3061 = vmatpush.bf16.msra.mxu0 %v2074
    %3062 = vmatpush.bf16.msra.mxu0 %v2066
    %3063 = vmatpush.bf16.msra.mxu0 %v2058
    %3064 = vmatpush.bf16.msra.mxu0 %v2050
    %3065 = vmatpush.bf16.msra.mxu0 %v2042
    %3066 = vmatpush.bf16.msra.mxu0 %v2034
    %3067 = vmatpush.bf16.msra.mxu0 %v2026
    %3068 = vmatmul.bf16.gmra.mxu0 %v176
    %v3069 = vpop.f32.mrf.mxu0
    %v3070 = vadd.f32 %v3057, %v3069
    %v3071 = vpop.f32.mrf.mxu0
    %3072 = vdwg.mxu0
    %3073 = vmatpush.bf16.msra.mxu0 %v2146
    %3074 = vmatpush.bf16.msra.mxu0 %v2138
    %3075 = vmatpush.bf16.msra.mxu0 %v2130
    %3076 = vmatpush.bf16.msra.mxu0 %v2122
    %3077 = vmatpush.bf16.msra.mxu0 %v2114
    %3078 = vmatpush.bf16.msra.mxu0 %v2106
    %3079 = vmatpush.bf16.msra.mxu0 %v2098
    %3080 = vmatpush.bf16.msra.mxu0 %v2090
    %3081 = vmatmul.bf16.gmra.mxu0 %v177
    %v3082 = vpop.f32.mrf.mxu0
    %v3083 = vadd.f32 %v3070, %v3082
    %v3084 = vpop.f32.mrf.mxu0
    %3085 = vdwg.mxu0
    %3086 = vmatpush.bf16.msra.mxu0 0
    %3087 = vmatpush.bf16.msra.mxu0 0
    %3088 = vmatpush.bf16.msra.mxu0 0
    %3089 = vmatpush.bf16.msra.mxu0 0
    %3090 = vmatpush.bf16.msra.mxu0 0
    %3091 = vmatpush.bf16.msra.mxu0 0
    %3092 = vmatpush.bf16.msra.mxu0 0
    %3093 = vmatpush.bf16.msra.mxu0 %v2154
    %3094 = vmatmul.bf16.gmra.mxu0 %v2551
    %v3095 = vpop.f32.mrf.mxu0
    %v3096 = vadd.f32 %v3083, %v3095
    %v3097 = vpop.f32.mrf.mxu0
    %3098 = vdwg.mxu0
    %3099 = vmatpush.bf16.msra.mxu0 %v1827
    %3100 = vmatpush.bf16.msra.mxu0 %v1819
    %3101 = vmatpush.bf16.msra.mxu0 %v1811
    %3102 = vmatpush.bf16.msra.mxu0 %v1803
    %3103 = vmatpush.bf16.msra.mxu0 %v1795
    %3104 = vmatpush.bf16.msra.mxu0 %v1787
    %3105 = vmatpush.bf16.msra.mxu0 %v1779
    %3106 = vmatpush.bf16.msra.mxu0 %v1771
    %3107 = vmatmul.bf16.gmra.mxu0 %v172
    %v3108 = vpop.f32.mrf.mxu0
    %v3109 = vadd.f32 %v579, %v3108
    %v3110 = vpop.f32.mrf.mxu0
    %3111 = vdwg.mxu0
    %3112 = vmatpush.bf16.msra.mxu0 %v1891
    %3113 = vmatpush.bf16.msra.mxu0 %v1883
    %3114 = vmatpush.bf16.msra.mxu0 %v1875
    %3115 = vmatpush.bf16.msra.mxu0 %v1867
    %3116 = vmatpush.bf16.msra.mxu0 %v1859
    %3117 = vmatpush.bf16.msra.mxu0 %v1851
    %3118 = vmatpush.bf16.msra.mxu0 %v1843
    %3119 = vmatpush.bf16.msra.mxu0 %v1835
    %3120 = vmatmul.bf16.gmra.mxu0 %v173
    %v3121 = vpop.f32.mrf.mxu0
    %v3122 = vadd.f32 %v3109, %v3121
    %v3123 = vpop.f32.mrf.mxu0
    %3124 = vdwg.mxu0
    %3125 = vmatpush.bf16.msra.mxu0 %v1955
    %3126 = vmatpush.bf16.msra.mxu0 %v1947
    %3127 = vmatpush.bf16.msra.mxu0 %v1939
    %3128 = vmatpush.bf16.msra.mxu0 %v1931
    %3129 = vmatpush.bf16.msra.mxu0 %v1923
    %3130 = vmatpush.bf16.msra.mxu0 %v1915
    %3131 = vmatpush.bf16.msra.mxu0 %v1907
    %3132 = vmatpush.bf16.msra.mxu0 %v1899
    %3133 = vmatmul.bf16.gmra.mxu0 %v174
    %v3134 = vpop.f32.mrf.mxu0
    %v3135 = vadd.f32 %v3122, %v3134
    %v3136 = vpop.f32.mrf.mxu0
    %3137 = vdwg.mxu0
    %3138 = vmatpush.bf16.msra.mxu0 %v2019
    %3139 = vmatpush.bf16.msra.mxu0 %v2011
    %3140 = vmatpush.bf16.msra.mxu0 %v2003
    %3141 = vmatpush.bf16.msra.mxu0 %v1995
    %3142 = vmatpush.bf16.msra.mxu0 %v1987
    %3143 = vmatpush.bf16.msra.mxu0 %v1979
    %3144 = vmatpush.bf16.msra.mxu0 %v1971
    %3145 = vmatpush.bf16.msra.mxu0 %v1963
    %3146 = vmatmul.bf16.gmra.mxu0 %v175
    %v3147 = vpop.f32.mrf.mxu0
    %v3148 = vadd.f32 %v3135, %v3147
    %v3149 = vpop.f32.mrf.mxu0
    %3150 = vdwg.mxu0
    %3151 = vmatpush.bf16.msra.mxu0 %v2083
    %3152 = vmatpush.bf16.msra.mxu0 %v2075
    %3153 = vmatpush.bf16.msra.mxu0 %v2067
    %3154 = vmatpush.bf16.msra.mxu0 %v2059
    %3155 = vmatpush.bf16.msra.mxu0 %v2051
    %3156 = vmatpush.bf16.msra.mxu0 %v2043
    %3157 = vmatpush.bf16.msra.mxu0 %v2035
    %3158 = vmatpush.bf16.msra.mxu0 %v2027
    %3159 = vmatmul.bf16.gmra.mxu0 %v176
    %v3160 = vpop.f32.mrf.mxu0
    %v3161 = vadd.f32 %v3148, %v3160
    %v3162 = vpop.f32.mrf.mxu0
    %3163 = vdwg.mxu0
    %3164 = vmatpush.bf16.msra.mxu0 %v2147
    %3165 = vmatpush.bf16.msra.mxu0 %v2139
    %3166 = vmatpush.bf16.msra.mxu0 %v2131
    %3167 = vmatpush.bf16.msra.mxu0 %v2123
    %3168 = vmatpush.bf16.msra.mxu0 %v2115
    %3169 = vmatpush.bf16.msra.mxu0 %v2107
    %3170 = vmatpush.bf16.msra.mxu0 %v2099
    %3171 = vmatpush.bf16.msra.mxu0 %v2091
    %3172 = vmatmul.bf16.gmra.mxu0 %v177
    %v3173 = vpop.f32.mrf.mxu0
    %v3174 = vadd.f32 %v3161, %v3173
    %v3175 = vpop.f32.mrf.mxu0
    %3176 = vdwg.mxu0
    %3177 = vmatpush.bf16.msra.mxu0 0
    %3178 = vmatpush.bf16.msra.mxu0 0
    %3179 = vmatpush.bf16.msra.mxu0 0
    %3180 = vmatpush.bf16.msra.mxu0 0
    %3181 = vmatpush.bf16.msra.mxu0 0
    %3182 = vmatpush.bf16.msra.mxu0 0
    %3183 = vmatpush.bf16.msra.mxu0 0
    %3184 = vmatpush.bf16.msra.mxu0 %v2155
    %3185 = vmatmul.bf16.gmra.mxu0 %v2551
    %v3186 = vpop.f32.mrf.mxu0
    %v3187 = vadd.f32 %v3174, %v3186
    %v3188 = vpop.f32.mrf.mxu0
    %3189 = vdwg.mxu0
    %3190 = vmatpush.bf16.msra.mxu0 %v1828
    %3191 = vmatpush.bf16.msra.mxu0 %v1820
    %3192 = vmatpush.bf16.msra.mxu0 %v1812
    %3193 = vmatpush.bf16.msra.mxu0 %v1804
    %3194 = vmatpush.bf16.msra.mxu0 %v1796
    %3195 = vmatpush.bf16.msra.mxu0 %v1788
    %3196 = vmatpush.bf16.msra.mxu0 %v1780
    %3197 = vmatpush.bf16.msra.mxu0 %v1772
    %3198 = vmatmul.bf16.gmra.mxu0 %v172
    %v3199 = vpop.f32.mrf.mxu0
    %v3200 = vadd.f32 %v580, %v3199
    %v3201 = vpop.f32.mrf.mxu0
    %3202 = vdwg.mxu0
    %3203 = vmatpush.bf16.msra.mxu0 %v1892
    %3204 = vmatpush.bf16.msra.mxu0 %v1884
    %3205 = vmatpush.bf16.msra.mxu0 %v1876
    %3206 = vmatpush.bf16.msra.mxu0 %v1868
    %3207 = vmatpush.bf16.msra.mxu0 %v1860
    %3208 = vmatpush.bf16.msra.mxu0 %v1852
    %3209 = vmatpush.bf16.msra.mxu0 %v1844
    %3210 = vmatpush.bf16.msra.mxu0 %v1836
    %3211 = vmatmul.bf16.gmra.mxu0 %v173
    %v3212 = vpop.f32.mrf.mxu0
    %v3213 = vadd.f32 %v3200, %v3212
    %v3214 = vpop.f32.mrf.mxu0
    %3215 = vdwg.mxu0
    %3216 = vmatpush.bf16.msra.mxu0 %v1956
    %3217 = vmatpush.bf16.msra.mxu0 %v1948
    %3218 = vmatpush.bf16.msra.mxu0 %v1940
    %3219 = vmatpush.bf16.msra.mxu0 %v1932
    %3220 = vmatpush.bf16.msra.mxu0 %v1924
    %3221 = vmatpush.bf16.msra.mxu0 %v1916
    %3222 = vmatpush.bf16.msra.mxu0 %v1908
    %3223 = vmatpush.bf16.msra.mxu0 %v1900
    %3224 = vmatmul.bf16.gmra.mxu0 %v174
    %v3225 = vpop.f32.mrf.mxu0
    %v3226 = vadd.f32 %v3213, %v3225
    %v3227 = vpop.f32.mrf.mxu0
    %3228 = vdwg.mxu0
    %3229 = vmatpush.bf16.msra.mxu0 %v2020
    %3230 = vmatpush.bf16.msra.mxu0 %v2012
    %3231 = vmatpush.bf16.msra.mxu0 %v2004
    %3232 = vmatpush.bf16.msra.mxu0 %v1996
    %3233 = vmatpush.bf16.msra.mxu0 %v1988
    %3234 = vmatpush.bf16.msra.mxu0 %v1980
    %3235 = vmatpush.bf16.msra.mxu0 %v1972
    %3236 = vmatpush.bf16.msra.mxu0 %v1964
    %3237 = vmatmul.bf16.gmra.mxu0 %v175
    %v3238 = vpop.f32.mrf.mxu0
    %v3239 = vadd.f32 %v3226, %v3238
    %v3240 = vpop.f32.mrf.mxu0
    %3241 = vdwg.mxu0
    %3242 = vmatpush.bf16.msra.mxu0 %v2084
    %3243 = vmatpush.bf16.msra.mxu0 %v2076
    %3244 = vmatpush.bf16.msra.mxu0 %v2068
    %3245 = vmatpush.bf16.msra.mxu0 %v2060
    %3246 = vmatpush.bf16.msra.mxu0 %v2052
    %3247 = vmatpush.bf16.msra.mxu0 %v2044
    %3248 = vmatpush.bf16.msra.mxu0 %v2036
    %3249 = vmatpush.bf16.msra.mxu0 %v2028
    %3250 = vmatmul.bf16.gmra.mxu0 %v176
    %v3251 = vpop.f32.mrf.mxu0
    %v3252 = vadd.f32 %v3239, %v3251
    %v3253 = vpop.f32.mrf.mxu0
    %3254 = vdwg.mxu0
    %3255 = vmatpush.bf16.msra.mxu0 %v2148
    %3256 = vmatpush.bf16.msra.mxu0 %v2140
    %3257 = vmatpush.bf16.msra.mxu0 %v2132
    %3258 = vmatpush.bf16.msra.mxu0 %v2124
    %3259 = vmatpush.bf16.msra.mxu0 %v2116
    %3260 = vmatpush.bf16.msra.mxu0 %v2108
    %3261 = vmatpush.bf16.msra.mxu0 %v2100
    %3262 = vmatpush.bf16.msra.mxu0 %v2092
    %3263 = vmatmul.bf16.gmra.mxu0 %v177
    %v3264 = vpop.f32.mrf.mxu0
    %v3265 = vadd.f32 %v3252, %v3264
    %v3266 = vpop.f32.mrf.mxu0
    %3267 = vdwg.mxu0
    %3268 = vmatpush.bf16.msra.mxu0 0
    %3269 = vmatpush.bf16.msra.mxu0 0
    %3270 = vmatpush.bf16.msra.mxu0 0
    %3271 = vmatpush.bf16.msra.mxu0 0
    %3272 = vmatpush.bf16.msra.mxu0 0
    %3273 = vmatpush.bf16.msra.mxu0 0
    %3274 = vmatpush.bf16.msra.mxu0 0
    %3275 = vmatpush.bf16.msra.mxu0 %v2156
    %3276 = vmatmul.bf16.gmra.mxu0 %v2551
    %v3277 = vpop.f32.mrf.mxu0
    %v3278 = vadd.f32 %v3265, %v3277
    %v3279 = vpop.f32.mrf.mxu0
    %3280 = vdwg.mxu0
    %v3281 = vmax.f32 %v2641, 0.0
    %v3282 = vmax.f32 %v2732, 0.0
    %v3283 = vmax.f32 %v2823, 0.0
    %v3284 = vmax.f32 %v2914, 0.0
    %v3285 = vmax.f32 %v3005, 0.0
    %v3286 = vmax.f32 %v3096, 0.0
    %v3287 = vmax.f32 %v3187, 0.0
    %v3288 = vmax.f32 %v3278, 0.0
    %v3289 = vpack.c.bf16 %v3281, %v3281
    %v3290 = vpack.c.bf16 %v3282, %v3282
    %v3291 = vpack.c.bf16 %v3283, %v3283
    %v3292 = vpack.c.bf16 %v3284, %v3284
    %v3293 = vpack.c.bf16 %v3285, %v3285
    %v3294 = vpack.c.bf16 %v3286, %v3286
    %v3295 = vpack.c.bf16 %v3287, %v3287
    %v3296 = vpack.c.bf16 %v3288, %v3288
    %v3297 = vld [vmem:[#allocation9] sm:$0xff]
    %v3298 = vld [vmem:[#allocation9 + $0x8] sm:$0xff]
    %v3299 = vld [vmem:[#allocation9 + $0x10] sm:$0xff]
    %v3300 = vld [vmem:[#allocation9 + $0x18] sm:$0xff]
    %v3301 = vld [vmem:[#allocation9 + $0x20] sm:$0xff]
    %v3302 = vld [vmem:[#allocation9 + $0x28] sm:$0xff]
    %v3303 = vld [vmem:[#allocation9 + $0x30] sm:$0xff]
    %v3304 = vld [vmem:[#allocation9 + $0x38] sm:$0xff]
    %v3305 = vld [vmem:[#allocation9 + $0x40] sm:$0xff]
    %v3306 = vld [vmem:[#allocation9 + $0x48] sm:$0xff]
    %v3307 = vld [vmem:[#allocation9 + $0x50] sm:$0xff]
    %v3308 = vld [vmem:[#allocation9 + $0x58] sm:$0xff]
    %v3309 = vld [vmem:[#allocation9 + $0x60] sm:$0xff]
    %v3310 = vld [vmem:[#allocation9 + $0x68] sm:$0xff]
    %v3311 = vld [vmem:[#allocation9 + $0x70] sm:$0xff]
    %v3312 = vld [vmem:[#allocation9 + $0x78] sm:$0xff]
    %v3313 = vld [vmem:[#allocation9 + $0x80] sm:$0xff]
    %v3314 = vld [vmem:[#allocation9 + $0x88] sm:$0xff]
    %v3315 = vld [vmem:[#allocation9 + $0x90] sm:$0xff]
    %v3316 = vld [vmem:[#allocation9 + $0x98] sm:$0xff]
    %v3317 = vld [vmem:[#allocation9 + $0xa0] sm:$0xff]
    %v3318 = vld [vmem:[#allocation9 + $0xa8] sm:$0xff]
    %v3319 = vld [vmem:[#allocation9 + $0xb0] sm:$0xff]
    %v3320 = vld [vmem:[#allocation9 + $0xb8] sm:$0xff]
    %v3321 = vld [vmem:[#allocation9 + $0xc0] sm:$0xff]
    %v3322 = vld [vmem:[#allocation9 + $0xc8] sm:$0xff]
    %v3323 = vld [vmem:[#allocation9 + $0xd0] sm:$0xff]
    %v3324 = vld [vmem:[#allocation9 + $0xd8] sm:$0xff]
    %v3325 = vld [vmem:[#allocation9 + $0xe0] sm:$0xff]
    %v3326 = vld [vmem:[#allocation9 + $0xe8] sm:$0xff]
    %v3327 = vld [vmem:[#allocation9 + $0xf0] sm:$0xff]
    %v3328 = vld [vmem:[#allocation9 + $0xf8] sm:$0xff]
    %v3329 = vld [vmem:[#allocation9 + $0x100] sm:$0xff]
    %v3330 = vld [vmem:[#allocation9 + $0x108] sm:$0xff]
    %v3331 = vld [vmem:[#allocation9 + $0x110] sm:$0xff]
    %v3332 = vld [vmem:[#allocation9 + $0x118] sm:$0xff]
    %v3333 = vld [vmem:[#allocation9 + $0x120] sm:$0xff]
    %v3334 = vld [vmem:[#allocation9 + $0x128] sm:$0xff]
    %v3335 = vld [vmem:[#allocation9 + $0x130] sm:$0xff]
    %v3336 = vld [vmem:[#allocation9 + $0x138] sm:$0xff]
    %v3337 = vld [vmem:[#allocation9 + $0x140] sm:$0xff]
    %v3338 = vld [vmem:[#allocation9 + $0x148] sm:$0xff]
    %v3339 = vld [vmem:[#allocation9 + $0x150] sm:$0xff]
    %v3340 = vld [vmem:[#allocation9 + $0x158] sm:$0xff]
    %v3341 = vld [vmem:[#allocation9 + $0x160] sm:$0xff]
    %v3342 = vld [vmem:[#allocation9 + $0x168] sm:$0xff]
    %v3343 = vld [vmem:[#allocation9 + $0x170] sm:$0xff]
    %v3344 = vld [vmem:[#allocation9 + $0x178] sm:$0xff]
    %v3345 = vld [vmem:[#allocation9 + $0x180] sm:$0xff]
    %v3346 = vld [vmem:[#allocation9 + $0x188] sm:$0xff]
    %v3347 = vld [vmem:[#allocation9 + $0x190] sm:$0xff]
    %v3348 = vld [vmem:[#allocation9 + $0x198] sm:$0xff]
    %v3349 = vld [vmem:[#allocation9 + $0x1a0] sm:$0xff]
    %v3350 = vld [vmem:[#allocation9 + $0x1a8] sm:$0xff]
    %v3351 = vld [vmem:[#allocation9 + $0x1b0] sm:$0xff]
    %v3352 = vld [vmem:[#allocation9 + $0x1b8] sm:$0xff]
    %v3353 = vld [vmem:[#allocation9 + $0x1c0] sm:$0xff]
    %v3354 = vld [vmem:[#allocation9 + $0x1c8] sm:$0xff]
    %v3355 = vld [vmem:[#allocation9 + $0x1d0] sm:$0xff]
    %v3356 = vld [vmem:[#allocation9 + $0x1d8] sm:$0xff]
    %v3357 = vld [vmem:[#allocation9 + $0x1e0] sm:$0xff]
    %v3358 = vld [vmem:[#allocation9 + $0x1e8] sm:$0xff]
    %v3359 = vld [vmem:[#allocation9 + $0x1f0] sm:$0xff]
    %v3360 = vld [vmem:[#allocation9 + $0x1f8] sm:$0xff]
    %v3361 = vld [vmem:[#allocation9 + $0x200] sm:$0xff]
    %v3362 = vld [vmem:[#allocation9 + $0x208] sm:$0xff]
    %v3363 = vld [vmem:[#allocation9 + $0x210] sm:$0xff]
    %v3364 = vld [vmem:[#allocation9 + $0x218] sm:$0xff]
    %v3365 = vld [vmem:[#allocation9 + $0x220] sm:$0xff]
    %v3366 = vld [vmem:[#allocation9 + $0x228] sm:$0xff]
    %v3367 = vld [vmem:[#allocation9 + $0x230] sm:$0xff]
    %v3368 = vld [vmem:[#allocation9 + $0x238] sm:$0xff]
    %v3369 = vld [vmem:[#allocation9 + $0x240] sm:$0xff]
    %v3370 = vld [vmem:[#allocation9 + $0x248] sm:$0xff]
    %v3371 = vld [vmem:[#allocation9 + $0x250] sm:$0xff]
    %v3372 = vld [vmem:[#allocation9 + $0x258] sm:$0xff]
    %v3373 = vld [vmem:[#allocation9 + $0x260] sm:$0xff]
    %v3374 = vld [vmem:[#allocation9 + $0x268] sm:$0xff]
    %v3375 = vld [vmem:[#allocation9 + $0x270] sm:$0xff]
    %v3376 = vld [vmem:[#allocation9 + $0x278] sm:$0xff]
    %v3377 = vld [vmem:[#allocation9 + $0x280] sm:$0xff]
    %v3378 = vld [vmem:[#allocation9 + $0x288] sm:$0xff]
    %v3379 = vld [vmem:[#allocation9 + $0x290] sm:$0xff]
    %v3380 = vld [vmem:[#allocation9 + $0x298] sm:$0xff]
    %v3381 = vld [vmem:[#allocation9 + $0x2a0] sm:$0xff]
    %v3382 = vld [vmem:[#allocation9 + $0x2a8] sm:$0xff]
    %v3383 = vld [vmem:[#allocation9 + $0x2b0] sm:$0xff]
    %v3384 = vld [vmem:[#allocation9 + $0x2b8] sm:$0xff]
    %v3385 = vld [vmem:[#allocation9 + $0x2c0] sm:$0xff]
    %v3386 = vld [vmem:[#allocation9 + $0x2c8] sm:$0xff]
    %v3387 = vld [vmem:[#allocation9 + $0x2d0] sm:$0xff]
    %v3388 = vld [vmem:[#allocation9 + $0x2d8] sm:$0xff]
    %v3389 = vld [vmem:[#allocation9 + $0x2e0] sm:$0xff]
    %v3390 = vld [vmem:[#allocation9 + $0x2e8] sm:$0xff]
    %v3391 = vld [vmem:[#allocation9 + $0x2f0] sm:$0xff]
    %v3392 = vld [vmem:[#allocation9 + $0x2f8] sm:$0xff]
    %v3393 = vld [vmem:[#allocation9 + $0x300] sm:$0xff]
    %v3394 = vld [vmem:[#allocation9 + $0x308] sm:$0xff]
    %v3395 = vld [vmem:[#allocation9 + $0x310] sm:$0xff]
    %v3396 = vld [vmem:[#allocation9 + $0x318] sm:$0xff]
    %v3397 = vld [vmem:[#allocation9 + $0x320] sm:$0xff]
    %v3398 = vld [vmem:[#allocation9 + $0x328] sm:$0xff]
    %v3399 = vld [vmem:[#allocation9 + $0x330] sm:$0xff]
    %v3400 = vld [vmem:[#allocation9 + $0x338] sm:$0xff]
    %v3401 = vld [vmem:[#allocation9 + $0x340] sm:$0xff]
    %v3402 = vld [vmem:[#allocation9 + $0x348] sm:$0xff]
    %v3403 = vld [vmem:[#allocation9 + $0x350] sm:$0xff]
    %v3404 = vld [vmem:[#allocation9 + $0x358] sm:$0xff]
    %v3405 = vld [vmem:[#allocation9 + $0x360] sm:$0xff]
    %v3406 = vld [vmem:[#allocation9 + $0x368] sm:$0xff]
    %v3407 = vld [vmem:[#allocation9 + $0x370] sm:$0xff]
    %v3408 = vld [vmem:[#allocation9 + $0x378] sm:$0xff]
    %v3409 = vld [vmem:[#allocation9 + $0x380] sm:$0xff]
    %v3410 = vld [vmem:[#allocation9 + $0x388] sm:$0xff]
    %v3411 = vld [vmem:[#allocation9 + $0x390] sm:$0xff]
    %v3412 = vld [vmem:[#allocation9 + $0x398] sm:$0xff]
    %v3413 = vld [vmem:[#allocation9 + $0x3a0] sm:$0xff]
    %v3414 = vld [vmem:[#allocation9 + $0x3a8] sm:$0xff]
    %v3415 = vld [vmem:[#allocation9 + $0x3b0] sm:$0xff]
    %v3416 = vld [vmem:[#allocation9 + $0x3b8] sm:$0xff]
    %v3417 = vld [vmem:[#allocation9 + $0x3c0] sm:$0xff]
    %v3418 = vld [vmem:[#allocation9 + $0x3c8] sm:$0xff]
    %v3419 = vld [vmem:[#allocation9 + $0x3d0] sm:$0xff]
    %v3420 = vld [vmem:[#allocation9 + $0x3d8] sm:$0xff]
    %v3421 = vld [vmem:[#allocation9 + $0x3e0] sm:$0xff]
    %v3422 = vld [vmem:[#allocation9 + $0x3e8] sm:$0xff]
    %v3423 = vld [vmem:[#allocation9 + $0x3f0] sm:$0xff]
    %v3424 = vld [vmem:[#allocation9 + $0x3f8] sm:$0xff]
    %v3425 = vld [vmem:[#allocation9 + $0x400] sm:$0xff]
    %v3426 = vld [vmem:[#allocation9 + $0x408] sm:$0xff]
    %v3427 = vld [vmem:[#allocation9 + $0x410] sm:$0xff]
    %v3428 = vld [vmem:[#allocation9 + $0x418] sm:$0xff]
    %v3429 = vld [vmem:[#allocation9 + $0x420] sm:$0xff]
    %v3430 = vld [vmem:[#allocation9 + $0x428] sm:$0xff]
    %v3431 = vld [vmem:[#allocation9 + $0x430] sm:$0xff]
    %v3432 = vld [vmem:[#allocation9 + $0x438] sm:$0xff]
    %v3433 = vld [vmem:[#allocation9 + $0x440] sm:$0xff]
    %v3434 = vld [vmem:[#allocation9 + $0x448] sm:$0xff]
    %v3435 = vld [vmem:[#allocation9 + $0x450] sm:$0xff]
    %v3436 = vld [vmem:[#allocation9 + $0x458] sm:$0xff]
    %v3437 = vld [vmem:[#allocation9 + $0x460] sm:$0xff]
    %v3438 = vld [vmem:[#allocation9 + $0x468] sm:$0xff]
    %v3439 = vld [vmem:[#allocation9 + $0x470] sm:$0xff]
    %v3440 = vld [vmem:[#allocation9 + $0x478] sm:$0xff]
    %v3441 = vld [vmem:[#allocation9 + $0x480] sm:$0xff]
    %v3442 = vld [vmem:[#allocation9 + $0x488] sm:$0xff]
    %v3443 = vld [vmem:[#allocation9 + $0x490] sm:$0xff]
    %v3444 = vld [vmem:[#allocation9 + $0x498] sm:$0xff]
    %v3445 = vld [vmem:[#allocation9 + $0x4a0] sm:$0xff]
    %v3446 = vld [vmem:[#allocation9 + $0x4a8] sm:$0xff]
    %v3447 = vld [vmem:[#allocation9 + $0x4b0] sm:$0xff]
    %v3448 = vld [vmem:[#allocation9 + $0x4b8] sm:$0xff]
    %v3449 = vld [vmem:[#allocation9 + $0x4c0] sm:$0xff]
    %v3450 = vld [vmem:[#allocation9 + $0x4c8] sm:$0xff]
    %v3451 = vld [vmem:[#allocation9 + $0x4d0] sm:$0xff]
    %v3452 = vld [vmem:[#allocation9 + $0x4d8] sm:$0xff]
    %v3453 = vld [vmem:[#allocation9 + $0x4e0] sm:$0xff]
    %v3454 = vld [vmem:[#allocation9 + $0x4e8] sm:$0xff]
    %v3455 = vld [vmem:[#allocation9 + $0x4f0] sm:$0xff]
    %v3456 = vld [vmem:[#allocation9 + $0x4f8] sm:$0xff]
    %v3457 = vld [vmem:[#allocation9 + $0x500] sm:$0xff]
    %v3458 = vld [vmem:[#allocation9 + $0x508] sm:$0xff]
    %v3459 = vld [vmem:[#allocation9 + $0x510] sm:$0xff]
    %v3460 = vld [vmem:[#allocation9 + $0x518] sm:$0xff]
    %v3461 = vld [vmem:[#allocation9 + $0x520] sm:$0xff]
    %v3462 = vld [vmem:[#allocation9 + $0x528] sm:$0xff]
    %v3463 = vld [vmem:[#allocation9 + $0x530] sm:$0xff]
    %v3464 = vld [vmem:[#allocation9 + $0x538] sm:$0xff]
    %v3465 = vld [vmem:[#allocation9 + $0x540] sm:$0xff]
    %v3466 = vld [vmem:[#allocation9 + $0x548] sm:$0xff]
    %v3467 = vld [vmem:[#allocation9 + $0x550] sm:$0xff]
    %v3468 = vld [vmem:[#allocation9 + $0x558] sm:$0xff]
    %v3469 = vld [vmem:[#allocation9 + $0x560] sm:$0xff]
    %v3470 = vld [vmem:[#allocation9 + $0x568] sm:$0xff]
    %v3471 = vld [vmem:[#allocation9 + $0x570] sm:$0xff]
    %v3472 = vld [vmem:[#allocation9 + $0x578] sm:$0xff]
    %v3473 = vld [vmem:[#allocation9 + $0x580] sm:$0xff]
    %v3474 = vld [vmem:[#allocation9 + $0x588] sm:$0xff]
    %v3475 = vld [vmem:[#allocation9 + $0x590] sm:$0xff]
    %v3476 = vld [vmem:[#allocation9 + $0x598] sm:$0xff]
    %v3477 = vld [vmem:[#allocation9 + $0x5a0] sm:$0xff]
    %v3478 = vld [vmem:[#allocation9 + $0x5a8] sm:$0xff]
    %v3479 = vld [vmem:[#allocation9 + $0x5b0] sm:$0xff]
    %v3480 = vld [vmem:[#allocation9 + $0x5b8] sm:$0xff]
    %v3481 = vld [vmem:[#allocation9 + $0x5c0] sm:$0xff]
    %v3482 = vld [vmem:[#allocation9 + $0x5c8] sm:$0xff]
    %v3483 = vld [vmem:[#allocation9 + $0x5d0] sm:$0xff]
    %v3484 = vld [vmem:[#allocation9 + $0x5d8] sm:$0xff]
    %v3485 = vld [vmem:[#allocation9 + $0x5e0] sm:$0xff]
    %v3486 = vld [vmem:[#allocation9 + $0x5e8] sm:$0xff]
    %v3487 = vld [vmem:[#allocation9 + $0x5f0] sm:$0xff]
    %v3488 = vld [vmem:[#allocation9 + $0x5f8] sm:$0xff]
    %v3489 = vld [vmem:[#allocation9 + $0x600] sm:$0xff]
    %v3490 = vld [vmem:[#allocation9 + $0x608] sm:$0xff]
    %v3491 = vld [vmem:[#allocation9 + $0x610] sm:$0xff]
    %v3492 = vld [vmem:[#allocation9 + $0x618] sm:$0xff]
    %v3493 = vld [vmem:[#allocation9 + $0x620] sm:$0xff]
    %v3494 = vld [vmem:[#allocation9 + $0x628] sm:$0xff]
    %v3495 = vld [vmem:[#allocation9 + $0x630] sm:$0xff]
    %v3496 = vld [vmem:[#allocation9 + $0x638] sm:$0xff]
    %v3497 = vld [vmem:[#allocation9 + $0x640] sm:$0xff]
    %v3498 = vld [vmem:[#allocation9 + $0x648] sm:$0xff]
    %v3499 = vld [vmem:[#allocation9 + $0x650] sm:$0xff]
    %v3500 = vld [vmem:[#allocation9 + $0x658] sm:$0xff]
    %v3501 = vld [vmem:[#allocation9 + $0x660] sm:$0xff]
    %v3502 = vld [vmem:[#allocation9 + $0x668] sm:$0xff]
    %v3503 = vld [vmem:[#allocation9 + $0x670] sm:$0xff]
    %v3504 = vld [vmem:[#allocation9 + $0x678] sm:$0xff]
    %v3505 = vld [vmem:[#allocation9 + $0x680] sm:$0xff]
    %v3506 = vld [vmem:[#allocation9 + $0x688] sm:$0xff]
    %v3507 = vld [vmem:[#allocation9 + $0x690] sm:$0xff]
    %v3508 = vld [vmem:[#allocation9 + $0x698] sm:$0xff]
    %v3509 = vld [vmem:[#allocation9 + $0x6a0] sm:$0xff]
    %v3510 = vld [vmem:[#allocation9 + $0x6a8] sm:$0xff]
    %v3511 = vld [vmem:[#allocation9 + $0x6b0] sm:$0xff]
    %v3512 = vld [vmem:[#allocation9 + $0x6b8] sm:$0xff]
    %v3513 = vld [vmem:[#allocation9 + $0x6c0] sm:$0xff]
    %v3514 = vld [vmem:[#allocation9 + $0x6c8] sm:$0xff]
    %v3515 = vld [vmem:[#allocation9 + $0x6d0] sm:$0xff]
    %v3516 = vld [vmem:[#allocation9 + $0x6d8] sm:$0xff]
    %v3517 = vld [vmem:[#allocation9 + $0x6e0] sm:$0xff]
    %v3518 = vld [vmem:[#allocation9 + $0x6e8] sm:$0xff]
    %v3519 = vld [vmem:[#allocation9 + $0x6f0] sm:$0xff]
    %v3520 = vld [vmem:[#allocation9 + $0x6f8] sm:$0xff]
    %v3521 = vld [vmem:[#allocation9 + $0x700] sm:$0xff]
    %v3522 = vld [vmem:[#allocation9 + $0x708] sm:$0xff]
    %v3523 = vld [vmem:[#allocation9 + $0x710] sm:$0xff]
    %v3524 = vld [vmem:[#allocation9 + $0x718] sm:$0xff]
    %v3525 = vld [vmem:[#allocation9 + $0x720] sm:$0xff]
    %v3526 = vld [vmem:[#allocation9 + $0x728] sm:$0xff]
    %v3527 = vld [vmem:[#allocation9 + $0x730] sm:$0xff]
    %v3528 = vld [vmem:[#allocation9 + $0x738] sm:$0xff]
    %v3529 = vld [vmem:[#allocation9 + $0x740] sm:$0xff]
    %v3530 = vld [vmem:[#allocation9 + $0x748] sm:$0xff]
    %v3531 = vld [vmem:[#allocation9 + $0x750] sm:$0xff]
    %v3532 = vld [vmem:[#allocation9 + $0x758] sm:$0xff]
    %v3533 = vld [vmem:[#allocation9 + $0x760] sm:$0xff]
    %v3534 = vld [vmem:[#allocation9 + $0x768] sm:$0xff]
    %v3535 = vld [vmem:[#allocation9 + $0x770] sm:$0xff]
    %v3536 = vld [vmem:[#allocation9 + $0x778] sm:$0xff]
    %v3537 = vld [vmem:[#allocation9 + $0x780] sm:$0xff]
    %v3538 = vld [vmem:[#allocation9 + $0x788] sm:$0xff]
    %v3539 = vld [vmem:[#allocation9 + $0x790] sm:$0xff]
    %v3540 = vld [vmem:[#allocation9 + $0x798] sm:$0xff]
    %v3541 = vld [vmem:[#allocation9 + $0x7a0] sm:$0xff]
    %v3542 = vld [vmem:[#allocation9 + $0x7a8] sm:$0xff]
    %v3543 = vld [vmem:[#allocation9 + $0x7b0] sm:$0xff]
    %v3544 = vld [vmem:[#allocation9 + $0x7b8] sm:$0xff]
    %v3545 = vld [vmem:[#allocation9 + $0x7c0] sm:$0xff]
    %v3546 = vld [vmem:[#allocation9 + $0x7c8] sm:$0xff]
    %v3547 = vld [vmem:[#allocation9 + $0x7d0] sm:$0xff]
    %v3548 = vld [vmem:[#allocation9 + $0x7d8] sm:$0xff]
    %v3549 = vld [vmem:[#allocation9 + $0x7e0] sm:$0xff]
    %v3550 = vld [vmem:[#allocation9 + $0x7e8] sm:$0xff]
    %v3551 = vld [vmem:[#allocation9 + $0x7f0] sm:$0xff]
    %v3552 = vld [vmem:[#allocation9 + $0x7f8] sm:$0xff]
    %v3553 = vld [vmem:[#allocation11] sm:$0xf]
    %v3555 = vperm.slane %v3553, 0
    %v3556 = vperm.slane %v3553, 1
    %v3557 = vperm.slane %v3553, 2
    %v3558 = vperm.slane %v3553, 3
    %v3819 = vunpack.c.l.b16 %v3297
    %v3820 = vunpack.c.h.b16 %v3297
    %v3821 = vunpack.c.l.b16 %v3298
    %v3822 = vunpack.c.h.b16 %v3298
    %v3823 = vunpack.c.l.b16 %v3299
    %v3824 = vunpack.c.h.b16 %v3299
    %v3825 = vunpack.c.l.b16 %v3300
    %v3826 = vunpack.c.h.b16 %v3300
    %v3827 = vunpack.c.l.b16 %v3301
    %v3828 = vunpack.c.h.b16 %v3301
    %v3829 = vunpack.c.l.b16 %v3302
    %v3830 = vunpack.c.h.b16 %v3302
    %v3831 = vunpack.c.l.b16 %v3303
    %v3832 = vunpack.c.h.b16 %v3303
    %v3833 = vunpack.c.l.b16 %v3304
    %v3834 = vunpack.c.h.b16 %v3304
    %v3835 = vunpack.c.l.b16 %v3305
    %v3836 = vunpack.c.h.b16 %v3305
    %v3837 = vunpack.c.l.b16 %v3306
    %v3838 = vunpack.c.h.b16 %v3306
    %v3839 = vunpack.c.l.b16 %v3307
    %v3840 = vunpack.c.h.b16 %v3307
    %v3841 = vunpack.c.l.b16 %v3308
    %v3842 = vunpack.c.h.b16 %v3308
    %v3843 = vunpack.c.l.b16 %v3309
    %v3844 = vunpack.c.h.b16 %v3309
    %v3845 = vunpack.c.l.b16 %v3310
    %v3846 = vunpack.c.h.b16 %v3310
    %v3847 = vunpack.c.l.b16 %v3311
    %v3848 = vunpack.c.h.b16 %v3311
    %v3849 = vunpack.c.l.b16 %v3312
    %v3850 = vunpack.c.h.b16 %v3312
    %v3851 = vunpack.c.l.b16 %v3313
    %v3852 = vunpack.c.h.b16 %v3313
    %v3853 = vunpack.c.l.b16 %v3314
    %v3854 = vunpack.c.h.b16 %v3314
    %v3855 = vunpack.c.l.b16 %v3315
    %v3856 = vunpack.c.h.b16 %v3315
    %v3857 = vunpack.c.l.b16 %v3316
    %v3858 = vunpack.c.h.b16 %v3316
    %v3859 = vunpack.c.l.b16 %v3317
    %v3860 = vunpack.c.h.b16 %v3317
    %v3861 = vunpack.c.l.b16 %v3318
    %v3862 = vunpack.c.h.b16 %v3318
    %v3863 = vunpack.c.l.b16 %v3319
    %v3864 = vunpack.c.h.b16 %v3319
    %v3865 = vunpack.c.l.b16 %v3320
    %v3866 = vunpack.c.h.b16 %v3320
    %v3867 = vunpack.c.l.b16 %v3321
    %v3868 = vunpack.c.h.b16 %v3321
    %v3869 = vunpack.c.l.b16 %v3322
    %v3870 = vunpack.c.h.b16 %v3322
    %v3871 = vunpack.c.l.b16 %v3323
    %v3872 = vunpack.c.h.b16 %v3323
    %v3873 = vunpack.c.l.b16 %v3324
    %v3874 = vunpack.c.h.b16 %v3324
    %v3875 = vunpack.c.l.b16 %v3325
    %v3876 = vunpack.c.h.b16 %v3325
    %v3877 = vunpack.c.l.b16 %v3326
    %v3878 = vunpack.c.h.b16 %v3326
    %v3879 = vunpack.c.l.b16 %v3327
    %v3880 = vunpack.c.h.b16 %v3327
    %v3881 = vunpack.c.l.b16 %v3328
    %v3882 = vunpack.c.h.b16 %v3328
    %v3883 = vunpack.c.l.b16 %v3329
    %v3884 = vunpack.c.h.b16 %v3329
    %v3885 = vunpack.c.l.b16 %v3330
    %v3886 = vunpack.c.h.b16 %v3330
    %v3887 = vunpack.c.l.b16 %v3331
    %v3888 = vunpack.c.h.b16 %v3331
    %v3889 = vunpack.c.l.b16 %v3332
    %v3890 = vunpack.c.h.b16 %v3332
    %v3891 = vunpack.c.l.b16 %v3333
    %v3892 = vunpack.c.h.b16 %v3333
    %v3893 = vunpack.c.l.b16 %v3334
    %v3894 = vunpack.c.h.b16 %v3334
    %v3895 = vunpack.c.l.b16 %v3335
    %v3896 = vunpack.c.h.b16 %v3335
    %v3897 = vunpack.c.l.b16 %v3336
    %v3898 = vunpack.c.h.b16 %v3336
    %v3899 = vunpack.c.l.b16 %v3337
    %v3900 = vunpack.c.h.b16 %v3337
    %v3901 = vunpack.c.l.b16 %v3338
    %v3902 = vunpack.c.h.b16 %v3338
    %v3903 = vunpack.c.l.b16 %v3339
    %v3904 = vunpack.c.h.b16 %v3339
    %v3905 = vunpack.c.l.b16 %v3340
    %v3906 = vunpack.c.h.b16 %v3340
    %v3907 = vunpack.c.l.b16 %v3341
    %v3908 = vunpack.c.h.b16 %v3341
    %v3909 = vunpack.c.l.b16 %v3342
    %v3910 = vunpack.c.h.b16 %v3342
    %v3911 = vunpack.c.l.b16 %v3343
    %v3912 = vunpack.c.h.b16 %v3343
    %v3913 = vunpack.c.l.b16 %v3344
    %v3914 = vunpack.c.h.b16 %v3344
    %v3915 = vunpack.c.l.b16 %v3345
    %v3916 = vunpack.c.h.b16 %v3345
    %v3917 = vunpack.c.l.b16 %v3346
    %v3918 = vunpack.c.h.b16 %v3346
    %v3919 = vunpack.c.l.b16 %v3347
    %v3920 = vunpack.c.h.b16 %v3347
    %v3921 = vunpack.c.l.b16 %v3348
    %v3922 = vunpack.c.h.b16 %v3348
    %v3923 = vunpack.c.l.b16 %v3349
    %v3924 = vunpack.c.h.b16 %v3349
    %v3925 = vunpack.c.l.b16 %v3350
    %v3926 = vunpack.c.h.b16 %v3350
    %v3927 = vunpack.c.l.b16 %v3351
    %v3928 = vunpack.c.h.b16 %v3351
    %v3929 = vunpack.c.l.b16 %v3352
    %v3930 = vunpack.c.h.b16 %v3352
    %v3931 = vunpack.c.l.b16 %v3353
    %v3932 = vunpack.c.h.b16 %v3353
    %v3933 = vunpack.c.l.b16 %v3354
    %v3934 = vunpack.c.h.b16 %v3354
    %v3935 = vunpack.c.l.b16 %v3355
    %v3936 = vunpack.c.h.b16 %v3355
    %v3937 = vunpack.c.l.b16 %v3356
    %v3938 = vunpack.c.h.b16 %v3356
    %v3939 = vunpack.c.l.b16 %v3357
    %v3940 = vunpack.c.h.b16 %v3357
    %v3941 = vunpack.c.l.b16 %v3358
    %v3942 = vunpack.c.h.b16 %v3358
    %v3943 = vunpack.c.l.b16 %v3359
    %v3944 = vunpack.c.h.b16 %v3359
    %v3945 = vunpack.c.l.b16 %v3360
    %v3946 = vunpack.c.h.b16 %v3360
    %v3947 = vunpack.c.l.b16 %v3361
    %v3948 = vunpack.c.h.b16 %v3361
    %v3949 = vunpack.c.l.b16 %v3362
    %v3950 = vunpack.c.h.b16 %v3362
    %v3951 = vunpack.c.l.b16 %v3363
    %v3952 = vunpack.c.h.b16 %v3363
    %v3953 = vunpack.c.l.b16 %v3364
    %v3954 = vunpack.c.h.b16 %v3364
    %v3955 = vunpack.c.l.b16 %v3365
    %v3956 = vunpack.c.h.b16 %v3365
    %v3957 = vunpack.c.l.b16 %v3366
    %v3958 = vunpack.c.h.b16 %v3366
    %v3959 = vunpack.c.l.b16 %v3367
    %v3960 = vunpack.c.h.b16 %v3367
    %v3961 = vunpack.c.l.b16 %v3368
    %v3962 = vunpack.c.h.b16 %v3368
    %v3963 = vunpack.c.l.b16 %v3369
    %v3964 = vunpack.c.h.b16 %v3369
    %v3965 = vunpack.c.l.b16 %v3370
    %v3966 = vunpack.c.h.b16 %v3370
    %v3967 = vunpack.c.l.b16 %v3371
    %v3968 = vunpack.c.h.b16 %v3371
    %v3969 = vunpack.c.l.b16 %v3372
    %v3970 = vunpack.c.h.b16 %v3372
    %v3971 = vunpack.c.l.b16 %v3373
    %v3972 = vunpack.c.h.b16 %v3373
    %v3973 = vunpack.c.l.b16 %v3374
    %v3974 = vunpack.c.h.b16 %v3374
    %v3975 = vunpack.c.l.b16 %v3375
    %v3976 = vunpack.c.h.b16 %v3375
    %v3977 = vunpack.c.l.b16 %v3376
    %v3978 = vunpack.c.h.b16 %v3376
    %v3979 = vunpack.c.l.b16 %v3377
    %v3980 = vunpack.c.h.b16 %v3377
    %v3981 = vunpack.c.l.b16 %v3378
    %v3982 = vunpack.c.h.b16 %v3378
    %v3983 = vunpack.c.l.b16 %v3379
    %v3984 = vunpack.c.h.b16 %v3379
    %v3985 = vunpack.c.l.b16 %v3380
    %v3986 = vunpack.c.h.b16 %v3380
    %v3987 = vunpack.c.l.b16 %v3381
    %v3988 = vunpack.c.h.b16 %v3381
    %v3989 = vunpack.c.l.b16 %v3382
    %v3990 = vunpack.c.h.b16 %v3382
    %v3991 = vunpack.c.l.b16 %v3383
    %v3992 = vunpack.c.h.b16 %v3383
    %v3993 = vunpack.c.l.b16 %v3384
    %v3994 = vunpack.c.h.b16 %v3384
    %v3995 = vunpack.c.l.b16 %v3385
    %v3996 = vunpack.c.h.b16 %v3385
    %v3997 = vunpack.c.l.b16 %v3386
    %v3998 = vunpack.c.h.b16 %v3386
    %v3999 = vunpack.c.l.b16 %v3387
    %v4000 = vunpack.c.h.b16 %v3387
    %v4001 = vunpack.c.l.b16 %v3388
    %v4002 = vunpack.c.h.b16 %v3388
    %v4003 = vunpack.c.l.b16 %v3389
    %v4004 = vunpack.c.h.b16 %v3389
    %v4005 = vunpack.c.l.b16 %v3390
    %v4006 = vunpack.c.h.b16 %v3390
    %v4007 = vunpack.c.l.b16 %v3391
    %v4008 = vunpack.c.h.b16 %v3391
    %v4009 = vunpack.c.l.b16 %v3392
    %v4010 = vunpack.c.h.b16 %v3392
    %v4011 = vunpack.c.l.b16 %v3393
    %v4012 = vunpack.c.h.b16 %v3393
    %v4013 = vunpack.c.l.b16 %v3394
    %v4014 = vunpack.c.h.b16 %v3394
    %v4015 = vunpack.c.l.b16 %v3395
    %v4016 = vunpack.c.h.b16 %v3395
    %v4017 = vunpack.c.l.b16 %v3396
    %v4018 = vunpack.c.h.b16 %v3396
    %v4019 = vunpack.c.l.b16 %v3397
    %v4020 = vunpack.c.h.b16 %v3397
    %v4021 = vunpack.c.l.b16 %v3398
    %v4022 = vunpack.c.h.b16 %v3398
    %v4023 = vunpack.c.l.b16 %v3399
    %v4024 = vunpack.c.h.b16 %v3399
    %v4025 = vunpack.c.l.b16 %v3400
    %v4026 = vunpack.c.h.b16 %v3400
    %v4027 = vunpack.c.l.b16 %v3401
    %v4028 = vunpack.c.h.b16 %v3401
    %v4029 = vunpack.c.l.b16 %v3402
    %v4030 = vunpack.c.h.b16 %v3402
    %v4031 = vunpack.c.l.b16 %v3403
    %v4032 = vunpack.c.h.b16 %v3403
    %v4033 = vunpack.c.l.b16 %v3404
    %v4034 = vunpack.c.h.b16 %v3404
    %v4035 = vunpack.c.l.b16 %v3405
    %v4036 = vunpack.c.h.b16 %v3405
    %v4037 = vunpack.c.l.b16 %v3406
    %v4038 = vunpack.c.h.b16 %v3406
    %v4039 = vunpack.c.l.b16 %v3407
    %v4040 = vunpack.c.h.b16 %v3407
    %v4041 = vunpack.c.l.b16 %v3408
    %v4042 = vunpack.c.h.b16 %v3408
    %v4043 = vunpack.c.l.b16 %v3409
    %v4044 = vunpack.c.h.b16 %v3409
    %v4045 = vunpack.c.l.b16 %v3410
    %v4046 = vunpack.c.h.b16 %v3410
    %v4047 = vunpack.c.l.b16 %v3411
    %v4048 = vunpack.c.h.b16 %v3411
    %v4049 = vunpack.c.l.b16 %v3412
    %v4050 = vunpack.c.h.b16 %v3412
    %v4051 = vunpack.c.l.b16 %v3413
    %v4052 = vunpack.c.h.b16 %v3413
    %v4053 = vunpack.c.l.b16 %v3414
    %v4054 = vunpack.c.h.b16 %v3414
    %v4055 = vunpack.c.l.b16 %v3415
    %v4056 = vunpack.c.h.b16 %v3415
    %v4057 = vunpack.c.l.b16 %v3416
    %v4058 = vunpack.c.h.b16 %v3416
    %v4059 = vunpack.c.l.b16 %v3417
    %v4060 = vunpack.c.h.b16 %v3417
    %v4061 = vunpack.c.l.b16 %v3418
    %v4062 = vunpack.c.h.b16 %v3418
    %v4063 = vunpack.c.l.b16 %v3419
    %v4064 = vunpack.c.h.b16 %v3419
    %v4065 = vunpack.c.l.b16 %v3420
    %v4066 = vunpack.c.h.b16 %v3420
    %v4067 = vunpack.c.l.b16 %v3421
    %v4068 = vunpack.c.h.b16 %v3421
    %v4069 = vunpack.c.l.b16 %v3422
    %v4070 = vunpack.c.h.b16 %v3422
    %v4071 = vunpack.c.l.b16 %v3423
    %v4072 = vunpack.c.h.b16 %v3423
    %v4073 = vunpack.c.l.b16 %v3424
    %v4074 = vunpack.c.h.b16 %v3424
    %v4075 = vunpack.c.l.b16 %v3425
    %v4076 = vunpack.c.h.b16 %v3425
    %v4077 = vunpack.c.l.b16 %v3426
    %v4078 = vunpack.c.h.b16 %v3426
    %v4079 = vunpack.c.l.b16 %v3427
    %v4080 = vunpack.c.h.b16 %v3427
    %v4081 = vunpack.c.l.b16 %v3428
    %v4082 = vunpack.c.h.b16 %v3428
    %v4083 = vunpack.c.l.b16 %v3429
    %v4084 = vunpack.c.h.b16 %v3429
    %v4085 = vunpack.c.l.b16 %v3430
    %v4086 = vunpack.c.h.b16 %v3430
    %v4087 = vunpack.c.l.b16 %v3431
    %v4088 = vunpack.c.h.b16 %v3431
    %v4089 = vunpack.c.l.b16 %v3432
    %v4090 = vunpack.c.h.b16 %v3432
    %v4091 = vunpack.c.l.b16 %v3433
    %v4092 = vunpack.c.h.b16 %v3433
    %v4093 = vunpack.c.l.b16 %v3434
    %v4094 = vunpack.c.h.b16 %v3434
    %v4095 = vunpack.c.l.b16 %v3435
    %v4096 = vunpack.c.h.b16 %v3435
    %v4097 = vunpack.c.l.b16 %v3436
    %v4098 = vunpack.c.h.b16 %v3436
    %v4099 = vunpack.c.l.b16 %v3437
    %v4100 = vunpack.c.h.b16 %v3437
    %v4101 = vunpack.c.l.b16 %v3438
    %v4102 = vunpack.c.h.b16 %v3438
    %v4103 = vunpack.c.l.b16 %v3439
    %v4104 = vunpack.c.h.b16 %v3439
    %v4105 = vunpack.c.l.b16 %v3440
    %v4106 = vunpack.c.h.b16 %v3440
    %v4107 = vunpack.c.l.b16 %v3441
    %v4108 = vunpack.c.h.b16 %v3441
    %v4109 = vunpack.c.l.b16 %v3442
    %v4110 = vunpack.c.h.b16 %v3442
    %v4111 = vunpack.c.l.b16 %v3443
    %v4112 = vunpack.c.h.b16 %v3443
    %v4113 = vunpack.c.l.b16 %v3444
    %v4114 = vunpack.c.h.b16 %v3444
    %v4115 = vunpack.c.l.b16 %v3445
    %v4116 = vunpack.c.h.b16 %v3445
    %v4117 = vunpack.c.l.b16 %v3446
    %v4118 = vunpack.c.h.b16 %v3446
    %v4119 = vunpack.c.l.b16 %v3447
    %v4120 = vunpack.c.h.b16 %v3447
    %v4121 = vunpack.c.l.b16 %v3448
    %v4122 = vunpack.c.h.b16 %v3448
    %v4123 = vunpack.c.l.b16 %v3449
    %v4124 = vunpack.c.h.b16 %v3449
    %v4125 = vunpack.c.l.b16 %v3450
    %v4126 = vunpack.c.h.b16 %v3450
    %v4127 = vunpack.c.l.b16 %v3451
    %v4128 = vunpack.c.h.b16 %v3451
    %v4129 = vunpack.c.l.b16 %v3452
    %v4130 = vunpack.c.h.b16 %v3452
    %v4131 = vunpack.c.l.b16 %v3453
    %v4132 = vunpack.c.h.b16 %v3453
    %v4133 = vunpack.c.l.b16 %v3454
    %v4134 = vunpack.c.h.b16 %v3454
    %v4135 = vunpack.c.l.b16 %v3455
    %v4136 = vunpack.c.h.b16 %v3455
    %v4137 = vunpack.c.l.b16 %v3456
    %v4138 = vunpack.c.h.b16 %v3456
    %v4139 = vunpack.c.l.b16 %v3457
    %v4140 = vunpack.c.h.b16 %v3457
    %v4141 = vunpack.c.l.b16 %v3458
    %v4142 = vunpack.c.h.b16 %v3458
    %v4143 = vunpack.c.l.b16 %v3459
    %v4144 = vunpack.c.h.b16 %v3459
    %v4145 = vunpack.c.l.b16 %v3460
    %v4146 = vunpack.c.h.b16 %v3460
    %v4147 = vunpack.c.l.b16 %v3461
    %v4148 = vunpack.c.h.b16 %v3461
    %v4149 = vunpack.c.l.b16 %v3462
    %v4150 = vunpack.c.h.b16 %v3462
    %v4151 = vunpack.c.l.b16 %v3463
    %v4152 = vunpack.c.h.b16 %v3463
    %v4153 = vunpack.c.l.b16 %v3464
    %v4154 = vunpack.c.h.b16 %v3464
    %v4155 = vunpack.c.l.b16 %v3465
    %v4156 = vunpack.c.h.b16 %v3465
    %v4157 = vunpack.c.l.b16 %v3466
    %v4158 = vunpack.c.h.b16 %v3466
    %v4159 = vunpack.c.l.b16 %v3467
    %v4160 = vunpack.c.h.b16 %v3467
    %v4161 = vunpack.c.l.b16 %v3468
    %v4162 = vunpack.c.h.b16 %v3468
    %v4163 = vunpack.c.l.b16 %v3469
    %v4164 = vunpack.c.h.b16 %v3469
    %v4165 = vunpack.c.l.b16 %v3470
    %v4166 = vunpack.c.h.b16 %v3470
    %v4167 = vunpack.c.l.b16 %v3471
    %v4168 = vunpack.c.h.b16 %v3471
    %v4169 = vunpack.c.l.b16 %v3472
    %v4170 = vunpack.c.h.b16 %v3472
    %v4171 = vunpack.c.l.b16 %v3473
    %v4172 = vunpack.c.h.b16 %v3473
    %v4173 = vunpack.c.l.b16 %v3474
    %v4174 = vunpack.c.h.b16 %v3474
    %v4175 = vunpack.c.l.b16 %v3475
    %v4176 = vunpack.c.h.b16 %v3475
    %v4177 = vunpack.c.l.b16 %v3476
    %v4178 = vunpack.c.h.b16 %v3476
    %v4179 = vunpack.c.l.b16 %v3477
    %v4180 = vunpack.c.h.b16 %v3477
    %v4181 = vunpack.c.l.b16 %v3478
    %v4182 = vunpack.c.h.b16 %v3478
    %v4183 = vunpack.c.l.b16 %v3479
    %v4184 = vunpack.c.h.b16 %v3479
    %v4185 = vunpack.c.l.b16 %v3480
    %v4186 = vunpack.c.h.b16 %v3480
    %v4187 = vunpack.c.l.b16 %v3481
    %v4188 = vunpack.c.h.b16 %v3481
    %v4189 = vunpack.c.l.b16 %v3482
    %v4190 = vunpack.c.h.b16 %v3482
    %v4191 = vunpack.c.l.b16 %v3483
    %v4192 = vunpack.c.h.b16 %v3483
    %v4193 = vunpack.c.l.b16 %v3484
    %v4194 = vunpack.c.h.b16 %v3484
    %v4195 = vunpack.c.l.b16 %v3485
    %v4196 = vunpack.c.h.b16 %v3485
    %v4197 = vunpack.c.l.b16 %v3486
    %v4198 = vunpack.c.h.b16 %v3486
    %v4199 = vunpack.c.l.b16 %v3487
    %v4200 = vunpack.c.h.b16 %v3487
    %v4201 = vunpack.c.l.b16 %v3488
    %v4202 = vunpack.c.h.b16 %v3488
    %v4203 = vunpack.c.l.b16 %v3489
    %v4204 = vunpack.c.h.b16 %v3489
    %v4205 = vunpack.c.l.b16 %v3490
    %v4206 = vunpack.c.h.b16 %v3490
    %v4207 = vunpack.c.l.b16 %v3491
    %v4208 = vunpack.c.h.b16 %v3491
    %v4209 = vunpack.c.l.b16 %v3492
    %v4210 = vunpack.c.h.b16 %v3492
    %v4211 = vunpack.c.l.b16 %v3493
    %v4212 = vunpack.c.h.b16 %v3493
    %v4213 = vunpack.c.l.b16 %v3494
    %v4214 = vunpack.c.h.b16 %v3494
    %v4215 = vunpack.c.l.b16 %v3495
    %v4216 = vunpack.c.h.b16 %v3495
    %v4217 = vunpack.c.l.b16 %v3496
    %v4218 = vunpack.c.h.b16 %v3496
    %v4219 = vunpack.c.l.b16 %v3497
    %v4220 = vunpack.c.h.b16 %v3497
    %v4221 = vunpack.c.l.b16 %v3498
    %v4222 = vunpack.c.h.b16 %v3498
    %v4223 = vunpack.c.l.b16 %v3499
    %v4224 = vunpack.c.h.b16 %v3499
    %v4225 = vunpack.c.l.b16 %v3500
    %v4226 = vunpack.c.h.b16 %v3500
    %v4227 = vunpack.c.l.b16 %v3501
    %v4228 = vunpack.c.h.b16 %v3501
    %v4229 = vunpack.c.l.b16 %v3502
    %v4230 = vunpack.c.h.b16 %v3502
    %v4231 = vunpack.c.l.b16 %v3503
    %v4232 = vunpack.c.h.b16 %v3503
    %v4233 = vunpack.c.l.b16 %v3504
    %v4234 = vunpack.c.h.b16 %v3504
    %v4235 = vunpack.c.l.b16 %v3505
    %v4236 = vunpack.c.h.b16 %v3505
    %v4237 = vunpack.c.l.b16 %v3506
    %v4238 = vunpack.c.h.b16 %v3506
    %v4239 = vunpack.c.l.b16 %v3507
    %v4240 = vunpack.c.h.b16 %v3507
    %v4241 = vunpack.c.l.b16 %v3508
    %v4242 = vunpack.c.h.b16 %v3508
    %v4243 = vunpack.c.l.b16 %v3509
    %v4244 = vunpack.c.h.b16 %v3509
    %v4245 = vunpack.c.l.b16 %v3510
    %v4246 = vunpack.c.h.b16 %v3510
    %v4247 = vunpack.c.l.b16 %v3511
    %v4248 = vunpack.c.h.b16 %v3511
    %v4249 = vunpack.c.l.b16 %v3512
    %v4250 = vunpack.c.h.b16 %v3512
    %v4251 = vunpack.c.l.b16 %v3513
    %v4252 = vunpack.c.h.b16 %v3513
    %v4253 = vunpack.c.l.b16 %v3514
    %v4254 = vunpack.c.h.b16 %v3514
    %v4255 = vunpack.c.l.b16 %v3515
    %v4256 = vunpack.c.h.b16 %v3515
    %v4257 = vunpack.c.l.b16 %v3516
    %v4258 = vunpack.c.h.b16 %v3516
    %v4259 = vunpack.c.l.b16 %v3517
    %v4260 = vunpack.c.h.b16 %v3517
    %v4261 = vunpack.c.l.b16 %v3518
    %v4262 = vunpack.c.h.b16 %v3518
    %v4263 = vunpack.c.l.b16 %v3519
    %v4264 = vunpack.c.h.b16 %v3519
    %v4265 = vunpack.c.l.b16 %v3520
    %v4266 = vunpack.c.h.b16 %v3520
    %v4267 = vunpack.c.l.b16 %v3521
    %v4268 = vunpack.c.h.b16 %v3521
    %v4269 = vunpack.c.l.b16 %v3522
    %v4270 = vunpack.c.h.b16 %v3522
    %v4271 = vunpack.c.l.b16 %v3523
    %v4272 = vunpack.c.h.b16 %v3523
    %v4273 = vunpack.c.l.b16 %v3524
    %v4274 = vunpack.c.h.b16 %v3524
    %v4275 = vunpack.c.l.b16 %v3525
    %v4276 = vunpack.c.h.b16 %v3525
    %v4277 = vunpack.c.l.b16 %v3526
    %v4278 = vunpack.c.h.b16 %v3526
    %v4279 = vunpack.c.l.b16 %v3527
    %v4280 = vunpack.c.h.b16 %v3527
    %v4281 = vunpack.c.l.b16 %v3528
    %v4282 = vunpack.c.h.b16 %v3528
    %v4283 = vunpack.c.l.b16 %v3529
    %v4284 = vunpack.c.h.b16 %v3529
    %v4285 = vunpack.c.l.b16 %v3530
    %v4286 = vunpack.c.h.b16 %v3530
    %v4287 = vunpack.c.l.b16 %v3531
    %v4288 = vunpack.c.h.b16 %v3531
    %v4289 = vunpack.c.l.b16 %v3532
    %v4290 = vunpack.c.h.b16 %v3532
    %v4291 = vunpack.c.l.b16 %v3533
    %v4292 = vunpack.c.h.b16 %v3533
    %v4293 = vunpack.c.l.b16 %v3534
    %v4294 = vunpack.c.h.b16 %v3534
    %v4295 = vunpack.c.l.b16 %v3535
    %v4296 = vunpack.c.h.b16 %v3535
    %v4297 = vunpack.c.l.b16 %v3536
    %v4298 = vunpack.c.h.b16 %v3536
    %v4299 = vunpack.c.l.b16 %v3537
    %v4300 = vunpack.c.h.b16 %v3537
    %v4301 = vunpack.c.l.b16 %v3538
    %v4302 = vunpack.c.h.b16 %v3538
    %v4303 = vunpack.c.l.b16 %v3539
    %v4304 = vunpack.c.h.b16 %v3539
    %v4305 = vunpack.c.l.b16 %v3540
    %v4306 = vunpack.c.h.b16 %v3540
    %v4307 = vunpack.c.l.b16 %v3541
    %v4308 = vunpack.c.h.b16 %v3541
    %v4309 = vunpack.c.l.b16 %v3542
    %v4310 = vunpack.c.h.b16 %v3542
    %v4311 = vunpack.c.l.b16 %v3543
    %v4312 = vunpack.c.h.b16 %v3543
    %v4313 = vunpack.c.l.b16 %v3544
    %v4314 = vunpack.c.h.b16 %v3544
    %v4315 = vunpack.c.l.b16 %v3545
    %v4316 = vunpack.c.h.b16 %v3545
    %v4317 = vunpack.c.l.b16 %v3546
    %v4318 = vunpack.c.h.b16 %v3546
    %v4319 = vunpack.c.l.b16 %v3547
    %v4320 = vunpack.c.h.b16 %v3547
    %v4321 = vunpack.c.l.b16 %v3548
    %v4322 = vunpack.c.h.b16 %v3548
    %v4323 = vunpack.c.l.b16 %v3549
    %v4324 = vunpack.c.h.b16 %v3549
    %v4325 = vunpack.c.l.b16 %v3550
    %v4326 = vunpack.c.h.b16 %v3550
    %v4327 = vunpack.c.l.b16 %v3551
    %v4328 = vunpack.c.h.b16 %v3551
    %v4329 = vunpack.c.l.b16 %v3552
    %v4330 = vunpack.c.h.b16 %v3552
    %v4331 = vpack.c.b16 %v3823, %v3819
    %v4332 = vpack.c.b16 %v3824, %v3820
    %v4333 = vpack.c.b16 %v3825, %v3821
    %v4334 = vpack.c.b16 %v3826, %v3822
    %v4335 = vpack.c.b16 %v3831, %v3827
    %v4336 = vpack.c.b16 %v3832, %v3828
    %v4337 = vpack.c.b16 %v3833, %v3829
    %v4338 = vpack.c.b16 %v3834, %v3830
    %v4339 = vpack.c.b16 %v3839, %v3835
    %v4340 = vpack.c.b16 %v3840, %v3836
    %v4341 = vpack.c.b16 %v3841, %v3837
    %v4342 = vpack.c.b16 %v3842, %v3838
    %v4343 = vpack.c.b16 %v3847, %v3843
    %v4344 = vpack.c.b16 %v3848, %v3844
    %v4345 = vpack.c.b16 %v3849, %v3845
    %v4346 = vpack.c.b16 %v3850, %v3846
    %v4347 = vpack.c.b16 %v3855, %v3851
    %v4348 = vpack.c.b16 %v3856, %v3852
    %v4349 = vpack.c.b16 %v3857, %v3853
    %v4350 = vpack.c.b16 %v3858, %v3854
    %v4351 = vpack.c.b16 %v3863, %v3859
    %v4352 = vpack.c.b16 %v3864, %v3860
    %v4353 = vpack.c.b16 %v3865, %v3861
    %v4354 = vpack.c.b16 %v3866, %v3862
    %v4355 = vpack.c.b16 %v3871, %v3867
    %v4356 = vpack.c.b16 %v3872, %v3868
    %v4357 = vpack.c.b16 %v3873, %v3869
    %v4358 = vpack.c.b16 %v3874, %v3870
    %v4359 = vpack.c.b16 %v3879, %v3875
    %v4360 = vpack.c.b16 %v3880, %v3876
    %v4361 = vpack.c.b16 %v3881, %v3877
    %v4362 = vpack.c.b16 %v3882, %v3878
    %v4363 = vpack.c.b16 %v3887, %v3883
    %v4364 = vpack.c.b16 %v3888, %v3884
    %v4365 = vpack.c.b16 %v3889, %v3885
    %v4366 = vpack.c.b16 %v3890, %v3886
    %v4367 = vpack.c.b16 %v3895, %v3891
    %v4368 = vpack.c.b16 %v3896, %v3892
    %v4369 = vpack.c.b16 %v3897, %v3893
    %v4370 = vpack.c.b16 %v3898, %v3894
    %v4371 = vpack.c.b16 %v3903, %v3899
    %v4372 = vpack.c.b16 %v3904, %v3900
    %v4373 = vpack.c.b16 %v3905, %v3901
    %v4374 = vpack.c.b16 %v3906, %v3902
    %v4375 = vpack.c.b16 %v3911, %v3907
    %v4376 = vpack.c.b16 %v3912, %v3908
    %v4377 = vpack.c.b16 %v3913, %v3909
    %v4378 = vpack.c.b16 %v3914, %v3910
    %v4379 = vpack.c.b16 %v3919, %v3915
    %v4380 = vpack.c.b16 %v3920, %v3916
    %v4381 = vpack.c.b16 %v3921, %v3917
    %v4382 = vpack.c.b16 %v3922, %v3918
    %v4383 = vpack.c.b16 %v3927, %v3923
    %v4384 = vpack.c.b16 %v3928, %v3924
    %v4385 = vpack.c.b16 %v3929, %v3925
    %v4386 = vpack.c.b16 %v3930, %v3926
    %v4387 = vpack.c.b16 %v3935, %v3931
    %v4388 = vpack.c.b16 %v3936, %v3932
    %v4389 = vpack.c.b16 %v3937, %v3933
    %v4390 = vpack.c.b16 %v3938, %v3934
    %v4391 = vpack.c.b16 %v3943, %v3939
    %v4392 = vpack.c.b16 %v3944, %v3940
    %v4393 = vpack.c.b16 %v3945, %v3941
    %v4394 = vpack.c.b16 %v3946, %v3942
    %v4395 = vpack.c.b16 %v3951, %v3947
    %v4396 = vpack.c.b16 %v3952, %v3948
    %v4397 = vpack.c.b16 %v3953, %v3949
    %v4398 = vpack.c.b16 %v3954, %v3950
    %v4399 = vpack.c.b16 %v3959, %v3955
    %v4400 = vpack.c.b16 %v3960, %v3956
    %v4401 = vpack.c.b16 %v3961, %v3957
    %v4402 = vpack.c.b16 %v3962, %v3958
    %v4403 = vpack.c.b16 %v3967, %v3963
    %v4404 = vpack.c.b16 %v3968, %v3964
    %v4405 = vpack.c.b16 %v3969, %v3965
    %v4406 = vpack.c.b16 %v3970, %v3966
    %v4407 = vpack.c.b16 %v3975, %v3971
    %v4408 = vpack.c.b16 %v3976, %v3972
    %v4409 = vpack.c.b16 %v3977, %v3973
    %v4410 = vpack.c.b16 %v3978, %v3974
    %v4411 = vpack.c.b16 %v3983, %v3979
    %v4412 = vpack.c.b16 %v3984, %v3980
    %v4413 = vpack.c.b16 %v3985, %v3981
    %v4414 = vpack.c.b16 %v3986, %v3982
    %v4415 = vpack.c.b16 %v3991, %v3987
    %v4416 = vpack.c.b16 %v3992, %v3988
    %v4417 = vpack.c.b16 %v3993, %v3989
    %v4418 = vpack.c.b16 %v3994, %v3990
    %v4419 = vpack.c.b16 %v3999, %v3995
    %v4420 = vpack.c.b16 %v4000, %v3996
    %v4421 = vpack.c.b16 %v4001, %v3997
    %v4422 = vpack.c.b16 %v4002, %v3998
    %v4423 = vpack.c.b16 %v4007, %v4003
    %v4424 = vpack.c.b16 %v4008, %v4004
    %v4425 = vpack.c.b16 %v4009, %v4005
    %v4426 = vpack.c.b16 %v4010, %v4006
    %v4427 = vpack.c.b16 %v4015, %v4011
    %v4428 = vpack.c.b16 %v4016, %v4012
    %v4429 = vpack.c.b16 %v4017, %v4013
    %v4430 = vpack.c.b16 %v4018, %v4014
    %v4431 = vpack.c.b16 %v4023, %v4019
    %v4432 = vpack.c.b16 %v4024, %v4020
    %v4433 = vpack.c.b16 %v4025, %v4021
    %v4434 = vpack.c.b16 %v4026, %v4022
    %v4435 = vpack.c.b16 %v4031, %v4027
    %v4436 = vpack.c.b16 %v4032, %v4028
    %v4437 = vpack.c.b16 %v4033, %v4029
    %v4438 = vpack.c.b16 %v4034, %v4030
    %v4439 = vpack.c.b16 %v4039, %v4035
    %v4440 = vpack.c.b16 %v4040, %v4036
    %v4441 = vpack.c.b16 %v4041, %v4037
    %v4442 = vpack.c.b16 %v4042, %v4038
    %v4443 = vpack.c.b16 %v4047, %v4043
    %v4444 = vpack.c.b16 %v4048, %v4044
    %v4445 = vpack.c.b16 %v4049, %v4045
    %v4446 = vpack.c.b16 %v4050, %v4046
    %v4447 = vpack.c.b16 %v4055, %v4051
    %v4448 = vpack.c.b16 %v4056, %v4052
    %v4449 = vpack.c.b16 %v4057, %v4053
    %v4450 = vpack.c.b16 %v4058, %v4054
    %v4451 = vpack.c.b16 %v4063, %v4059
    %v4452 = vpack.c.b16 %v4064, %v4060
    %v4453 = vpack.c.b16 %v4065, %v4061
    %v4454 = vpack.c.b16 %v4066, %v4062
    %v4455 = vpack.c.b16 %v4071, %v4067
    %v4456 = vpack.c.b16 %v4072, %v4068
    %v4457 = vpack.c.b16 %v4073, %v4069
    %v4458 = vpack.c.b16 %v4074, %v4070
    %v4459 = vpack.c.b16 %v4079, %v4075
    %v4460 = vpack.c.b16 %v4080, %v4076
    %v4461 = vpack.c.b16 %v4081, %v4077
    %v4462 = vpack.c.b16 %v4082, %v4078
    %v4463 = vpack.c.b16 %v4087, %v4083
    %v4464 = vpack.c.b16 %v4088, %v4084
    %v4465 = vpack.c.b16 %v4089, %v4085
    %v4466 = vpack.c.b16 %v4090, %v4086
    %v4467 = vpack.c.b16 %v4095, %v4091
    %v4468 = vpack.c.b16 %v4096, %v4092
    %v4469 = vpack.c.b16 %v4097, %v4093
    %v4470 = vpack.c.b16 %v4098, %v4094
    %v4471 = vpack.c.b16 %v4103, %v4099
    %v4472 = vpack.c.b16 %v4104, %v4100
    %v4473 = vpack.c.b16 %v4105, %v4101
    %v4474 = vpack.c.b16 %v4106, %v4102
    %v4475 = vpack.c.b16 %v4111, %v4107
    %v4476 = vpack.c.b16 %v4112, %v4108
    %v4477 = vpack.c.b16 %v4113, %v4109
    %v4478 = vpack.c.b16 %v4114, %v4110
    %v4479 = vpack.c.b16 %v4119, %v4115
    %v4480 = vpack.c.b16 %v4120, %v4116
    %v4481 = vpack.c.b16 %v4121, %v4117
    %v4482 = vpack.c.b16 %v4122, %v4118
    %v4483 = vpack.c.b16 %v4127, %v4123
    %v4484 = vpack.c.b16 %v4128, %v4124
    %v4485 = vpack.c.b16 %v4129, %v4125
    %v4486 = vpack.c.b16 %v4130, %v4126
    %v4487 = vpack.c.b16 %v4135, %v4131
    %v4488 = vpack.c.b16 %v4136, %v4132
    %v4489 = vpack.c.b16 %v4137, %v4133
    %v4490 = vpack.c.b16 %v4138, %v4134
    %v4491 = vpack.c.b16 %v4143, %v4139
    %v4492 = vpack.c.b16 %v4144, %v4140
    %v4493 = vpack.c.b16 %v4145, %v4141
    %v4494 = vpack.c.b16 %v4146, %v4142
    %v4495 = vpack.c.b16 %v4151, %v4147
    %v4496 = vpack.c.b16 %v4152, %v4148
    %v4497 = vpack.c.b16 %v4153, %v4149
    %v4498 = vpack.c.b16 %v4154, %v4150
    %v4499 = vpack.c.b16 %v4159, %v4155
    %v4500 = vpack.c.b16 %v4160, %v4156
    %v4501 = vpack.c.b16 %v4161, %v4157
    %v4502 = vpack.c.b16 %v4162, %v4158
    %v4503 = vpack.c.b16 %v4167, %v4163
    %v4504 = vpack.c.b16 %v4168, %v4164
    %v4505 = vpack.c.b16 %v4169, %v4165
    %v4506 = vpack.c.b16 %v4170, %v4166
    %v4507 = vpack.c.b16 %v4175, %v4171
    %v4508 = vpack.c.b16 %v4176, %v4172
    %v4509 = vpack.c.b16 %v4177, %v4173
    %v4510 = vpack.c.b16 %v4178, %v4174
    %v4511 = vpack.c.b16 %v4183, %v4179
    %v4512 = vpack.c.b16 %v4184, %v4180
    %v4513 = vpack.c.b16 %v4185, %v4181
    %v4514 = vpack.c.b16 %v4186, %v4182
    %v4515 = vpack.c.b16 %v4191, %v4187
    %v4516 = vpack.c.b16 %v4192, %v4188
    %v4517 = vpack.c.b16 %v4193, %v4189
    %v4518 = vpack.c.b16 %v4194, %v4190
    %v4519 = vpack.c.b16 %v4199, %v4195
    %v4520 = vpack.c.b16 %v4200, %v4196
    %v4521 = vpack.c.b16 %v4201, %v4197
    %v4522 = vpack.c.b16 %v4202, %v4198
    %v4523 = vpack.c.b16 %v4207, %v4203
    %v4524 = vpack.c.b16 %v4208, %v4204
    %v4525 = vpack.c.b16 %v4209, %v4205
    %v4526 = vpack.c.b16 %v4210, %v4206
    %v4527 = vpack.c.b16 %v4215, %v4211
    %v4528 = vpack.c.b16 %v4216, %v4212
    %v4529 = vpack.c.b16 %v4217, %v4213
    %v4530 = vpack.c.b16 %v4218, %v4214
    %v4531 = vpack.c.b16 %v4223, %v4219
    %v4532 = vpack.c.b16 %v4224, %v4220
    %v4533 = vpack.c.b16 %v4225, %v4221
    %v4534 = vpack.c.b16 %v4226, %v4222
    %v4535 = vpack.c.b16 %v4231, %v4227
    %v4536 = vpack.c.b16 %v4232, %v4228
    %v4537 = vpack.c.b16 %v4233, %v4229
    %v4538 = vpack.c.b16 %v4234, %v4230
    %v4539 = vpack.c.b16 %v4239, %v4235
    %v4540 = vpack.c.b16 %v4240, %v4236
    %v4541 = vpack.c.b16 %v4241, %v4237
    %v4542 = vpack.c.b16 %v4242, %v4238
    %v4543 = vpack.c.b16 %v4247, %v4243
    %v4544 = vpack.c.b16 %v4248, %v4244
    %v4545 = vpack.c.b16 %v4249, %v4245
    %v4546 = vpack.c.b16 %v4250, %v4246
    %v4547 = vpack.c.b16 %v4255, %v4251
    %v4548 = vpack.c.b16 %v4256, %v4252
    %v4549 = vpack.c.b16 %v4257, %v4253
    %v4550 = vpack.c.b16 %v4258, %v4254
    %v4551 = vpack.c.b16 %v4263, %v4259
    %v4552 = vpack.c.b16 %v4264, %v4260
    %v4553 = vpack.c.b16 %v4265, %v4261
    %v4554 = vpack.c.b16 %v4266, %v4262
    %v4555 = vpack.c.b16 %v4271, %v4267
    %v4556 = vpack.c.b16 %v4272, %v4268
    %v4557 = vpack.c.b16 %v4273, %v4269
    %v4558 = vpack.c.b16 %v4274, %v4270
    %v4559 = vpack.c.b16 %v4279, %v4275
    %v4560 = vpack.c.b16 %v4280, %v4276
    %v4561 = vpack.c.b16 %v4281, %v4277
    %v4562 = vpack.c.b16 %v4282, %v4278
    %v4563 = vpack.c.b16 %v4287, %v4283
    %v4564 = vpack.c.b16 %v4288, %v4284
    %v4565 = vpack.c.b16 %v4289, %v4285
    %v4566 = vpack.c.b16 %v4290, %v4286
    %v4567 = vpack.c.b16 %v4295, %v4291
    %v4568 = vpack.c.b16 %v4296, %v4292
    %v4569 = vpack.c.b16 %v4297, %v4293
    %v4570 = vpack.c.b16 %v4298, %v4294
    %v4571 = vpack.c.b16 %v4303, %v4299
    %v4572 = vpack.c.b16 %v4304, %v4300
    %v4573 = vpack.c.b16 %v4305, %v4301
    %v4574 = vpack.c.b16 %v4306, %v4302
    %v4575 = vpack.c.b16 %v4311, %v4307
    %v4576 = vpack.c.b16 %v4312, %v4308
    %v4577 = vpack.c.b16 %v4313, %v4309
    %v4578 = vpack.c.b16 %v4314, %v4310
    %v4579 = vpack.c.b16 %v4319, %v4315
    %v4580 = vpack.c.b16 %v4320, %v4316
    %v4581 = vpack.c.b16 %v4321, %v4317
    %v4582 = vpack.c.b16 %v4322, %v4318
    %v4583 = vpack.c.b16 %v4327, %v4323
    %v4584 = vpack.c.b16 %v4328, %v4324
    %v4585 = vpack.c.b16 %v4329, %v4325
    %v4586 = vpack.c.b16 %v4330, %v4326
    %4843 = vmatpush.bf16.msra.mxu0 %v4359
    %4844 = vmatpush.bf16.msra.mxu0 %v4355
    %4845 = vmatpush.bf16.msra.mxu0 %v4351
    %4846 = vmatpush.bf16.msra.mxu0 %v4347
    %4847 = vmatpush.bf16.msra.mxu0 %v4343
    %4848 = vmatpush.bf16.msra.mxu0 %v4339
    %4849 = vmatpush.bf16.msra.mxu0 %v4335
    %4850 = vmatpush.bf16.msra.mxu0 %v4331
    %4851 = vmatmul.bf16.gmra.mxu0 %v3289
    %v4852 = vpop.f32.mrf.mxu0
    %v4853 = vadd.f32 %v3555, %v4852
    %v4854 = vpop.f32.mrf.mxu0
    %4855 = vdwg.mxu0
    %4856 = vmatpush.bf16.msra.mxu0 %v4391
    %4857 = vmatpush.bf16.msra.mxu0 %v4387
    %4858 = vmatpush.bf16.msra.mxu0 %v4383
    %4859 = vmatpush.bf16.msra.mxu0 %v4379
    %4860 = vmatpush.bf16.msra.mxu0 %v4375
    %4861 = vmatpush.bf16.msra.mxu0 %v4371
    %4862 = vmatpush.bf16.msra.mxu0 %v4367
    %4863 = vmatpush.bf16.msra.mxu0 %v4363
    %4864 = vmatmul.bf16.gmra.mxu0 %v3290
    %v4865 = vpop.f32.mrf.mxu0
    %v4866 = vadd.f32 %v4853, %v4865
    %v4867 = vpop.f32.mrf.mxu0
    %4868 = vdwg.mxu0
    %4869 = vmatpush.bf16.msra.mxu0 %v4423
    %4870 = vmatpush.bf16.msra.mxu0 %v4419
    %4871 = vmatpush.bf16.msra.mxu0 %v4415
    %4872 = vmatpush.bf16.msra.mxu0 %v4411
    %4873 = vmatpush.bf16.msra.mxu0 %v4407
    %4874 = vmatpush.bf16.msra.mxu0 %v4403
    %4875 = vmatpush.bf16.msra.mxu0 %v4399
    %4876 = vmatpush.bf16.msra.mxu0 %v4395
    %4877 = vmatmul.bf16.gmra.mxu0 %v3291
    %v4878 = vpop.f32.mrf.mxu0
    %v4879 = vadd.f32 %v4866, %v4878
    %v4880 = vpop.f32.mrf.mxu0
    %4881 = vdwg.mxu0
    %4882 = vmatpush.bf16.msra.mxu0 %v4455
    %4883 = vmatpush.bf16.msra.mxu0 %v4451
    %4884 = vmatpush.bf16.msra.mxu0 %v4447
    %4885 = vmatpush.bf16.msra.mxu0 %v4443
    %4886 = vmatpush.bf16.msra.mxu0 %v4439
    %4887 = vmatpush.bf16.msra.mxu0 %v4435
    %4888 = vmatpush.bf16.msra.mxu0 %v4431
    %4889 = vmatpush.bf16.msra.mxu0 %v4427
    %4890 = vmatmul.bf16.gmra.mxu0 %v3292
    %v4891 = vpop.f32.mrf.mxu0
    %v4892 = vadd.f32 %v4879, %v4891
    %v4893 = vpop.f32.mrf.mxu0
    %4894 = vdwg.mxu0
    %4895 = vmatpush.bf16.msra.mxu0 %v4487
    %4896 = vmatpush.bf16.msra.mxu0 %v4483
    %4897 = vmatpush.bf16.msra.mxu0 %v4479
    %4898 = vmatpush.bf16.msra.mxu0 %v4475
    %4899 = vmatpush.bf16.msra.mxu0 %v4471
    %4900 = vmatpush.bf16.msra.mxu0 %v4467
    %4901 = vmatpush.bf16.msra.mxu0 %v4463
    %4902 = vmatpush.bf16.msra.mxu0 %v4459
    %4903 = vmatmul.bf16.gmra.mxu0 %v3293
    %v4904 = vpop.f32.mrf.mxu0
    %v4905 = vadd.f32 %v4892, %v4904
    %v4906 = vpop.f32.mrf.mxu0
    %4907 = vdwg.mxu0
    %4908 = vmatpush.bf16.msra.mxu0 %v4519
    %4909 = vmatpush.bf16.msra.mxu0 %v4515
    %4910 = vmatpush.bf16.msra.mxu0 %v4511
    %4911 = vmatpush.bf16.msra.mxu0 %v4507
    %4912 = vmatpush.bf16.msra.mxu0 %v4503
    %4913 = vmatpush.bf16.msra.mxu0 %v4499
    %4914 = vmatpush.bf16.msra.mxu0 %v4495
    %4915 = vmatpush.bf16.msra.mxu0 %v4491
    %4916 = vmatmul.bf16.gmra.mxu0 %v3294
    %v4917 = vpop.f32.mrf.mxu0
    %v4918 = vadd.f32 %v4905, %v4917
    %v4919 = vpop.f32.mrf.mxu0
    %4920 = vdwg.mxu0
    %4921 = vmatpush.bf16.msra.mxu0 %v4551
    %4922 = vmatpush.bf16.msra.mxu0 %v4547
    %4923 = vmatpush.bf16.msra.mxu0 %v4543
    %4924 = vmatpush.bf16.msra.mxu0 %v4539
    %4925 = vmatpush.bf16.msra.mxu0 %v4535
    %4926 = vmatpush.bf16.msra.mxu0 %v4531
    %4927 = vmatpush.bf16.msra.mxu0 %v4527
    %4928 = vmatpush.bf16.msra.mxu0 %v4523
    %4929 = vmatmul.bf16.gmra.mxu0 %v3295
    %v4930 = vpop.f32.mrf.mxu0
    %v4931 = vadd.f32 %v4918, %v4930
    %v4932 = vpop.f32.mrf.mxu0
    %4933 = vdwg.mxu0
    %4934 = vmatpush.bf16.msra.mxu0 %v4583
    %4935 = vmatpush.bf16.msra.mxu0 %v4579
    %4936 = vmatpush.bf16.msra.mxu0 %v4575
    %4937 = vmatpush.bf16.msra.mxu0 %v4571
    %4938 = vmatpush.bf16.msra.mxu0 %v4567
    %4939 = vmatpush.bf16.msra.mxu0 %v4563
    %4940 = vmatpush.bf16.msra.mxu0 %v4559
    %4941 = vmatpush.bf16.msra.mxu0 %v4555
    %4942 = vmatmul.bf16.gmra.mxu0 %v3296
    %v4943 = vpop.f32.mrf.mxu0
    %v4944 = vadd.f32 %v4931, %v4943
    %v4945 = vpop.f32.mrf.mxu0
    %4946 = vdwg.mxu0
    %4947 = vmatpush.bf16.msra.mxu0 %v4360
    %4948 = vmatpush.bf16.msra.mxu0 %v4356
    %4949 = vmatpush.bf16.msra.mxu0 %v4352
    %4950 = vmatpush.bf16.msra.mxu0 %v4348
    %4951 = vmatpush.bf16.msra.mxu0 %v4344
    %4952 = vmatpush.bf16.msra.mxu0 %v4340
    %4953 = vmatpush.bf16.msra.mxu0 %v4336
    %4954 = vmatpush.bf16.msra.mxu0 %v4332
    %4955 = vmatmul.bf16.gmra.mxu0 %v3289
    %v4956 = vpop.f32.mrf.mxu0
    %v4957 = vadd.f32 %v3556, %v4956
    %v4958 = vpop.f32.mrf.mxu0
    %4959 = vdwg.mxu0
    %4960 = vmatpush.bf16.msra.mxu0 %v4392
    %4961 = vmatpush.bf16.msra.mxu0 %v4388
    %4962 = vmatpush.bf16.msra.mxu0 %v4384
    %4963 = vmatpush.bf16.msra.mxu0 %v4380
    %4964 = vmatpush.bf16.msra.mxu0 %v4376
    %4965 = vmatpush.bf16.msra.mxu0 %v4372
    %4966 = vmatpush.bf16.msra.mxu0 %v4368
    %4967 = vmatpush.bf16.msra.mxu0 %v4364
    %4968 = vmatmul.bf16.gmra.mxu0 %v3290
    %v4969 = vpop.f32.mrf.mxu0
    %v4970 = vadd.f32 %v4957, %v4969
    %v4971 = vpop.f32.mrf.mxu0
    %4972 = vdwg.mxu0
    %4973 = vmatpush.bf16.msra.mxu0 %v4424
    %4974 = vmatpush.bf16.msra.mxu0 %v4420
    %4975 = vmatpush.bf16.msra.mxu0 %v4416
    %4976 = vmatpush.bf16.msra.mxu0 %v4412
    %4977 = vmatpush.bf16.msra.mxu0 %v4408
    %4978 = vmatpush.bf16.msra.mxu0 %v4404
    %4979 = vmatpush.bf16.msra.mxu0 %v4400
    %4980 = vmatpush.bf16.msra.mxu0 %v4396
    %4981 = vmatmul.bf16.gmra.mxu0 %v3291
    %v4982 = vpop.f32.mrf.mxu0
    %v4983 = vadd.f32 %v4970, %v4982
    %v4984 = vpop.f32.mrf.mxu0
    %4985 = vdwg.mxu0
    %4986 = vmatpush.bf16.msra.mxu0 %v4456
    %4987 = vmatpush.bf16.msra.mxu0 %v4452
    %4988 = vmatpush.bf16.msra.mxu0 %v4448
    %4989 = vmatpush.bf16.msra.mxu0 %v4444
    %4990 = vmatpush.bf16.msra.mxu0 %v4440
    %4991 = vmatpush.bf16.msra.mxu0 %v4436
    %4992 = vmatpush.bf16.msra.mxu0 %v4432
    %4993 = vmatpush.bf16.msra.mxu0 %v4428
    %4994 = vmatmul.bf16.gmra.mxu0 %v3292
    %v4995 = vpop.f32.mrf.mxu0
    %v4996 = vadd.f32 %v4983, %v4995
    %v4997 = vpop.f32.mrf.mxu0
    %4998 = vdwg.mxu0
    %4999 = vmatpush.bf16.msra.mxu0 %v4488
    %5000 = vmatpush.bf16.msra.mxu0 %v4484
    %5001 = vmatpush.bf16.msra.mxu0 %v4480
    %5002 = vmatpush.bf16.msra.mxu0 %v4476
    %5003 = vmatpush.bf16.msra.mxu0 %v4472
    %5004 = vmatpush.bf16.msra.mxu0 %v4468
    %5005 = vmatpush.bf16.msra.mxu0 %v4464
    %5006 = vmatpush.bf16.msra.mxu0 %v4460
    %5007 = vmatmul.bf16.gmra.mxu0 %v3293
    %v5008 = vpop.f32.mrf.mxu0
    %v5009 = vadd.f32 %v4996, %v5008
    %v5010 = vpop.f32.mrf.mxu0
    %5011 = vdwg.mxu0
    %5012 = vmatpush.bf16.msra.mxu0 %v4520
    %5013 = vmatpush.bf16.msra.mxu0 %v4516
    %5014 = vmatpush.bf16.msra.mxu0 %v4512
    %5015 = vmatpush.bf16.msra.mxu0 %v4508
    %5016 = vmatpush.bf16.msra.mxu0 %v4504
    %5017 = vmatpush.bf16.msra.mxu0 %v4500
    %5018 = vmatpush.bf16.msra.mxu0 %v4496
    %5019 = vmatpush.bf16.msra.mxu0 %v4492
    %5020 = vmatmul.bf16.gmra.mxu0 %v3294
    %v5021 = vpop.f32.mrf.mxu0
    %v5022 = vadd.f32 %v5009, %v5021
    %v5023 = vpop.f32.mrf.mxu0
    %5024 = vdwg.mxu0
    %5025 = vmatpush.bf16.msra.mxu0 %v4552
    %5026 = vmatpush.bf16.msra.mxu0 %v4548
    %5027 = vmatpush.bf16.msra.mxu0 %v4544
    %5028 = vmatpush.bf16.msra.mxu0 %v4540
    %5029 = vmatpush.bf16.msra.mxu0 %v4536
    %5030 = vmatpush.bf16.msra.mxu0 %v4532
    %5031 = vmatpush.bf16.msra.mxu0 %v4528
    %5032 = vmatpush.bf16.msra.mxu0 %v4524
    %5033 = vmatmul.bf16.gmra.mxu0 %v3295
    %v5034 = vpop.f32.mrf.mxu0
    %v5035 = vadd.f32 %v5022, %v5034
    %v5036 = vpop.f32.mrf.mxu0
    %5037 = vdwg.mxu0
    %5038 = vmatpush.bf16.msra.mxu0 %v4584
    %5039 = vmatpush.bf16.msra.mxu0 %v4580
    %5040 = vmatpush.bf16.msra.mxu0 %v4576
    %5041 = vmatpush.bf16.msra.mxu0 %v4572
    %5042 = vmatpush.bf16.msra.mxu0 %v4568
    %5043 = vmatpush.bf16.msra.mxu0 %v4564
    %5044 = vmatpush.bf16.msra.mxu0 %v4560
    %5045 = vmatpush.bf16.msra.mxu0 %v4556
    %5046 = vmatmul.bf16.gmra.mxu0 %v3296
    %v5047 = vpop.f32.mrf.mxu0
    %v5048 = vadd.f32 %v5035, %v5047
    %v5049 = vpop.f32.mrf.mxu0
    %5050 = vdwg.mxu0
    %5051 = vmatpush.bf16.msra.mxu0 %v4361
    %5052 = vmatpush.bf16.msra.mxu0 %v4357
    %5053 = vmatpush.bf16.msra.mxu0 %v4353
    %5054 = vmatpush.bf16.msra.mxu0 %v4349
    %5055 = vmatpush.bf16.msra.mxu0 %v4345
    %5056 = vmatpush.bf16.msra.mxu0 %v4341
    %5057 = vmatpush.bf16.msra.mxu0 %v4337
    %5058 = vmatpush.bf16.msra.mxu0 %v4333
    %5059 = vmatmul.bf16.gmra.mxu0 %v3289
    %v5060 = vpop.f32.mrf.mxu0
    %v5061 = vadd.f32 %v3557, %v5060
    %v5062 = vpop.f32.mrf.mxu0
    %5063 = vdwg.mxu0
    %5064 = vmatpush.bf16.msra.mxu0 %v4393
    %5065 = vmatpush.bf16.msra.mxu0 %v4389
    %5066 = vmatpush.bf16.msra.mxu0 %v4385
    %5067 = vmatpush.bf16.msra.mxu0 %v4381
    %5068 = vmatpush.bf16.msra.mxu0 %v4377
    %5069 = vmatpush.bf16.msra.mxu0 %v4373
    %5070 = vmatpush.bf16.msra.mxu0 %v4369
    %5071 = vmatpush.bf16.msra.mxu0 %v4365
    %5072 = vmatmul.bf16.gmra.mxu0 %v3290
    %v5073 = vpop.f32.mrf.mxu0
    %v5074 = vadd.f32 %v5061, %v5073
    %v5075 = vpop.f32.mrf.mxu0
    %5076 = vdwg.mxu0
    %5077 = vmatpush.bf16.msra.mxu0 %v4425
    %5078 = vmatpush.bf16.msra.mxu0 %v4421
    %5079 = vmatpush.bf16.msra.mxu0 %v4417
    %5080 = vmatpush.bf16.msra.mxu0 %v4413
    %5081 = vmatpush.bf16.msra.mxu0 %v4409
    %5082 = vmatpush.bf16.msra.mxu0 %v4405
    %5083 = vmatpush.bf16.msra.mxu0 %v4401
    %5084 = vmatpush.bf16.msra.mxu0 %v4397
    %5085 = vmatmul.bf16.gmra.mxu0 %v3291
    %v5086 = vpop.f32.mrf.mxu0
    %v5087 = vadd.f32 %v5074, %v5086
    %v5088 = vpop.f32.mrf.mxu0
    %5089 = vdwg.mxu0
    %5090 = vmatpush.bf16.msra.mxu0 %v4457
    %5091 = vmatpush.bf16.msra.mxu0 %v4453
    %5092 = vmatpush.bf16.msra.mxu0 %v4449
    %5093 = vmatpush.bf16.msra.mxu0 %v4445
    %5094 = vmatpush.bf16.msra.mxu0 %v4441
    %5095 = vmatpush.bf16.msra.mxu0 %v4437
    %5096 = vmatpush.bf16.msra.mxu0 %v4433
    %5097 = vmatpush.bf16.msra.mxu0 %v4429
    %5098 = vmatmul.bf16.gmra.mxu0 %v3292
    %v5099 = vpop.f32.mrf.mxu0
    %v5100 = vadd.f32 %v5087, %v5099
    %v5101 = vpop.f32.mrf.mxu0
    %5102 = vdwg.mxu0
    %5103 = vmatpush.bf16.msra.mxu0 %v4489
    %5104 = vmatpush.bf16.msra.mxu0 %v4485
    %5105 = vmatpush.bf16.msra.mxu0 %v4481
    %5106 = vmatpush.bf16.msra.mxu0 %v4477
    %5107 = vmatpush.bf16.msra.mxu0 %v4473
    %5108 = vmatpush.bf16.msra.mxu0 %v4469
    %5109 = vmatpush.bf16.msra.mxu0 %v4465
    %5110 = vmatpush.bf16.msra.mxu0 %v4461
    %5111 = vmatmul.bf16.gmra.mxu0 %v3293
    %v5112 = vpop.f32.mrf.mxu0
    %v5113 = vadd.f32 %v5100, %v5112
    %v5114 = vpop.f32.mrf.mxu0
    %5115 = vdwg.mxu0
    %5116 = vmatpush.bf16.msra.mxu0 %v4521
    %5117 = vmatpush.bf16.msra.mxu0 %v4517
    %5118 = vmatpush.bf16.msra.mxu0 %v4513
    %5119 = vmatpush.bf16.msra.mxu0 %v4509
    %5120 = vmatpush.bf16.msra.mxu0 %v4505
    %5121 = vmatpush.bf16.msra.mxu0 %v4501
    %5122 = vmatpush.bf16.msra.mxu0 %v4497
    %5123 = vmatpush.bf16.msra.mxu0 %v4493
    %5124 = vmatmul.bf16.gmra.mxu0 %v3294
    %v5125 = vpop.f32.mrf.mxu0
    %v5126 = vadd.f32 %v5113, %v5125
    %v5127 = vpop.f32.mrf.mxu0
    %5128 = vdwg.mxu0
    %5129 = vmatpush.bf16.msra.mxu0 %v4553
    %5130 = vmatpush.bf16.msra.mxu0 %v4549
    %5131 = vmatpush.bf16.msra.mxu0 %v4545
    %5132 = vmatpush.bf16.msra.mxu0 %v4541
    %5133 = vmatpush.bf16.msra.mxu0 %v4537
    %5134 = vmatpush.bf16.msra.mxu0 %v4533
    %5135 = vmatpush.bf16.msra.mxu0 %v4529
    %5136 = vmatpush.bf16.msra.mxu0 %v4525
    %5137 = vmatmul.bf16.gmra.mxu0 %v3295
    %v5138 = vpop.f32.mrf.mxu0
    %v5139 = vadd.f32 %v5126, %v5138
    %v5140 = vpop.f32.mrf.mxu0
    %5141 = vdwg.mxu0
    %5142 = vmatpush.bf16.msra.mxu0 %v4585
    %5143 = vmatpush.bf16.msra.mxu0 %v4581
    %5144 = vmatpush.bf16.msra.mxu0 %v4577
    %5145 = vmatpush.bf16.msra.mxu0 %v4573
    %5146 = vmatpush.bf16.msra.mxu0 %v4569
    %5147 = vmatpush.bf16.msra.mxu0 %v4565
    %5148 = vmatpush.bf16.msra.mxu0 %v4561
    %5149 = vmatpush.bf16.msra.mxu0 %v4557
    %5150 = vmatmul.bf16.gmra.mxu0 %v3296
    %v5151 = vpop.f32.mrf.mxu0
    %v5152 = vadd.f32 %v5139, %v5151
    %v5153 = vpop.f32.mrf.mxu0
    %5154 = vdwg.mxu0
    %5155 = vmatpush.bf16.msra.mxu0 %v4362
    %5156 = vmatpush.bf16.msra.mxu0 %v4358
    %5157 = vmatpush.bf16.msra.mxu0 %v4354
    %5158 = vmatpush.bf16.msra.mxu0 %v4350
    %5159 = vmatpush.bf16.msra.mxu0 %v4346
    %5160 = vmatpush.bf16.msra.mxu0 %v4342
    %5161 = vmatpush.bf16.msra.mxu0 %v4338
    %5162 = vmatpush.bf16.msra.mxu0 %v4334
    %5163 = vmatmul.bf16.gmra.mxu0 %v3289
    %v5164 = vpop.f32.mrf.mxu0
    %v5165 = vadd.f32 %v3558, %v5164
    %v5166 = vpop.f32.mrf.mxu0
    %5167 = vdwg.mxu0
    %5168 = vmatpush.bf16.msra.mxu0 %v4394
    %5169 = vmatpush.bf16.msra.mxu0 %v4390
    %5170 = vmatpush.bf16.msra.mxu0 %v4386
    %5171 = vmatpush.bf16.msra.mxu0 %v4382
    %5172 = vmatpush.bf16.msra.mxu0 %v4378
    %5173 = vmatpush.bf16.msra.mxu0 %v4374
    %5174 = vmatpush.bf16.msra.mxu0 %v4370
    %5175 = vmatpush.bf16.msra.mxu0 %v4366
    %5176 = vmatmul.bf16.gmra.mxu0 %v3290
    %v5177 = vpop.f32.mrf.mxu0
    %v5178 = vadd.f32 %v5165, %v5177
    %v5179 = vpop.f32.mrf.mxu0
    %5180 = vdwg.mxu0
    %5181 = vmatpush.bf16.msra.mxu0 %v4426
    %5182 = vmatpush.bf16.msra.mxu0 %v4422
    %5183 = vmatpush.bf16.msra.mxu0 %v4418
    %5184 = vmatpush.bf16.msra.mxu0 %v4414
    %5185 = vmatpush.bf16.msra.mxu0 %v4410
    %5186 = vmatpush.bf16.msra.mxu0 %v4406
    %5187 = vmatpush.bf16.msra.mxu0 %v4402
    %5188 = vmatpush.bf16.msra.mxu0 %v4398
    %5189 = vmatmul.bf16.gmra.mxu0 %v3291
    %v5190 = vpop.f32.mrf.mxu0
    %v5191 = vadd.f32 %v5178, %v5190
    %v5192 = vpop.f32.mrf.mxu0
    %5193 = vdwg.mxu0
    %5194 = vmatpush.bf16.msra.mxu0 %v4458
    %5195 = vmatpush.bf16.msra.mxu0 %v4454
    %5196 = vmatpush.bf16.msra.mxu0 %v4450
    %5197 = vmatpush.bf16.msra.mxu0 %v4446
    %5198 = vmatpush.bf16.msra.mxu0 %v4442
    %5199 = vmatpush.bf16.msra.mxu0 %v4438
    %5200 = vmatpush.bf16.msra.mxu0 %v4434
    %5201 = vmatpush.bf16.msra.mxu0 %v4430
    %5202 = vmatmul.bf16.gmra.mxu0 %v3292
    %v5203 = vpop.f32.mrf.mxu0
    %v5204 = vadd.f32 %v5191, %v5203
    %v5205 = vpop.f32.mrf.mxu0
    %5206 = vdwg.mxu0
    %5207 = vmatpush.bf16.msra.mxu0 %v4490
    %5208 = vmatpush.bf16.msra.mxu0 %v4486
    %5209 = vmatpush.bf16.msra.mxu0 %v4482
    %5210 = vmatpush.bf16.msra.mxu0 %v4478
    %5211 = vmatpush.bf16.msra.mxu0 %v4474
    %5212 = vmatpush.bf16.msra.mxu0 %v4470
    %5213 = vmatpush.bf16.msra.mxu0 %v4466
    %5214 = vmatpush.bf16.msra.mxu0 %v4462
    %5215 = vmatmul.bf16.gmra.mxu0 %v3293
    %v5216 = vpop.f32.mrf.mxu0
    %v5217 = vadd.f32 %v5204, %v5216
    %v5218 = vpop.f32.mrf.mxu0
    %5219 = vdwg.mxu0
    %5220 = vmatpush.bf16.msra.mxu0 %v4522
    %5221 = vmatpush.bf16.msra.mxu0 %v4518
    %5222 = vmatpush.bf16.msra.mxu0 %v4514
    %5223 = vmatpush.bf16.msra.mxu0 %v4510
    %5224 = vmatpush.bf16.msra.mxu0 %v4506
    %5225 = vmatpush.bf16.msra.mxu0 %v4502
    %5226 = vmatpush.bf16.msra.mxu0 %v4498
    %5227 = vmatpush.bf16.msra.mxu0 %v4494
    %5228 = vmatmul.bf16.gmra.mxu0 %v3294
    %v5229 = vpop.f32.mrf.mxu0
    %v5230 = vadd.f32 %v5217, %v5229
    %v5231 = vpop.f32.mrf.mxu0
    %5232 = vdwg.mxu0
    %5233 = vmatpush.bf16.msra.mxu0 %v4554
    %5234 = vmatpush.bf16.msra.mxu0 %v4550
    %5235 = vmatpush.bf16.msra.mxu0 %v4546
    %5236 = vmatpush.bf16.msra.mxu0 %v4542
    %5237 = vmatpush.bf16.msra.mxu0 %v4538
    %5238 = vmatpush.bf16.msra.mxu0 %v4534
    %5239 = vmatpush.bf16.msra.mxu0 %v4530
    %5240 = vmatpush.bf16.msra.mxu0 %v4526
    %5241 = vmatmul.bf16.gmra.mxu0 %v3295
    %v5242 = vpop.f32.mrf.mxu0
    %v5243 = vadd.f32 %v5230, %v5242
    %v5244 = vpop.f32.mrf.mxu0
    %5245 = vdwg.mxu0
    %5246 = vmatpush.bf16.msra.mxu0 %v4586
    %5247 = vmatpush.bf16.msra.mxu0 %v4582
    %5248 = vmatpush.bf16.msra.mxu0 %v4578
    %5249 = vmatpush.bf16.msra.mxu0 %v4574
    %5250 = vmatpush.bf16.msra.mxu0 %v4570
    %5251 = vmatpush.bf16.msra.mxu0 %v4566
    %5252 = vmatpush.bf16.msra.mxu0 %v4562
    %5253 = vmatpush.bf16.msra.mxu0 %v4558
    %5254 = vmatmul.bf16.gmra.mxu0 %v3296
    %v5255 = vpop.f32.mrf.mxu0
    %v5256 = vadd.f32 %v5243, %v5255
    %v5257 = vpop.f32.mrf.mxu0
    %5258 = vdwg.mxu0
    %v5259 = vmax.f32 %v4944, 0.0
    %v5260 = vmax.f32 %v5048, 0.0
    %v5261 = vmax.f32 %v5152, 0.0
    %v5262 = vmax.f32 %v5256, 0.0
    %v5263 = vpack.c.bf16 %v5259, %v5259
    %v5264 = vpack.c.bf16 %v5260, %v5260
    %v5265 = vpack.c.bf16 %v5261, %v5261
    %v5266 = vpack.c.bf16 %v5262, %v5262
    %v5267 = vld [vmem:[#allocation12] sm:$0xff]
    %v5268 = vld [vmem:[#allocation12 + $0x8] sm:$0xff]
    %v5269 = vld [vmem:[#allocation12 + $0x10] sm:$0xff]
    %v5270 = vld [vmem:[#allocation12 + $0x18] sm:$0xff]
    %v5271 = vld [vmem:[#allocation12 + $0x20] sm:$0xff]
    %v5272 = vld [vmem:[#allocation12 + $0x28] sm:$0xff]
    %v5273 = vld [vmem:[#allocation12 + $0x30] sm:$0xff]
    %v5274 = vld [vmem:[#allocation12 + $0x38] sm:$0xff]
    %v5275 = vld [vmem:[#allocation12 + $0x40] sm:$0xff]
    %v5276 = vld [vmem:[#allocation12 + $0x48] sm:$0xff]
    %v5277 = vld [vmem:[#allocation12 + $0x50] sm:$0xff]
    %v5278 = vld [vmem:[#allocation12 + $0x58] sm:$0xff]
    %v5279 = vld [vmem:[#allocation12 + $0x60] sm:$0xff]
    %v5280 = vld [vmem:[#allocation12 + $0x68] sm:$0xff]
    %v5281 = vld [vmem:[#allocation12 + $0x70] sm:$0xff]
    %v5282 = vld [vmem:[#allocation12 + $0x78] sm:$0xff]
    %v5283 = vld [vmem:[#allocation12 + $0x80] sm:$0xff]
    %v5284 = vld [vmem:[#allocation12 + $0x88] sm:$0xff]
    %v5285 = vld [vmem:[#allocation12 + $0x90] sm:$0xff]
    %v5286 = vld [vmem:[#allocation12 + $0x98] sm:$0xff]
    %v5287 = vld [vmem:[#allocation12 + $0xa0] sm:$0xff]
    %v5288 = vld [vmem:[#allocation12 + $0xa8] sm:$0xff]
    %v5289 = vld [vmem:[#allocation12 + $0xb0] sm:$0xff]
    %v5290 = vld [vmem:[#allocation12 + $0xb8] sm:$0xff]
    %v5291 = vld [vmem:[#allocation12 + $0xc0] sm:$0xff]
    %v5292 = vld [vmem:[#allocation12 + $0xc8] sm:$0xff]
    %v5293 = vld [vmem:[#allocation12 + $0xd0] sm:$0xff]
    %v5294 = vld [vmem:[#allocation12 + $0xd8] sm:$0xff]
    %v5295 = vld [vmem:[#allocation12 + $0xe0] sm:$0xff]
    %v5296 = vld [vmem:[#allocation12 + $0xe8] sm:$0xff]
    %v5297 = vld [vmem:[#allocation12 + $0xf0] sm:$0xff]
    %v5298 = vld [vmem:[#allocation12 + $0xf8] sm:$0xff]
    %v5299 = vld [vmem:[#allocation12 + $0x100] sm:$0xff]
    %v5300 = vld [vmem:[#allocation12 + $0x108] sm:$0xff]
    %v5301 = vld [vmem:[#allocation12 + $0x110] sm:$0xff]
    %v5302 = vld [vmem:[#allocation12 + $0x118] sm:$0xff]
    %v5303 = vld [vmem:[#allocation12 + $0x120] sm:$0xff]
    %v5304 = vld [vmem:[#allocation12 + $0x128] sm:$0xff]
    %v5305 = vld [vmem:[#allocation12 + $0x130] sm:$0xff]
    %v5306 = vld [vmem:[#allocation12 + $0x138] sm:$0xff]
    %v5307 = vld [vmem:[#allocation12 + $0x140] sm:$0xff]
    %v5308 = vld [vmem:[#allocation12 + $0x148] sm:$0xff]
    %v5309 = vld [vmem:[#allocation12 + $0x150] sm:$0xff]
    %v5310 = vld [vmem:[#allocation12 + $0x158] sm:$0xff]
    %v5311 = vld [vmem:[#allocation12 + $0x160] sm:$0xff]
    %v5312 = vld [vmem:[#allocation12 + $0x168] sm:$0xff]
    %v5313 = vld [vmem:[#allocation12 + $0x170] sm:$0xff]
    %v5314 = vld [vmem:[#allocation12 + $0x178] sm:$0xff]
    %v5315 = vld [vmem:[#allocation12 + $0x180] sm:$0xff]
    %v5316 = vld [vmem:[#allocation12 + $0x188] sm:$0xff]
    %v5317 = vld [vmem:[#allocation12 + $0x190] sm:$0xff]
    %v5318 = vld [vmem:[#allocation12 + $0x198] sm:$0xff]
    %v5319 = vld [vmem:[#allocation12 + $0x1a0] sm:$0xff]
    %v5320 = vld [vmem:[#allocation12 + $0x1a8] sm:$0xff]
    %v5321 = vld [vmem:[#allocation12 + $0x1b0] sm:$0xff]
    %v5322 = vld [vmem:[#allocation12 + $0x1b8] sm:$0xff]
    %v5323 = vld [vmem:[#allocation12 + $0x1c0] sm:$0xff]
    %v5324 = vld [vmem:[#allocation12 + $0x1c8] sm:$0xff]
    %v5325 = vld [vmem:[#allocation12 + $0x1d0] sm:$0xff]
    %v5326 = vld [vmem:[#allocation12 + $0x1d8] sm:$0xff]
    %v5327 = vld [vmem:[#allocation12 + $0x1e0] sm:$0xff]
    %v5328 = vld [vmem:[#allocation12 + $0x1e8] sm:$0xff]
    %v5329 = vld [vmem:[#allocation12 + $0x1f0] sm:$0xff]
    %v5330 = vld [vmem:[#allocation12 + $0x1f8] sm:$0xff]
    %v5331 = vld [vmem:[#allocation14] sm:$0x3]
    %v5333 = vperm.slane %v5331, 0
    %v5334 = vperm.slane %v5331, 1
    %v5401 = vunpack.c.l.b16 %v5267
    %v5402 = vunpack.c.h.b16 %v5267
    %v5403 = vunpack.c.l.b16 %v5268
    %v5404 = vunpack.c.h.b16 %v5268
    %v5405 = vunpack.c.l.b16 %v5269
    %v5406 = vunpack.c.h.b16 %v5269
    %v5407 = vunpack.c.l.b16 %v5270
    %v5408 = vunpack.c.h.b16 %v5270
    %v5409 = vunpack.c.l.b16 %v5271
    %v5410 = vunpack.c.h.b16 %v5271
    %v5411 = vunpack.c.l.b16 %v5272
    %v5412 = vunpack.c.h.b16 %v5272
    %v5413 = vunpack.c.l.b16 %v5273
    %v5414 = vunpack.c.h.b16 %v5273
    %v5415 = vunpack.c.l.b16 %v5274
    %v5416 = vunpack.c.h.b16 %v5274
    %v5417 = vunpack.c.l.b16 %v5275
    %v5418 = vunpack.c.h.b16 %v5275
    %v5419 = vunpack.c.l.b16 %v5276
    %v5420 = vunpack.c.h.b16 %v5276
    %v5421 = vunpack.c.l.b16 %v5277
    %v5422 = vunpack.c.h.b16 %v5277
    %v5423 = vunpack.c.l.b16 %v5278
    %v5424 = vunpack.c.h.b16 %v5278
    %v5425 = vunpack.c.l.b16 %v5279
    %v5426 = vunpack.c.h.b16 %v5279
    %v5427 = vunpack.c.l.b16 %v5280
    %v5428 = vunpack.c.h.b16 %v5280
    %v5429 = vunpack.c.l.b16 %v5281
    %v5430 = vunpack.c.h.b16 %v5281
    %v5431 = vunpack.c.l.b16 %v5282
    %v5432 = vunpack.c.h.b16 %v5282
    %v5433 = vunpack.c.l.b16 %v5283
    %v5434 = vunpack.c.h.b16 %v5283
    %v5435 = vunpack.c.l.b16 %v5284
    %v5436 = vunpack.c.h.b16 %v5284
    %v5437 = vunpack.c.l.b16 %v5285
    %v5438 = vunpack.c.h.b16 %v5285
    %v5439 = vunpack.c.l.b16 %v5286
    %v5440 = vunpack.c.h.b16 %v5286
    %v5441 = vunpack.c.l.b16 %v5287
    %v5442 = vunpack.c.h.b16 %v5287
    %v5443 = vunpack.c.l.b16 %v5288
    %v5444 = vunpack.c.h.b16 %v5288
    %v5445 = vunpack.c.l.b16 %v5289
    %v5446 = vunpack.c.h.b16 %v5289
    %v5447 = vunpack.c.l.b16 %v5290
    %v5448 = vunpack.c.h.b16 %v5290
    %v5449 = vunpack.c.l.b16 %v5291
    %v5450 = vunpack.c.h.b16 %v5291
    %v5451 = vunpack.c.l.b16 %v5292
    %v5452 = vunpack.c.h.b16 %v5292
    %v5453 = vunpack.c.l.b16 %v5293
    %v5454 = vunpack.c.h.b16 %v5293
    %v5455 = vunpack.c.l.b16 %v5294
    %v5456 = vunpack.c.h.b16 %v5294
    %v5457 = vunpack.c.l.b16 %v5295
    %v5458 = vunpack.c.h.b16 %v5295
    %v5459 = vunpack.c.l.b16 %v5296
    %v5460 = vunpack.c.h.b16 %v5296
    %v5461 = vunpack.c.l.b16 %v5297
    %v5462 = vunpack.c.h.b16 %v5297
    %v5463 = vunpack.c.l.b16 %v5298
    %v5464 = vunpack.c.h.b16 %v5298
    %v5465 = vunpack.c.l.b16 %v5299
    %v5466 = vunpack.c.h.b16 %v5299
    %v5467 = vunpack.c.l.b16 %v5300
    %v5468 = vunpack.c.h.b16 %v5300
    %v5469 = vunpack.c.l.b16 %v5301
    %v5470 = vunpack.c.h.b16 %v5301
    %v5471 = vunpack.c.l.b16 %v5302
    %v5472 = vunpack.c.h.b16 %v5302
    %v5473 = vunpack.c.l.b16 %v5303
    %v5474 = vunpack.c.h.b16 %v5303
    %v5475 = vunpack.c.l.b16 %v5304
    %v5476 = vunpack.c.h.b16 %v5304
    %v5477 = vunpack.c.l.b16 %v5305
    %v5478 = vunpack.c.h.b16 %v5305
    %v5479 = vunpack.c.l.b16 %v5306
    %v5480 = vunpack.c.h.b16 %v5306
    %v5481 = vunpack.c.l.b16 %v5307
    %v5482 = vunpack.c.h.b16 %v5307
    %v5483 = vunpack.c.l.b16 %v5308
    %v5484 = vunpack.c.h.b16 %v5308
    %v5485 = vunpack.c.l.b16 %v5309
    %v5486 = vunpack.c.h.b16 %v5309
    %v5487 = vunpack.c.l.b16 %v5310
    %v5488 = vunpack.c.h.b16 %v5310
    %v5489 = vunpack.c.l.b16 %v5311
    %v5490 = vunpack.c.h.b16 %v5311
    %v5491 = vunpack.c.l.b16 %v5312
    %v5492 = vunpack.c.h.b16 %v5312
    %v5493 = vunpack.c.l.b16 %v5313
    %v5494 = vunpack.c.h.b16 %v5313
    %v5495 = vunpack.c.l.b16 %v5314
    %v5496 = vunpack.c.h.b16 %v5314
    %v5497 = vunpack.c.l.b16 %v5315
    %v5498 = vunpack.c.h.b16 %v5315
    %v5499 = vunpack.c.l.b16 %v5316
    %v5500 = vunpack.c.h.b16 %v5316
    %v5501 = vunpack.c.l.b16 %v5317
    %v5502 = vunpack.c.h.b16 %v5317
    %v5503 = vunpack.c.l.b16 %v5318
    %v5504 = vunpack.c.h.b16 %v5318
    %v5505 = vunpack.c.l.b16 %v5319
    %v5506 = vunpack.c.h.b16 %v5319
    %v5507 = vunpack.c.l.b16 %v5320
    %v5508 = vunpack.c.h.b16 %v5320
    %v5509 = vunpack.c.l.b16 %v5321
    %v5510 = vunpack.c.h.b16 %v5321
    %v5511 = vunpack.c.l.b16 %v5322
    %v5512 = vunpack.c.h.b16 %v5322
    %v5513 = vunpack.c.l.b16 %v5323
    %v5514 = vunpack.c.h.b16 %v5323
    %v5515 = vunpack.c.l.b16 %v5324
    %v5516 = vunpack.c.h.b16 %v5324
    %v5517 = vunpack.c.l.b16 %v5325
    %v5518 = vunpack.c.h.b16 %v5325
    %v5519 = vunpack.c.l.b16 %v5326
    %v5520 = vunpack.c.h.b16 %v5326
    %v5521 = vunpack.c.l.b16 %v5327
    %v5522 = vunpack.c.h.b16 %v5327
    %v5523 = vunpack.c.l.b16 %v5328
    %v5524 = vunpack.c.h.b16 %v5328
    %v5525 = vunpack.c.l.b16 %v5329
    %v5526 = vunpack.c.h.b16 %v5329
    %v5527 = vunpack.c.l.b16 %v5330
    %v5528 = vunpack.c.h.b16 %v5330
    %v5529 = vpack.c.b16 %v5403, %v5401
    %v5530 = vpack.c.b16 %v5404, %v5402
    %v5531 = vpack.c.b16 %v5407, %v5405
    %v5532 = vpack.c.b16 %v5408, %v5406
    %v5533 = vpack.c.b16 %v5411, %v5409
    %v5534 = vpack.c.b16 %v5412, %v5410
    %v5535 = vpack.c.b16 %v5415, %v5413
    %v5536 = vpack.c.b16 %v5416, %v5414
    %v5537 = vpack.c.b16 %v5419, %v5417
    %v5538 = vpack.c.b16 %v5420, %v5418
    %v5539 = vpack.c.b16 %v5423, %v5421
    %v5540 = vpack.c.b16 %v5424, %v5422
    %v5541 = vpack.c.b16 %v5427, %v5425
    %v5542 = vpack.c.b16 %v5428, %v5426
    %v5543 = vpack.c.b16 %v5431, %v5429
    %v5544 = vpack.c.b16 %v5432, %v5430
    %v5545 = vpack.c.b16 %v5435, %v5433
    %v5546 = vpack.c.b16 %v5436, %v5434
    %v5547 = vpack.c.b16 %v5439, %v5437
    %v5548 = vpack.c.b16 %v5440, %v5438
    %v5549 = vpack.c.b16 %v5443, %v5441
    %v5550 = vpack.c.b16 %v5444, %v5442
    %v5551 = vpack.c.b16 %v5447, %v5445
    %v5552 = vpack.c.b16 %v5448, %v5446
    %v5553 = vpack.c.b16 %v5451, %v5449
    %v5554 = vpack.c.b16 %v5452, %v5450
    %v5555 = vpack.c.b16 %v5455, %v5453
    %v5556 = vpack.c.b16 %v5456, %v5454
    %v5557 = vpack.c.b16 %v5459, %v5457
    %v5558 = vpack.c.b16 %v5460, %v5458
    %v5559 = vpack.c.b16 %v5463, %v5461
    %v5560 = vpack.c.b16 %v5464, %v5462
    %v5561 = vpack.c.b16 %v5467, %v5465
    %v5562 = vpack.c.b16 %v5468, %v5466
    %v5563 = vpack.c.b16 %v5471, %v5469
    %v5564 = vpack.c.b16 %v5472, %v5470
    %v5565 = vpack.c.b16 %v5475, %v5473
    %v5566 = vpack.c.b16 %v5476, %v5474
    %v5567 = vpack.c.b16 %v5479, %v5477
    %v5568 = vpack.c.b16 %v5480, %v5478
    %v5569 = vpack.c.b16 %v5483, %v5481
    %v5570 = vpack.c.b16 %v5484, %v5482
    %v5571 = vpack.c.b16 %v5487, %v5485
    %v5572 = vpack.c.b16 %v5488, %v5486
    %v5573 = vpack.c.b16 %v5491, %v5489
    %v5574 = vpack.c.b16 %v5492, %v5490
    %v5575 = vpack.c.b16 %v5495, %v5493
    %v5576 = vpack.c.b16 %v5496, %v5494
    %v5577 = vpack.c.b16 %v5499, %v5497
    %v5578 = vpack.c.b16 %v5500, %v5498
    %v5579 = vpack.c.b16 %v5503, %v5501
    %v5580 = vpack.c.b16 %v5504, %v5502
    %v5581 = vpack.c.b16 %v5507, %v5505
    %v5582 = vpack.c.b16 %v5508, %v5506
    %v5583 = vpack.c.b16 %v5511, %v5509
    %v5584 = vpack.c.b16 %v5512, %v5510
    %v5585 = vpack.c.b16 %v5515, %v5513
    %v5586 = vpack.c.b16 %v5516, %v5514
    %v5587 = vpack.c.b16 %v5519, %v5517
    %v5588 = vpack.c.b16 %v5520, %v5518
    %v5589 = vpack.c.b16 %v5523, %v5521
    %v5590 = vpack.c.b16 %v5524, %v5522
    %v5591 = vpack.c.b16 %v5527, %v5525
    %v5592 = vpack.c.b16 %v5528, %v5526
    %5657 = vmatpush.bf16.msra.mxu0 %v5543
    %5658 = vmatpush.bf16.msra.mxu0 %v5541
    %5659 = vmatpush.bf16.msra.mxu0 %v5539
    %5660 = vmatpush.bf16.msra.mxu0 %v5537
    %5661 = vmatpush.bf16.msra.mxu0 %v5535
    %5662 = vmatpush.bf16.msra.mxu0 %v5533
    %5663 = vmatpush.bf16.msra.mxu0 %v5531
    %5664 = vmatpush.bf16.msra.mxu0 %v5529
    %5665 = vmatmul.bf16.gmra.mxu0 %v5263
    %v5666 = vpop.f32.mrf.mxu0
    %v5667 = vadd.f32 %v5333, %v5666
    %v5668 = vpop.f32.mrf.mxu0
    %5669 = vdwg.mxu0
    %5670 = vmatpush.bf16.msra.mxu0 %v5559
    %5671 = vmatpush.bf16.msra.mxu0 %v5557
    %5672 = vmatpush.bf16.msra.mxu0 %v5555
    %5673 = vmatpush.bf16.msra.mxu0 %v5553
    %5674 = vmatpush.bf16.msra.mxu0 %v5551
    %5675 = vmatpush.bf16.msra.mxu0 %v5549
    %5676 = vmatpush.bf16.msra.mxu0 %v5547
    %5677 = vmatpush.bf16.msra.mxu0 %v5545
    %5678 = vmatmul.bf16.gmra.mxu0 %v5264
    %v5679 = vpop.f32.mrf.mxu0
    %v5680 = vadd.f32 %v5667, %v5679
    %v5681 = vpop.f32.mrf.mxu0
    %5682 = vdwg.mxu0
    %5683 = vmatpush.bf16.msra.mxu0 %v5575
    %5684 = vmatpush.bf16.msra.mxu0 %v5573
    %5685 = vmatpush.bf16.msra.mxu0 %v5571
    %5686 = vmatpush.bf16.msra.mxu0 %v5569
    %5687 = vmatpush.bf16.msra.mxu0 %v5567
    %5688 = vmatpush.bf16.msra.mxu0 %v5565
    %5689 = vmatpush.bf16.msra.mxu0 %v5563
    %5690 = vmatpush.bf16.msra.mxu0 %v5561
    %5691 = vmatmul.bf16.gmra.mxu0 %v5265
    %v5692 = vpop.f32.mrf.mxu0
    %v5693 = vadd.f32 %v5680, %v5692
    %v5694 = vpop.f32.mrf.mxu0
    %5695 = vdwg.mxu0
    %5696 = vmatpush.bf16.msra.mxu0 %v5591
    %5697 = vmatpush.bf16.msra.mxu0 %v5589
    %5698 = vmatpush.bf16.msra.mxu0 %v5587
    %5699 = vmatpush.bf16.msra.mxu0 %v5585
    %5700 = vmatpush.bf16.msra.mxu0 %v5583
    %5701 = vmatpush.bf16.msra.mxu0 %v5581
    %5702 = vmatpush.bf16.msra.mxu0 %v5579
    %5703 = vmatpush.bf16.msra.mxu0 %v5577
    %5704 = vmatmul.bf16.gmra.mxu0 %v5266
    %v5705 = vpop.f32.mrf.mxu0
    %v5706 = vadd.f32 %v5693, %v5705
    %v5707 = vpop.f32.mrf.mxu0
    %5708 = vdwg.mxu0
    %5709 = vmatpush.bf16.msra.mxu0 %v5544
    %5710 = vmatpush.bf16.msra.mxu0 %v5542
    %5711 = vmatpush.bf16.msra.mxu0 %v5540
    %5712 = vmatpush.bf16.msra.mxu0 %v5538
    %5713 = vmatpush.bf16.msra.mxu0 %v5536
    %5714 = vmatpush.bf16.msra.mxu0 %v5534
    %5715 = vmatpush.bf16.msra.mxu0 %v5532
    %5716 = vmatpush.bf16.msra.mxu0 %v5530
    %5717 = vmatmul.bf16.gmra.mxu0 %v5263
    %v5718 = vpop.f32.mrf.mxu0
    %v5719 = vadd.f32 %v5334, %v5718
    %v5720 = vpop.f32.mrf.mxu0
    %5721 = vdwg.mxu0
    %5722 = vmatpush.bf16.msra.mxu0 %v5560
    %5723 = vmatpush.bf16.msra.mxu0 %v5558
    %5724 = vmatpush.bf16.msra.mxu0 %v5556
    %5725 = vmatpush.bf16.msra.mxu0 %v5554
    %5726 = vmatpush.bf16.msra.mxu0 %v5552
    %5727 = vmatpush.bf16.msra.mxu0 %v5550
    %5728 = vmatpush.bf16.msra.mxu0 %v5548
    %5729 = vmatpush.bf16.msra.mxu0 %v5546
    %5730 = vmatmul.bf16.gmra.mxu0 %v5264
    %v5731 = vpop.f32.mrf.mxu0
    %v5732 = vadd.f32 %v5719, %v5731
    %v5733 = vpop.f32.mrf.mxu0
    %5734 = vdwg.mxu0
    %5735 = vmatpush.bf16.msra.mxu0 %v5576
    %5736 = vmatpush.bf16.msra.mxu0 %v5574
    %5737 = vmatpush.bf16.msra.mxu0 %v5572
    %5738 = vmatpush.bf16.msra.mxu0 %v5570
    %5739 = vmatpush.bf16.msra.mxu0 %v5568
    %5740 = vmatpush.bf16.msra.mxu0 %v5566
    %5741 = vmatpush.bf16.msra.mxu0 %v5564
    %5742 = vmatpush.bf16.msra.mxu0 %v5562
    %5743 = vmatmul.bf16.gmra.mxu0 %v5265
    %v5744 = vpop.f32.mrf.mxu0
    %v5745 = vadd.f32 %v5732, %v5744
    %v5746 = vpop.f32.mrf.mxu0
    %5747 = vdwg.mxu0
    %5748 = vmatpush.bf16.msra.mxu0 %v5592
    %5749 = vmatpush.bf16.msra.mxu0 %v5590
    %5750 = vmatpush.bf16.msra.mxu0 %v5588
    %5751 = vmatpush.bf16.msra.mxu0 %v5586
    %5752 = vmatpush.bf16.msra.mxu0 %v5584
    %5753 = vmatpush.bf16.msra.mxu0 %v5582
    %5754 = vmatpush.bf16.msra.mxu0 %v5580
    %5755 = vmatpush.bf16.msra.mxu0 %v5578
    %5756 = vmatmul.bf16.gmra.mxu0 %v5266
    %v5757 = vpop.f32.mrf.mxu0
    %v5758 = vadd.f32 %v5745, %v5757
    %v5759 = vpop.f32.mrf.mxu0
    %5760 = vdwg.mxu0
    %v5761 = vmax.f32 %v5706, 0.0
    %v5762 = vmax.f32 %v5758, 0.0
    %v5763 = vld [vmem:[#allocation15] sm:$0x3]
    %v5764 = vld [vmem:[#allocation2] sm:$0x1]
    %5766 = vset.pattern.permute.xlu0 0
    %5767 = vperm.xlu0 %5766, %v5764
    %v5768 = vpop.permute.xlu0 %5767
    %v5770 = vperm.slane %v5768, 0
    %v5772 = vperm.slane %v5763, 0
    %v5773 = vperm.slane %v5763, 1
    %5776 = vmatpush.xpose.msra.mxu0 0.0
    %5777 = vmatpush.xpose.msra.mxu0 0.0
    %5778 = vmatpush.xpose.msra.mxu0 0.0
    %5779 = vmatpush.xpose.msra.mxu0 0.0
    %5780 = vmatpush.xpose.msra.mxu0 0.0
    %5781 = vmatpush.xpose.msra.mxu0 0.0
    %5782 = vmatpush.xpose.msra.mxu0 0.0
    %5783 = vmatpush.xpose.msra.mxu0 0.0
    %5784 = vmatpush.xpose.msra.mxu0 0.0
    %5785 = vmatpush.xpose.msra.mxu0 0.0
    %5786 = vmatpush.xpose.msra.mxu0 0.0
    %5787 = vmatpush.xpose.msra.mxu0 0.0
    %5788 = vmatpush.xpose.msra.mxu0 0.0
    %5789 = vmatpush.xpose.msra.mxu0 0.0
    %5790 = vmatpush.xpose.msra.mxu0 0.0
    %5791 = vmatpush.xpose.msra.mxu0 %v5761
    %5792 = vmatmul.f32.gmra.mxu0 %v5772
    %v5793 = vpop.f32.mrf.mxu0
    %v5794 = vadd.f32 %v5770, %v5793
    %5795 = vdwg.mxu0
    %5796 = vmatpush.xpose.msra.mxu0 0.0
    %5797 = vmatpush.xpose.msra.mxu0 0.0
    %5798 = vmatpush.xpose.msra.mxu0 0.0
    %5799 = vmatpush.xpose.msra.mxu0 0.0
    %5800 = vmatpush.xpose.msra.mxu0 0.0
    %5801 = vmatpush.xpose.msra.mxu0 0.0
    %5802 = vmatpush.xpose.msra.mxu0 0.0
    %5803 = vmatpush.xpose.msra.mxu0 0.0
    %5804 = vmatpush.xpose.msra.mxu0 0.0
    %5805 = vmatpush.xpose.msra.mxu0 0.0
    %5806 = vmatpush.xpose.msra.mxu0 0.0
    %5807 = vmatpush.xpose.msra.mxu0 0.0
    %5808 = vmatpush.xpose.msra.mxu0 0.0
    %5809 = vmatpush.xpose.msra.mxu0 0.0
    %5810 = vmatpush.xpose.msra.mxu0 0.0
    %5811 = vmatpush.xpose.msra.mxu0 %v5762
    %5812 = vmatmul.f32.gmra.mxu0 %v5773
    %v5813 = vpop.f32.mrf.mxu0
    %v5814 = vadd.f32 %v5794, %v5813
    %5815 = vdwg.mxu0
    %v5816 = vsub.f32 0.0, %v5814
    %v5817 = vmul.f32 %v5816, 1.442695
    %v5818 = vpow.pop %v5817
    %v5819 = vadd.f32 %v5818, 1.0
    %v5820 = vrcp.pop %v5819
    %vm5821 = vcmask 8192
    %5822 = vst.msk [vmem:[#allocation17] sm:$0x1] %vm5821, %v5820
    // Predicated region
    $region70: #{tpu_custom_call.1} parent=1 // pred_check
      _
    $region71: #{tpu_custom_call.1} parent=1 // pred_check_branch
      %5824 = sbr.rel (0) target = $region73
    $region72: #{tpu_custom_call.1} parent=1 // pred_region
      %5826 = vsyncadd [#allocation5], 0
      %s5828 = sshll.u32 [#allocation17], 4
      %s5829 = int_to_ptr.vmem [resolvable:$true] %s5828
      %s5830 = sshll.u32 %s9, 4
      %s5831 = int_to_ptr.hbm [resolvable:$true] %s5830
      %5833 = dma.vmem_to_hbm [thread:$0]  %s5829, 16, %s5831, [#allocation5]
    $region73: #{tpu_custom_call.1} parent=1 // pred_fallthru
      _
    // Predicated region
    $region74: #{tpu_custom_call.1} parent=1 // pred_check
      _
    $region75: #{tpu_custom_call.1} parent=1 // pred_check_branch
      %5835 = sbr.rel (0) target = $region77
    $region76: #{tpu_custom_call.1} parent=1 // pred_region
      %5837 = dma.done [#allocation5], 16
    $region77: #{tpu_custom_call.1} parent=1 // pred_fallthru
      _
    %5838 = vsyncpa [#allocation4], 1
    %5839 = vsyncpa [#allocation7], 1
    %5840 = vsyncpa [#allocation10], 1
    %5841 = vsyncpa [#allocation13], 1
    %5842 = vsyncpa [#allocation16], 1
    %5843 = vsyncpa [#allocation5], 1

</llo_original>
